<compile_context>
chip_gen: v6e
topology: v6e:2x2x1
jax: 0.10.0
libtpu: 0.0.40
codegen_flags: <defaults>
</compile_context>

<pallas_src>
import functools
import math

import jax
import jax.numpy as jnp
from jax.experimental import pallas as pl
from jax.experimental.pallas import tpu as pltpu


_STATIC_K_UNROLL_MAX = 72     # fully unroll the K = 9*C loop up to C == 8


# ----------------------------- TPU generation config -------------------------

def _tpu_config():
    """Best-effort (vmem_capacity_bytes, use_bf16_mxu) for the local TPU."""
    kind = ""
    try:
        kind = jax.devices()[0].device_kind.lower()
    except Exception:
        pass
    vmem = None
    try:
        vmem = int(pltpu.get_tpu_info().vmem_capacity_bytes)
    except Exception:
        vmem = None
    if vmem is None:
        vmem = (64 << 20) if ("v7" in kind or "7x" in kind) else (128 << 20)
    # bf16 is the MXU fast path on v6e/v7x; keep f32 end-to-end on v5e/older.
    use_bf16_mxu = any(tag in kind for tag in ("v6", "v7", "7x"))
    return vmem, use_bf16_mxu


def _round_up(x, m):
    return ((x + m - 1) // m) * m


def _pick_hw_tile(hw, cap, fits):
    """Largest lane tile (multiple of 128, <= cap) that fits the VMEM budget,
    preferring the tile that minimizes lane padding of HW."""
    cands = [t for t in range(128, max(cap, 128) + 1, 128) if fits(t)]
    if not cands:
        cands = [128]
    best = min(cands, key=lambda t: (_round_up(hw, t), -t))
    return best, _round_up(hw, best)


# ----------------------------- Fused Pallas kernel ----------------------------

def _fused_kernel(pos_ref, cols_ref, w1t_ref, b1_ref, w2t_ref, b2_ref,
                  out_ref, lw_ref, *, C, C_pad, K, N):
    # One (scale-slot s, HW-tile b) grid point:
    #   lw = Pos2Weight(pos[s, :, tile])                 -> VMEM scratch (K*C_pad, T)
    #   out[n, s, c, tile] = sum_k cols[n, k, tile] * lw[k*C_pad + c, tile]
    T = out_ref.shape[-1]

    # ---- Pos2Weight MLP: Linear(3,256) -> LeakyReLU(0.2) -> Linear(256, KC) --
    p = pos_ref[0]                                        # (3, T)
    w1t = w1t_ref[...]                                    # (256, 3)
    # Depth-3 contraction as 3 broadcast FMAs on the VPU (depth 3 would waste
    # the MXU); the MXU is reserved for the (K*C_pad, 256) @ (256, T) layer.
    h = (w1t[:, 0:1] * p[0:1, :]
         + w1t[:, 1:2] * p[1:2, :]
         + w1t[:, 2:3] * p[2:3, :]
         + b1_ref[...])                                   # (256, T) f32
    h = jnp.maximum(h, 0.2 * h)                           # LeakyReLU(0.2)
    lw = jnp.dot(w2t_ref[...], h.astype(w2t_ref.dtype),   # bf16 MXU on v6e/v7x
                 preferred_element_type=jnp.float32)      # (K*C_pad, T) f32
    lw_ref[...] = lw + b2_ref[...]

    # ---- per-position contraction (VPU FMAs, f32 accumulation) ---------------
    for n in range(N):                                    # N is tiny and static
        if K <= _STATIC_K_UNROLL_MAX:
            acc = jnp.zeros((C_pad, T), jnp.float32)
            for k in range(K):                            # static, 8-aligned slices
                col_k = cols_ref[n, k:k + 1, :].astype(jnp.float32)    # (1, T)
                w_k = lw_ref[k * C_pad:(k + 1) * C_pad, :]             # (C_pad, T)
                acc = acc + col_k * w_k
        else:
            def body(k, acc, n=n):
                col_k = cols_ref[n, pl.ds(k, 1), :].astype(jnp.float32)
                row0 = pl.multiple_of(k * C_pad, C_pad)
                w_k = lw_ref[pl.ds(row0, C_pad), :]
                return acc + col_k * w_k
            acc = jax.lax.fori_loop(0, K, body,
                                    jnp.zeros((C_pad, T), jnp.float32),
                                    unroll=8)
        out_ref[n, 0] = acc[:C, :].astype(out_ref.dtype)


def fused_meta_sr_pallas(pos_t, cols, w1t, b1c, w2t, b2c, *,
                         C, C_pad, K, N, hw_tile, vmem_limit_bytes):
    S2, _, HW_pad = pos_t.shape
    KCp = K * C_pad
    nb = HW_pad // hw_tile
    kernel = functools.partial(_fused_kernel, C=C, C_pad=C_pad, K=K, N=N)
    # TODO(synk): for very large C (2*KCp*256*itemsize approaching the VMEM
    # budget) the constant w2t input should be single-buffered
    # (pipeline_mode=pl.Buffered(1)) or tiled over KC with an extra grid axis.
    return pl.pallas_call(
        kernel,
        out_shape=jax.ShapeDtypeStruct((N, S2, C, HW_pad), jnp.float32),
        grid=(S2, nb),
        in_specs=[
            pl.BlockSpec((1, 3, hw_tile), lambda s, b: (s, 0, b)),     # pos
            pl.BlockSpec((N, K, hw_tile), lambda s, b: (0, 0, b)),     # cols
            pl.BlockSpec((256, 3), lambda s, b: (0, 0)),               # w1^T
            pl.BlockSpec((256, 1), lambda s, b: (0, 0)),               # b1
            pl.BlockSpec((KCp, 256), lambda s, b: (0, 0)),             # w2^T (padded)
            pl.BlockSpec((KCp, 1), lambda s, b: (0, 0)),               # b2 (padded)
        ],
        out_specs=pl.BlockSpec((N, 1, C, hw_tile), lambda s, b: (0, s, 0, b)),
        scratch_shapes=[pltpu.VMEM((KCp, hw_tile), jnp.float32)],
        compiler_params=pltpu.CompilerParams(
            # S2 outermost-parallel: on v7x the 2 TensorCores each compute
            # their own scale-slots' lw blocks exactly once (no duplicated MLP).
            dimension_semantics=("parallel", "parallel"),
            vmem_limit_bytes=vmem_limit_bytes),
    )(pos_t, cols, w1t, b1c, w2t, b2c)


# --------------------------------- Glue ---------------------------------------

def unfold3x3(x):
    # F.unfold(x, kernel_size=3, padding=1): (N,C,H,W) -> (N, C*9, H*W),
    # channel ordering (c, kh, kw) exactly like PyTorch.
    N, C, H, W = x.shape
    xp = jnp.pad(x, ((0, 0), (0, 0), (1, 1), (1, 1)))
    patches = [xp[:, :, kh:kh + H, kw:kw + W]
               for kh in range(3) for kw in range(3)]
    p = jnp.stack(patches, axis=2)                 # (N, C, 9, H, W)
    return p.reshape(N, C * 9, H * W)


def meta_learner_forward(params, x, r, pos_mat, mask, HRsize,
                         cols_dtype=jnp.float32):
    # cols_dtype=jnp.bfloat16 halves HBM traffic of the cols stream on v6e/v7x
    # (the kernel always accumulates in f32); default keeps f32 parity.
    scale_int = math.ceil(r)
    N, C, H, W = x.shape
    K = 9 * C
    C_pad = _round_up(C, 8)              # sublane-aligned per-k weight chunks
    S2 = scale_int * scale_int
    HW = H * W
    KCp = K * C_pad

    vmem_bytes, use_bf16_mxu = _tpu_config()
    small_vmem = vmem_bytes <= (64 << 20)            # v7x: 64 MiB VMEM per TC
    cap = 256 if small_vmem else 512
    vmem_limit = (40 << 20) if small_vmem else (48 << 20)
    mxu_dtype = jnp.bfloat16 if use_bf16_mxu else jnp.float32
    mxu_bytes = jnp.dtype(mxu_dtype).itemsize
    cols_bytes = jnp.dtype(cols_dtype).itemsize

    def fits(t):   # double-buffered blocks + weights + lw scratch vs. budget
        blocks = 2 * (3 * t * 4 + N * K * t * cols_bytes + N * C * t * 4)
        weights = 2 * ((256 * 3 + 256) * 4 + KCp * 256 * mxu_bytes + KCp * 4)
        scratch = KCp * t * 4
        return blocks + weights + scratch <= int(0.9 * vmem_limit)

    hw_tile, HW_pad = _pick_hw_tile(HW, cap, fits)

    # Re-order the *tiny* pos tensor from HR row-major ((h,sh),(w,sw)) to
    # (sh, sw, h, w): the MLP then emits local_weight directly in the
    # (S2, KC, HW) layout the contraction consumes.  This is exactly
    # equivalent to PyTorch's reshape(H,r,W,r,-1,C).permute(...) applied to
    # the MLP output, because the MLP acts independently per row.
    pos = pos_mat.reshape(H, scale_int, W, scale_int, 3).astype(jnp.float32)
    pos = pos.transpose(1, 3, 0, 2, 4).reshape(S2, HW, 3)
    pos_t = pos.transpose(0, 2, 1)                       # (S2, 3, HW)
    pos_t = jnp.pad(pos_t, ((0, 0), (0, 0), (0, HW_pad - HW)))

    # Weights: transposed orientation + pad output features (K, C) -> (K, C_pad)
    # with zero rows, so every per-k slice in the kernel is 8-sublane aligned.
    w1t = params["w1"].T                                 # (256, 3)
    b1c = params["b1"].reshape(-1, 1)                    # (256, 1)
    w2t = params["w2"].T.reshape(K, C, 256)
    w2t = jnp.pad(w2t, ((0, 0), (0, C_pad - C), (0, 0)))
    w2t = w2t.reshape(KCp, 256).astype(mxu_dtype)
    b2c = jnp.pad(params["b2"].reshape(K, C), ((0, 0), (0, C_pad - C)))
    b2c = b2c.reshape(KCp, 1)

    # im2col: repeat_x makes scale^2 identical copies of x, so unfold once.
    cols = unfold3x3(x).astype(cols_dtype)               # (N, K, HW)
    cols = jnp.pad(cols, ((0, 0), (0, 0), (0, HW_pad - HW)))

    # ---- fused Pos2Weight MLP + per-position contraction (one Pallas call) ---
    out = fused_meta_sr_pallas(pos_t, cols, w1t, b1c, w2t, b2c,
                               C=C, C_pad=C_pad, K=K, N=N, hw_tile=hw_tile,
                               vmem_limit_bytes=vmem_limit)
    out = out[..., :HW]                                  # drop lane padding

    # ---- reassemble exactly like the PyTorch permutes/reshapes ---------------
    out = out.reshape(N, scale_int, scale_int, C, H, W)
    out = out.transpose(0, 3, 4, 1, 5, 2)                # (N, C, H, sh, W, sw)
    out = out.reshape(N, C, scale_int * H, scale_int * W)

    # ---- masked_select: the Meta-SR mask is separable (keeps HRsize[0] rows
    # and HRsize[1] cols), so two static-size takes replace the generic
    # nonzero-scan + flat dynamic gather.
    # TODO(synk): a non-separable mask needs the generic dynamic-shape
    # masked_select emulation (jnp.nonzero over the full broadcast mask).
    m2 = mask.reshape(mask.shape[-2], mask.shape[-1])
    row_idx = jnp.nonzero(jnp.any(m2, axis=1), size=HRsize[0])[0]
    col_idx = jnp.nonzero(jnp.any(m2, axis=0), size=HRsize[1])[0]
    out = jnp.take(out, row_idx, axis=2)
    out = jnp.take(out, col_idx, axis=3)
    return out


# --------------------------------- Main ----------------------------------------

if __name__ == "__main__":
    key = jax.random.PRNGKey(0)
    N, C, H, W = 2, 4, 8, 8          # args.meta_C = 4
    r = 1.5
    scale_int = math.ceil(r)
    HRsize = (int(H * r), int(W * r))                 # (12, 12)
    P = (H * scale_int) * (W * scale_int)             # 256
    out_dim = 3 * 3 * C * C                           # 144

    k1, k2, k3, k4, k5, k6 = jax.random.split(key, 6)
    params = {
        "w1": jax.random.normal(k1, (3, 256), jnp.float32) * 0.10,
        "b1": jax.random.normal(k2, (1, 256), jnp.float32) * 0.10,
        "w2": jax.random.normal(k3, (256, out_dim), jnp.float32) * 0.05,
        "b2": jax.random.normal(k4, (1, out_dim), jnp.float32) * 0.05,
    }
    x = jax.random.normal(k5, (N, C, H, W), jnp.float32)
    pos_mat = jax.random.normal(k6, (1, P, 3), jnp.float32)

    # Separable boolean mask selecting HRsize[0] rows / HRsize[1] cols.
    row_keep = jnp.arange(scale_int * H) % 4 != 3     # 12 of 16 True
    col_keep = jnp.arange(scale_int * W) % 4 != 3
    mask = (row_keep[:, None] & col_keep[None, :])[None, None]   # (1,1,16,16)

    out = meta_learner_forward(params, x, r, pos_mat, mask, HRsize)
    out = jax.block_until_ready(out)
    assert out.shape == (N, C, HRsize[0], HRsize[1])
    assert out.dtype == jnp.float32
    print("KERNEL_OK")
</pallas_src>

<mosaic_0001>
module attributes {stable_mosaic.version = 11 : i64} {
  func.func @_fused_kernel(%arg0: i32, %arg1: i32, %arg2: memref<1x3x128xf32, #tpu.memory_space<vmem>>, %arg3: memref<2x36x128xf32, #tpu.memory_space<vmem>>, %arg4: memref<256x3xf32, #tpu.memory_space<vmem>>, %arg5: memref<256x1xf32, #tpu.memory_space<vmem>>, %arg6: memref<288x256xf32, #tpu.memory_space<vmem>>, %arg7: memref<288x1xf32, #tpu.memory_space<vmem>>, %arg8: memref<2x1x4x128xf32, #tpu.memory_space<vmem>>, %arg9: memref<288x128xf32, #tpu.memory_space<vmem>>) attributes {dimension_semantics = [#tpu.dimension_semantics<parallel>, #tpu.dimension_semantics<parallel>], iteration_bounds = array<i64: 4, 1>, scalar_prefetch = 0 : i64, scratch_operands = 1 : i64, tpu.core_type = #tpu.core_type<tc>, window_params = [{transform_indices = @transform_0, window_bounds = array<i64: 1, 3, 128>}, {transform_indices = @transform_1, window_bounds = array<i64: 2, 36, 128>}, {pipeline_mode = #tpu.pipeline_mode<synchronous>, transform_indices = @transform_2, window_bounds = array<i64: 256, 3>}, {pipeline_mode = #tpu.pipeline_mode<synchronous>, transform_indices = @transform_3, window_bounds = array<i64: 256, 1>}, {pipeline_mode = #tpu.pipeline_mode<synchronous>, transform_indices = @transform_4, window_bounds = array<i64: 288, 256>}, {pipeline_mode = #tpu.pipeline_mode<synchronous>, transform_indices = @transform_5, window_bounds = array<i64: 288, 1>}, {transform_indices = @transform_6, window_bounds = array<i64: 2, 1, 4, 128>}]} {
    %c0 = arith.constant 0 : index
    %c0_0 = arith.constant 0 : index
    %c0_1 = arith.constant 0 : index
    %0 = vector.load %arg2[%c0, %c0_0, %c0_1] : memref<1x3x128xf32, #tpu.memory_space<vmem>>, vector<1x3x128xf32>
    %1 = vector.shape_cast %0 : vector<1x3x128xf32> to vector<3x128xf32>
    %c0_2 = arith.constant 0 : index
    %c0_3 = arith.constant 0 : index
    %2 = vector.load %arg4[%c0_2, %c0_3] : memref<256x3xf32, #tpu.memory_space<vmem>>, vector<256x3xf32>
    %3 = vector.extract_strided_slice %2 {offsets = [0, 0], sizes = [256, 1], strides = [1, 1]} : vector<256x3xf32> to vector<256x1xf32>
    %4 = vector.extract_strided_slice %1 {offsets = [0, 0], sizes = [1, 128], strides = [1, 1]} : vector<3x128xf32> to vector<1x128xf32>
    %5 = vector.broadcast %3 : vector<256x1xf32> to vector<256x128xf32>
    %6 = vector.broadcast %4 : vector<1x128xf32> to vector<256x128xf32>
    %7 = arith.mulf %5, %6 : vector<256x128xf32>
    %8 = vector.extract_strided_slice %2 {offsets = [0, 1], sizes = [256, 1], strides = [1, 1]} : vector<256x3xf32> to vector<256x1xf32>
    %9 = vector.extract_strided_slice %1 {offsets = [1, 0], sizes = [1, 128], strides = [1, 1]} : vector<3x128xf32> to vector<1x128xf32>
    %10 = vector.broadcast %8 : vector<256x1xf32> to vector<256x128xf32>
    %11 = vector.broadcast %9 : vector<1x128xf32> to vector<256x128xf32>
    %12 = arith.mulf %10, %11 : vector<256x128xf32>
    %13 = arith.addf %7, %12 : vector<256x128xf32>
    %14 = vector.extract_strided_slice %2 {offsets = [0, 2], sizes = [256, 1], strides = [1, 1]} : vector<256x3xf32> to vector<256x1xf32>
    %15 = vector.extract_strided_slice %1 {offsets = [2, 0], sizes = [1, 128], strides = [1, 1]} : vector<3x128xf32> to vector<1x128xf32>
    %16 = vector.broadcast %14 : vector<256x1xf32> to vector<256x128xf32>
    %17 = vector.broadcast %15 : vector<1x128xf32> to vector<256x128xf32>
    %18 = arith.mulf %16, %17 : vector<256x128xf32>
    %19 = arith.addf %13, %18 : vector<256x128xf32>
    %c0_4 = arith.constant 0 : index
    %c0_5 = arith.constant 0 : index
    %20 = vector.load %arg5[%c0_4, %c0_5] : memref<256x1xf32, #tpu.memory_space<vmem>>, vector<256x1xf32>
    %21 = vector.broadcast %20 : vector<256x1xf32> to vector<256x128xf32>
    %22 = arith.addf %19, %21 : vector<256x128xf32>
    %cst = arith.constant 2.000000e-01 : f32
    %23 = vector.broadcast %cst : f32 to vector<256x128xf32>
    %24 = arith.mulf %23, %22 : vector<256x128xf32>
    %25 = arith.maximumf %22, %24 : vector<256x128xf32>
    %c0_6 = arith.constant 0 : index
    %c0_7 = arith.constant 0 : index
    %26 = vector.load %arg6[%c0_6, %c0_7] : memref<288x256xf32, #tpu.memory_space<vmem>>, vector<288x256xf32>
    %cst_8 = arith.constant dense<0.000000e+00> : vector<288x128xf32>
    %27 = tpu.matmul %26, %25, %cst_8 {dimension_numbers = #tpu.dot_dimension_numbers<[1], [0], [0], [1], [0, 0, 1, 1], [], []>} : vector<288x256xf32>, vector<256x128xf32>, vector<288x128xf32> -> vector<288x128xf32>
    %c0_9 = arith.constant 0 : index
    %c0_10 = arith.constant 0 : index
    %28 = vector.load %arg7[%c0_9, %c0_10] : memref<288x1xf32, #tpu.memory_space<vmem>>, vector<288x1xf32>
    %29 = vector.broadcast %28 : vector<288x1xf32> to vector<288x128xf32>
    %30 = arith.addf %27, %29 : vector<288x128xf32>
    %c0_11 = arith.constant 0 : index
    %c0_12 = arith.constant 0 : index
    %31 = vector.load %arg9[%c0_11, %c0_12] : memref<288x128xf32, #tpu.memory_space<vmem>>, vector<288x128xf32>
    tpu.vector_store %arg9[%c0_11, %c0_12], %30 {strides = array<i32>} : memref<288x128xf32, #tpu.memory_space<vmem>>, vector<288x128xf32>,
    %cst_13 = arith.constant 0.000000e+00 : f32
    %32 = vector.broadcast %cst_13 : f32 to vector<8x128xf32>
    %c0_14 = arith.constant 0 : index
    %c0_15 = arith.constant 0 : index
    %c0_16 = arith.constant 0 : index
    %33 = vector.load %arg3[%c0_14, %c0_15, %c0_16] : memref<2x36x128xf32, #tpu.memory_space<vmem>>, vector<1x1x128xf32>
    %34 = vector.shape_cast %33 : vector<1x1x128xf32> to vector<1x128xf32>
    %c0_17 = arith.constant 0 : index
    %c0_18 = arith.constant 0 : index
    %35 = vector.load %arg9[%c0_17, %c0_18] : memref<288x128xf32, #tpu.memory_space<vmem>>, vector<8x128xf32>
    %36 = vector.broadcast %34 : vector<1x128xf32> to vector<8x128xf32>
    %37 = arith.mulf %36, %35 : vector<8x128xf32>
    %38 = arith.addf %32, %37 : vector<8x128xf32>
    %c0_19 = arith.constant 0 : index
    %c1 = arith.constant 1 : index
    %c0_20 = arith.constant 0 : index
    %39 = vector.load %arg3[%c0_19, %c1, %c0_20] : memref<2x36x128xf32, #tpu.memory_space<vmem>>, vector<1x1x128xf32>
    %40 = vector.shape_cast %39 : vector<1x1x128xf32> to vector<1x128xf32>
    %c8 = arith.constant 8 : index
    %c0_21 = arith.constant 0 : index
    %41 = vector.load %arg9[%c8, %c0_21] : memref<288x128xf32, #tpu.memory_space<vmem>>, vector<8x128xf32>
    %42 = vector.broadcast %40 : vector<1x128xf32> to vector<8x128xf32>
    %43 = arith.mulf %42, %41 : vector<8x128xf32>
    %44 = arith.addf %38, %43 : vector<8x128xf32>
    %c0_22 = arith.constant 0 : index
    %c2 = arith.constant 2 : index
    %c0_23 = arith.constant 0 : index
    %45 = vector.load %arg3[%c0_22, %c2, %c0_23] : memref<2x36x128xf32, #tpu.memory_space<vmem>>, vector<1x1x128xf32>
    %46 = vector.shape_cast %45 : vector<1x1x128xf32> to vector<1x128xf32>
    %c16 = arith.constant 16 : index
    %c0_24 = arith.constant 0 : index
    %47 = vector.load %arg9[%c16, %c0_24] : memref<288x128xf32, #tpu.memory_space<vmem>>, vector<8x128xf32>
    %48 = vector.broadcast %46 : vector<1x128xf32> to vector<8x128xf32>
    %49 = arith.mulf %48, %47 : vector<8x128xf32>
    %50 = arith.addf %44, %49 : vector<8x128xf32>
    %c0_25 = arith.constant 0 : index
    %c3 = arith.constant 3 : index
    %c0_26 = arith.constant 0 : index
    %51 = vector.load %arg3[%c0_25, %c3, %c0_26] : memref<2x36x128xf32, #tpu.memory_space<vmem>>, vector<1x1x128xf32>
    %52 = vector.shape_cast %51 : vector<1x1x128xf32> to vector<1x128xf32>
    %c24 = arith.constant 24 : index
    %c0_27 = arith.constant 0 : index
    %53 = vector.load %arg9[%c24, %c0_27] : memref<288x128xf32, #tpu.memory_space<vmem>>, vector<8x128xf32>
    %54 = vector.broadcast %52 : vector<1x128xf32> to vector<8x128xf32>
    %55 = arith.mulf %54, %53 : vector<8x128xf32>
    %56 = arith.addf %50, %55 : vector<8x128xf32>
    %c0_28 = arith.constant 0 : index
    %c4 = arith.constant 4 : index
    %c0_29 = arith.constant 0 : index
    %57 = vector.load %arg3[%c0_28, %c4, %c0_29] : memref<2x36x128xf32, #tpu.memory_space<vmem>>, vector<1x1x128xf32>
    %58 = vector.shape_cast %57 : vector<1x1x128xf32> to vector<1x128xf32>
    %c32 = arith.constant 32 : index
    %c0_30 = arith.constant 0 : index
    %59 = vector.load %arg9[%c32, %c0_30] : memref<288x128xf32, #tpu.memory_space<vmem>>, vector<8x128xf32>
    %60 = vector.broadcast %58 : vector<1x128xf32> to vector<8x128xf32>
    %61 = arith.mulf %60, %59 : vector<8x128xf32>
    %62 = arith.addf %56, %61 : vector<8x128xf32>
    %c0_31 = arith.constant 0 : index
    %c5 = arith.constant 5 : index
    %c0_32 = arith.constant 0 : index
    %63 = vector.load %arg3[%c0_31, %c5, %c0_32] : memref<2x36x128xf32, #tpu.memory_space<vmem>>, vector<1x1x128xf32>
    %64 = vector.shape_cast %63 : vector<1x1x128xf32> to vector<1x128xf32>
    %c40 = arith.constant 40 : index
    %c0_33 = arith.constant 0 : index
    %65 = vector.load %arg9[%c40, %c0_33] : memref<288x128xf32, #tpu.memory_space<vmem>>, vector<8x128xf32>
    %66 = vector.broadcast %64 : vector<1x128xf32> to vector<8x128xf32>
    %67 = arith.mulf %66, %65 : vector<8x128xf32>
    %68 = arith.addf %62, %67 : vector<8x128xf32>
    %c0_34 = arith.constant 0 : index
    %c6 = arith.constant 6 : index
    %c0_35 = arith.constant 0 : index
    %69 = vector.load %arg3[%c0_34, %c6, %c0_35] : memref<2x36x128xf32, #tpu.memory_space<vmem>>, vector<1x1x128xf32>
    %70 = vector.shape_cast %69 : vector<1x1x128xf32> to vector<1x128xf32>
    %c48 = arith.constant 48 : index
    %c0_36 = arith.constant 0 : index
    %71 = vector.load %arg9[%c48, %c0_36] : memref<288x128xf32, #tpu.memory_space<vmem>>, vector<8x128xf32>
    %72 = vector.broadcast %70 : vector<1x128xf32> to vector<8x128xf32>
    %73 = arith.mulf %72, %71 : vector<8x128xf32>
    %74 = arith.addf %68, %73 : vector<8x128xf32>
    %c0_37 = arith.constant 0 : index
    %c7 = arith.constant 7 : index
    %c0_38 = arith.constant 0 : index
    %75 = vector.load %arg3[%c0_37, %c7, %c0_38] : memref<2x36x128xf32, #tpu.memory_space<vmem>>, vector<1x1x128xf32>
    %76 = vector.shape_cast %75 : vector<1x1x128xf32> to vector<1x128xf32>
    %c56 = arith.constant 56 : index
    %c0_39 = arith.constant 0 : index
    %77 = vector.load %arg9[%c56, %c0_39] : memref<288x128xf32, #tpu.memory_space<vmem>>, vector<8x128xf32>
    %78 = vector.broadcast %76 : vector<1x128xf32> to vector<8x128xf32>
    %79 = arith.mulf %78, %77 : vector<8x128xf32>
    %80 = arith.addf %74, %79 : vector<8x128xf32>
    %c0_40 = arith.constant 0 : index
    %c8_41 = arith.constant 8 : index
    %c0_42 = arith.constant 0 : index
    %81 = vector.load %arg3[%c0_40, %c8_41, %c0_42] : memref<2x36x128xf32, #tpu.memory_space<vmem>>, vector<1x1x128xf32>
    %82 = vector.shape_cast %81 : vector<1x1x128xf32> to vector<1x128xf32>
    %c64 = arith.constant 64 : index
    %c0_43 = arith.constant 0 : index
    %83 = vector.load %arg9[%c64, %c0_43] : memref<288x128xf32, #tpu.memory_space<vmem>>, vector<8x128xf32>
    %84 = vector.broadcast %82 : vector<1x128xf32> to vector<8x128xf32>
    %85 = arith.mulf %84, %83 : vector<8x128xf32>
    %86 = arith.addf %80, %85 : vector<8x128xf32>
    %c0_44 = arith.constant 0 : index
    %c9 = arith.constant 9 : index
    %c0_45 = arith.constant 0 : index
    %87 = vector.load %arg3[%c0_44, %c9, %c0_45] : memref<2x36x128xf32, #tpu.memory_space<vmem>>, vector<1x1x128xf32>
    %88 = vector.shape_cast %87 : vector<1x1x128xf32> to vector<1x128xf32>
    %c72 = arith.constant 72 : index
    %c0_46 = arith.constant 0 : index
    %89 = vector.load %arg9[%c72, %c0_46] : memref<288x128xf32, #tpu.memory_space<vmem>>, vector<8x128xf32>
    %90 = vector.broadcast %88 : vector<1x128xf32> to vector<8x128xf32>
    %91 = arith.mulf %90, %89 : vector<8x128xf32>
    %92 = arith.addf %86, %91 : vector<8x128xf32>
    %c0_47 = arith.constant 0 : index
    %c10 = arith.constant 10 : index
    %c0_48 = arith.constant 0 : index
    %93 = vector.load %arg3[%c0_47, %c10, %c0_48] : memref<2x36x128xf32, #tpu.memory_space<vmem>>, vector<1x1x128xf32>
    %94 = vector.shape_cast %93 : vector<1x1x128xf32> to vector<1x128xf32>
    %c80 = arith.constant 80 : index
    %c0_49 = arith.constant 0 : index
    %95 = vector.load %arg9[%c80, %c0_49] : memref<288x128xf32, #tpu.memory_space<vmem>>, vector<8x128xf32>
    %96 = vector.broadcast %94 : vector<1x128xf32> to vector<8x128xf32>
    %97 = arith.mulf %96, %95 : vector<8x128xf32>
    %98 = arith.addf %92, %97 : vector<8x128xf32>
    %c0_50 = arith.constant 0 : index
    %c11 = arith.constant 11 : index
    %c0_51 = arith.constant 0 : index
    %99 = vector.load %arg3[%c0_50, %c11, %c0_51] : memref<2x36x128xf32, #tpu.memory_space<vmem>>, vector<1x1x128xf32>
    %100 = vector.shape_cast %99 : vector<1x1x128xf32> to vector<1x128xf32>
    %c88 = arith.constant 88 : index
    %c0_52 = arith.constant 0 : index
    %101 = vector.load %arg9[%c88, %c0_52] : memref<288x128xf32, #tpu.memory_space<vmem>>, vector<8x128xf32>
    %102 = vector.broadcast %100 : vector<1x128xf32> to vector<8x128xf32>
    %103 = arith.mulf %102, %101 : vector<8x128xf32>
    %104 = arith.addf %98, %103 : vector<8x128xf32>
    %c0_53 = arith.constant 0 : index
    %c12 = arith.constant 12 : index
    %c0_54 = arith.constant 0 : index
    %105 = vector.load %arg3[%c0_53, %c12, %c0_54] : memref<2x36x128xf32, #tpu.memory_space<vmem>>, vector<1x1x128xf32>
    %106 = vector.shape_cast %105 : vector<1x1x128xf32> to vector<1x128xf32>
    %c96 = arith.constant 96 : index
    %c0_55 = arith.constant 0 : index
    %107 = vector.load %arg9[%c96, %c0_55] : memref<288x128xf32, #tpu.memory_space<vmem>>, vector<8x128xf32>
    %108 = vector.broadcast %106 : vector<1x128xf32> to vector<8x128xf32>
    %109 = arith.mulf %108, %107 : vector<8x128xf32>
    %110 = arith.addf %104, %109 : vector<8x128xf32>
    %c0_56 = arith.constant 0 : index
    %c13 = arith.constant 13 : index
    %c0_57 = arith.constant 0 : index
    %111 = vector.load %arg3[%c0_56, %c13, %c0_57] : memref<2x36x128xf32, #tpu.memory_space<vmem>>, vector<1x1x128xf32>
    %112 = vector.shape_cast %111 : vector<1x1x128xf32> to vector<1x128xf32>
    %c104 = arith.constant 104 : index
    %c0_58 = arith.constant 0 : index
    %113 = vector.load %arg9[%c104, %c0_58] : memref<288x128xf32, #tpu.memory_space<vmem>>, vector<8x128xf32>
    %114 = vector.broadcast %112 : vector<1x128xf32> to vector<8x128xf32>
    %115 = arith.mulf %114, %113 : vector<8x128xf32>
    %116 = arith.addf %110, %115 : vector<8x128xf32>
    %c0_59 = arith.constant 0 : index
    %c14 = arith.constant 14 : index
    %c0_60 = arith.constant 0 : index
    %117 = vector.load %arg3[%c0_59, %c14, %c0_60] : memref<2x36x128xf32, #tpu.memory_space<vmem>>, vector<1x1x128xf32>
    %118 = vector.shape_cast %117 : vector<1x1x128xf32> to vector<1x128xf32>
    %c112 = arith.constant 112 : index
    %c0_61 = arith.constant 0 : index
    %119 = vector.load %arg9[%c112, %c0_61] : memref<288x128xf32, #tpu.memory_space<vmem>>, vector<8x128xf32>
    %120 = vector.broadcast %118 : vector<1x128xf32> to vector<8x128xf32>
    %121 = arith.mulf %120, %119 : vector<8x128xf32>
    %122 = arith.addf %116, %121 : vector<8x128xf32>
    %c0_62 = arith.constant 0 : index
    %c15 = arith.constant 15 : index
    %c0_63 = arith.constant 0 : index
    %123 = vector.load %arg3[%c0_62, %c15, %c0_63] : memref<2x36x128xf32, #tpu.memory_space<vmem>>, vector<1x1x128xf32>
    %124 = vector.shape_cast %123 : vector<1x1x128xf32> to vector<1x128xf32>
    %c120 = arith.constant 120 : index
    %c0_64 = arith.constant 0 : index
    %125 = vector.load %arg9[%c120, %c0_64] : memref<288x128xf32, #tpu.memory_space<vmem>>, vector<8x128xf32>
    %126 = vector.broadcast %124 : vector<1x128xf32> to vector<8x128xf32>
    %127 = arith.mulf %126, %125 : vector<8x128xf32>
    %128 = arith.addf %122, %127 : vector<8x128xf32>
    %c0_65 = arith.constant 0 : index
    %c16_66 = arith.constant 16 : index
    %c0_67 = arith.constant 0 : index
    %129 = vector.load %arg3[%c0_65, %c16_66, %c0_67] : memref<2x36x128xf32, #tpu.memory_space<vmem>>, vector<1x1x128xf32>
    %130 = vector.shape_cast %129 : vector<1x1x128xf32> to vector<1x128xf32>
    %c128 = arith.constant 128 : index
    %c0_68 = arith.constant 0 : index
    %131 = vector.load %arg9[%c128, %c0_68] : memref<288x128xf32, #tpu.memory_space<vmem>>, vector<8x128xf32>
    %132 = vector.broadcast %130 : vector<1x128xf32> to vector<8x128xf32>
    %133 = arith.mulf %132, %131 : vector<8x128xf32>
    %134 = arith.addf %128, %133 : vector<8x128xf32>
    %c0_69 = arith.constant 0 : index
    %c17 = arith.constant 17 : index
    %c0_70 = arith.constant 0 : index
    %135 = vector.load %arg3[%c0_69, %c17, %c0_70] : memref<2x36x128xf32, #tpu.memory_space<vmem>>, vector<1x1x128xf32>
    %136 = vector.shape_cast %135 : vector<1x1x128xf32> to vector<1x128xf32>
    %c136 = arith.constant 136 : index
    %c0_71 = arith.constant 0 : index
    %137 = vector.load %arg9[%c136, %c0_71] : memref<288x128xf32, #tpu.memory_space<vmem>>, vector<8x128xf32>
    %138 = vector.broadcast %136 : vector<1x128xf32> to vector<8x128xf32>
    %139 = arith.mulf %138, %137 : vector<8x128xf32>
    %140 = arith.addf %134, %139 : vector<8x128xf32>
    %c0_72 = arith.constant 0 : index
    %c18 = arith.constant 18 : index
    %c0_73 = arith.constant 0 : index
    %141 = vector.load %arg3[%c0_72, %c18, %c0_73] : memref<2x36x128xf32, #tpu.memory_space<vmem>>, vector<1x1x128xf32>
    %142 = vector.shape_cast %141 : vector<1x1x128xf32> to vector<1x128xf32>
    %c144 = arith.constant 144 : index
    %c0_74 = arith.constant 0 : index
    %143 = vector.load %arg9[%c144, %c0_74] : memref<288x128xf32, #tpu.memory_space<vmem>>, vector<8x128xf32>
    %144 = vector.broadcast %142 : vector<1x128xf32> to vector<8x128xf32>
    %145 = arith.mulf %144, %143 : vector<8x128xf32>
    %146 = arith.addf %140, %145 : vector<8x128xf32>
    %c0_75 = arith.constant 0 : index
    %c19 = arith.constant 19 : index
    %c0_76 = arith.constant 0 : index
    %147 = vector.load %arg3[%c0_75, %c19, %c0_76] : memref<2x36x128xf32, #tpu.memory_space<vmem>>, vector<1x1x128xf32>
    %148 = vector.shape_cast %147 : vector<1x1x128xf32> to vector<1x128xf32>
    %c152 = arith.constant 152 : index
    %c0_77 = arith.constant 0 : index
    %149 = vector.load %arg9[%c152, %c0_77] : memref<288x128xf32, #tpu.memory_space<vmem>>, vector<8x128xf32>
    %150 = vector.broadcast %148 : vector<1x128xf32> to vector<8x128xf32>
    %151 = arith.mulf %150, %149 : vector<8x128xf32>
    %152 = arith.addf %146, %151 : vector<8x128xf32>
    %c0_78 = arith.constant 0 : index
    %c20 = arith.constant 20 : index
    %c0_79 = arith.constant 0 : index
    %153 = vector.load %arg3[%c0_78, %c20, %c0_79] : memref<2x36x128xf32, #tpu.memory_space<vmem>>, vector<1x1x128xf32>
    %154 = vector.shape_cast %153 : vector<1x1x128xf32> to vector<1x128xf32>
    %c160 = arith.constant 160 : index
    %c0_80 = arith.constant 0 : index
    %155 = vector.load %arg9[%c160, %c0_80] : memref<288x128xf32, #tpu.memory_space<vmem>>, vector<8x128xf32>
    %156 = vector.broadcast %154 : vector<1x128xf32> to vector<8x128xf32>
    %157 = arith.mulf %156, %155 : vector<8x128xf32>
    %158 = arith.addf %152, %157 : vector<8x128xf32>
    %c0_81 = arith.constant 0 : index
    %c21 = arith.constant 21 : index
    %c0_82 = arith.constant 0 : index
    %159 = vector.load %arg3[%c0_81, %c21, %c0_82] : memref<2x36x128xf32, #tpu.memory_space<vmem>>, vector<1x1x128xf32>
    %160 = vector.shape_cast %159 : vector<1x1x128xf32> to vector<1x128xf32>
    %c168 = arith.constant 168 : index
    %c0_83 = arith.constant 0 : index
    %161 = vector.load %arg9[%c168, %c0_83] : memref<288x128xf32, #tpu.memory_space<vmem>>, vector<8x128xf32>
    %162 = vector.broadcast %160 : vector<1x128xf32> to vector<8x128xf32>
    %163 = arith.mulf %162, %161 : vector<8x128xf32>
    %164 = arith.addf %158, %163 : vector<8x128xf32>
    %c0_84 = arith.constant 0 : index
    %c22 = arith.constant 22 : index
    %c0_85 = arith.constant 0 : index
    %165 = vector.load %arg3[%c0_84, %c22, %c0_85] : memref<2x36x128xf32, #tpu.memory_space<vmem>>, vector<1x1x128xf32>
    %166 = vector.shape_cast %165 : vector<1x1x128xf32> to vector<1x128xf32>
    %c176 = arith.constant 176 : index
    %c0_86 = arith.constant 0 : index
    %167 = vector.load %arg9[%c176, %c0_86] : memref<288x128xf32, #tpu.memory_space<vmem>>, vector<8x128xf32>
    %168 = vector.broadcast %166 : vector<1x128xf32> to vector<8x128xf32>
    %169 = arith.mulf %168, %167 : vector<8x128xf32>
    %170 = arith.addf %164, %169 : vector<8x128xf32>
    %c0_87 = arith.constant 0 : index
    %c23 = arith.constant 23 : index
    %c0_88 = arith.constant 0 : index
    %171 = vector.load %arg3[%c0_87, %c23, %c0_88] : memref<2x36x128xf32, #tpu.memory_space<vmem>>, vector<1x1x128xf32>
    %172 = vector.shape_cast %171 : vector<1x1x128xf32> to vector<1x128xf32>
    %c184 = arith.constant 184 : index
    %c0_89 = arith.constant 0 : index
    %173 = vector.load %arg9[%c184, %c0_89] : memref<288x128xf32, #tpu.memory_space<vmem>>, vector<8x128xf32>
    %174 = vector.broadcast %172 : vector<1x128xf32> to vector<8x128xf32>
    %175 = arith.mulf %174, %173 : vector<8x128xf32>
    %176 = arith.addf %170, %175 : vector<8x128xf32>
    %c0_90 = arith.constant 0 : index
    %c24_91 = arith.constant 24 : index
    %c0_92 = arith.constant 0 : index
    %177 = vector.load %arg3[%c0_90, %c24_91, %c0_92] : memref<2x36x128xf32, #tpu.memory_space<vmem>>, vector<1x1x128xf32>
    %178 = vector.shape_cast %177 : vector<1x1x128xf32> to vector<1x128xf32>
    %c192 = arith.constant 192 : index
    %c0_93 = arith.constant 0 : index
    %179 = vector.load %arg9[%c192, %c0_93] : memref<288x128xf32, #tpu.memory_space<vmem>>, vector<8x128xf32>
    %180 = vector.broadcast %178 : vector<1x128xf32> to vector<8x128xf32>
    %181 = arith.mulf %180, %179 : vector<8x128xf32>
    %182 = arith.addf %176, %181 : vector<8x128xf32>
    %c0_94 = arith.constant 0 : index
    %c25 = arith.constant 25 : index
    %c0_95 = arith.constant 0 : index
    %183 = vector.load %arg3[%c0_94, %c25, %c0_95] : memref<2x36x128xf32, #tpu.memory_space<vmem>>, vector<1x1x128xf32>
    %184 = vector.shape_cast %183 : vector<1x1x128xf32> to vector<1x128xf32>
    %c200 = arith.constant 200 : index
    %c0_96 = arith.constant 0 : index
    %185 = vector.load %arg9[%c200, %c0_96] : memref<288x128xf32, #tpu.memory_space<vmem>>, vector<8x128xf32>
    %186 = vector.broadcast %184 : vector<1x128xf32> to vector<8x128xf32>
    %187 = arith.mulf %186, %185 : vector<8x128xf32>
    %188 = arith.addf %182, %187 : vector<8x128xf32>
    %c0_97 = arith.constant 0 : index
    %c26 = arith.constant 26 : index
    %c0_98 = arith.constant 0 : index
    %189 = vector.load %arg3[%c0_97, %c26, %c0_98] : memref<2x36x128xf32, #tpu.memory_space<vmem>>, vector<1x1x128xf32>
    %190 = vector.shape_cast %189 : vector<1x1x128xf32> to vector<1x128xf32>
    %c208 = arith.constant 208 : index
    %c0_99 = arith.constant 0 : index
    %191 = vector.load %arg9[%c208, %c0_99] : memref<288x128xf32, #tpu.memory_space<vmem>>, vector<8x128xf32>
    %192 = vector.broadcast %190 : vector<1x128xf32> to vector<8x128xf32>
    %193 = arith.mulf %192, %191 : vector<8x128xf32>
    %194 = arith.addf %188, %193 : vector<8x128xf32>
    %c0_100 = arith.constant 0 : index
    %c27 = arith.constant 27 : index
    %c0_101 = arith.constant 0 : index
    %195 = vector.load %arg3[%c0_100, %c27, %c0_101] : memref<2x36x128xf32, #tpu.memory_space<vmem>>, vector<1x1x128xf32>
    %196 = vector.shape_cast %195 : vector<1x1x128xf32> to vector<1x128xf32>
    %c216 = arith.constant 216 : index
    %c0_102 = arith.constant 0 : index
    %197 = vector.load %arg9[%c216, %c0_102] : memref<288x128xf32, #tpu.memory_space<vmem>>, vector<8x128xf32>
    %198 = vector.broadcast %196 : vector<1x128xf32> to vector<8x128xf32>
    %199 = arith.mulf %198, %197 : vector<8x128xf32>
    %200 = arith.addf %194, %199 : vector<8x128xf32>
    %c0_103 = arith.constant 0 : index
    %c28 = arith.constant 28 : index
    %c0_104 = arith.constant 0 : index
    %201 = vector.load %arg3[%c0_103, %c28, %c0_104] : memref<2x36x128xf32, #tpu.memory_space<vmem>>, vector<1x1x128xf32>
    %202 = vector.shape_cast %201 : vector<1x1x128xf32> to vector<1x128xf32>
    %c224 = arith.constant 224 : index
    %c0_105 = arith.constant 0 : index
    %203 = vector.load %arg9[%c224, %c0_105] : memref<288x128xf32, #tpu.memory_space<vmem>>, vector<8x128xf32>
    %204 = vector.broadcast %202 : vector<1x128xf32> to vector<8x128xf32>
    %205 = arith.mulf %204, %203 : vector<8x128xf32>
    %206 = arith.addf %200, %205 : vector<8x128xf32>
    %c0_106 = arith.constant 0 : index
    %c29 = arith.constant 29 : index
    %c0_107 = arith.constant 0 : index
    %207 = vector.load %arg3[%c0_106, %c29, %c0_107] : memref<2x36x128xf32, #tpu.memory_space<vmem>>, vector<1x1x128xf32>
    %208 = vector.shape_cast %207 : vector<1x1x128xf32> to vector<1x128xf32>
    %c232 = arith.constant 232 : index
    %c0_108 = arith.constant 0 : index
    %209 = vector.load %arg9[%c232, %c0_108] : memref<288x128xf32, #tpu.memory_space<vmem>>, vector<8x128xf32>
    %210 = vector.broadcast %208 : vector<1x128xf32> to vector<8x128xf32>
    %211 = arith.mulf %210, %209 : vector<8x128xf32>
    %212 = arith.addf %206, %211 : vector<8x128xf32>
    %c0_109 = arith.constant 0 : index
    %c30 = arith.constant 30 : index
    %c0_110 = arith.constant 0 : index
    %213 = vector.load %arg3[%c0_109, %c30, %c0_110] : memref<2x36x128xf32, #tpu.memory_space<vmem>>, vector<1x1x128xf32>
    %214 = vector.shape_cast %213 : vector<1x1x128xf32> to vector<1x128xf32>
    %c240 = arith.constant 240 : index
    %c0_111 = arith.constant 0 : index
    %215 = vector.load %arg9[%c240, %c0_111] : memref<288x128xf32, #tpu.memory_space<vmem>>, vector<8x128xf32>
    %216 = vector.broadcast %214 : vector<1x128xf32> to vector<8x128xf32>
    %217 = arith.mulf %216, %215 : vector<8x128xf32>
    %218 = arith.addf %212, %217 : vector<8x128xf32>
    %c0_112 = arith.constant 0 : index
    %c31 = arith.constant 31 : index
    %c0_113 = arith.constant 0 : index
    %219 = vector.load %arg3[%c0_112, %c31, %c0_113] : memref<2x36x128xf32, #tpu.memory_space<vmem>>, vector<1x1x128xf32>
    %220 = vector.shape_cast %219 : vector<1x1x128xf32> to vector<1x128xf32>
    %c248 = arith.constant 248 : index
    %c0_114 = arith.constant 0 : index
    %221 = vector.load %arg9[%c248, %c0_114] : memref<288x128xf32, #tpu.memory_space<vmem>>, vector<8x128xf32>
    %222 = vector.broadcast %220 : vector<1x128xf32> to vector<8x128xf32>
    %223 = arith.mulf %222, %221 : vector<8x128xf32>
    %224 = arith.addf %218, %223 : vector<8x128xf32>
    %c0_115 = arith.constant 0 : index
    %c32_116 = arith.constant 32 : index
    %c0_117 = arith.constant 0 : index
    %225 = vector.load %arg3[%c0_115, %c32_116, %c0_117] : memref<2x36x128xf32, #tpu.memory_space<vmem>>, vector<1x1x128xf32>
    %226 = vector.shape_cast %225 : vector<1x1x128xf32> to vector<1x128xf32>
    %c256 = arith.constant 256 : index
    %c0_118 = arith.constant 0 : index
    %227 = vector.load %arg9[%c256, %c0_118] : memref<288x128xf32, #tpu.memory_space<vmem>>, vector<8x128xf32>
    %228 = vector.broadcast %226 : vector<1x128xf32> to vector<8x128xf32>
    %229 = arith.mulf %228, %227 : vector<8x128xf32>
    %230 = arith.addf %224, %229 : vector<8x128xf32>
    %c0_119 = arith.constant 0 : index
    %c33 = arith.constant 33 : index
    %c0_120 = arith.constant 0 : index
    %231 = vector.load %arg3[%c0_119, %c33, %c0_120] : memref<2x36x128xf32, #tpu.memory_space<vmem>>, vector<1x1x128xf32>
    %232 = vector.shape_cast %231 : vector<1x1x128xf32> to vector<1x128xf32>
    %c264 = arith.constant 264 : index
    %c0_121 = arith.constant 0 : index
    %233 = vector.load %arg9[%c264, %c0_121] : memref<288x128xf32, #tpu.memory_space<vmem>>, vector<8x128xf32>
    %234 = vector.broadcast %232 : vector<1x128xf32> to vector<8x128xf32>
    %235 = arith.mulf %234, %233 : vector<8x128xf32>
    %236 = arith.addf %230, %235 : vector<8x128xf32>
    %c0_122 = arith.constant 0 : index
    %c34 = arith.constant 34 : index
    %c0_123 = arith.constant 0 : index
    %237 = vector.load %arg3[%c0_122, %c34, %c0_123] : memref<2x36x128xf32, #tpu.memory_space<vmem>>, vector<1x1x128xf32>
    %238 = vector.shape_cast %237 : vector<1x1x128xf32> to vector<1x128xf32>
    %c272 = arith.constant 272 : index
    %c0_124 = arith.constant 0 : index
    %239 = vector.load %arg9[%c272, %c0_124] : memref<288x128xf32, #tpu.memory_space<vmem>>, vector<8x128xf32>
    %240 = vector.broadcast %238 : vector<1x128xf32> to vector<8x128xf32>
    %241 = arith.mulf %240, %239 : vector<8x128xf32>
    %242 = arith.addf %236, %241 : vector<8x128xf32>
    %c0_125 = arith.constant 0 : index
    %c35 = arith.constant 35 : index
    %c0_126 = arith.constant 0 : index
    %243 = vector.load %arg3[%c0_125, %c35, %c0_126] : memref<2x36x128xf32, #tpu.memory_space<vmem>>, vector<1x1x128xf32>
    %244 = vector.shape_cast %243 : vector<1x1x128xf32> to vector<1x128xf32>
    %c280 = arith.constant 280 : index
    %c0_127 = arith.constant 0 : index
    %245 = vector.load %arg9[%c280, %c0_127] : memref<288x128xf32, #tpu.memory_space<vmem>>, vector<8x128xf32>
    %246 = vector.broadcast %244 : vector<1x128xf32> to vector<8x128xf32>
    %247 = arith.mulf %246, %245 : vector<8x128xf32>
    %248 = arith.addf %242, %247 : vector<8x128xf32>
    %249 = vector.extract_strided_slice %248 {offsets = [0, 0], sizes = [4, 128], strides = [1, 1]} : vector<8x128xf32> to vector<4x128xf32>
    %c0_128 = arith.constant 0 : index
    %c0_129 = arith.constant 0 : index
    %c0_130 = arith.constant 0 : index
    %c0_131 = arith.constant 0 : index
    %250 = vector.load %arg8[%c0_128, %c0_129, %c0_130, %c0_131] : memref<2x1x4x128xf32, #tpu.memory_space<vmem>>, vector<1x1x4x128xf32>
    %251 = vector.shape_cast %250 : vector<1x1x4x128xf32> to vector<4x128xf32>
    %252 = vector.shape_cast %249 : vector<4x128xf32> to vector<1x1x4x128xf32>
    tpu.vector_store %arg8[%c0_128, %c0_129, %c0_130, %c0_131], %252 {strides = array<i32>} : memref<2x1x4x128xf32, #tpu.memory_space<vmem>>, vector<1x1x4x128xf32>,
    %cst_132 = arith.constant 0.000000e+00 : f32
    %253 = vector.broadcast %cst_132 : f32 to vector<8x128xf32>
    %c1_133 = arith.constant 1 : index
    %c0_134 = arith.constant 0 : index
    %c0_135 = arith.constant 0 : index
    %254 = vector.load %arg3[%c1_133, %c0_134, %c0_135] : memref<2x36x128xf32, #tpu.memory_space<vmem>>, vector<1x1x128xf32>
    %255 = vector.shape_cast %254 : vector<1x1x128xf32> to vector<1x128xf32>
    %c0_136 = arith.constant 0 : index
    %c0_137 = arith.constant 0 : index
    %256 = vector.load %arg9[%c0_136, %c0_137] : memref<288x128xf32, #tpu.memory_space<vmem>>, vector<8x128xf32>
    %257 = vector.broadcast %255 : vector<1x128xf32> to vector<8x128xf32>
    %258 = arith.mulf %257, %256 : vector<8x128xf32>
    %259 = arith.addf %253, %258 : vector<8x128xf32>
    %c1_138 = arith.constant 1 : index
    %c1_139 = arith.constant 1 : index
    %c0_140 = arith.constant 0 : index
    %260 = vector.load %arg3[%c1_138, %c1_139, %c0_140] : memref<2x36x128xf32, #tpu.memory_space<vmem>>, vector<1x1x128xf32>
    %261 = vector.shape_cast %260 : vector<1x1x128xf32> to vector<1x128xf32>
    %c8_141 = arith.constant 8 : index
    %c0_142 = arith.constant 0 : index
    %262 = vector.load %arg9[%c8_141, %c0_142] : memref<288x128xf32, #tpu.memory_space<vmem>>, vector<8x128xf32>
    %263 = vector.broadcast %261 : vector<1x128xf32> to vector<8x128xf32>
    %264 = arith.mulf %263, %262 : vector<8x128xf32>
    %265 = arith.addf %259, %264 : vector<8x128xf32>
    %c1_143 = arith.constant 1 : index
    %c2_144 = arith.constant 2 : index
    %c0_145 = arith.constant 0 : index
    %266 = vector.load %arg3[%c1_143, %c2_144, %c0_145] : memref<2x36x128xf32, #tpu.memory_space<vmem>>, vector<1x1x128xf32>
    %267 = vector.shape_cast %266 : vector<1x1x128xf32> to vector<1x128xf32>
    %c16_146 = arith.constant 16 : index
    %c0_147 = arith.constant 0 : index
    %268 = vector.load %arg9[%c16_146, %c0_147] : memref<288x128xf32, #tpu.memory_space<vmem>>, vector<8x128xf32>
    %269 = vector.broadcast %267 : vector<1x128xf32> to vector<8x128xf32>
    %270 = arith.mulf %269, %268 : vector<8x128xf32>
    %271 = arith.addf %265, %270 : vector<8x128xf32>
    %c1_148 = arith.constant 1 : index
    %c3_149 = arith.constant 3 : index
    %c0_150 = arith.constant 0 : index
    %272 = vector.load %arg3[%c1_148, %c3_149, %c0_150] : memref<2x36x128xf32, #tpu.memory_space<vmem>>, vector<1x1x128xf32>
    %273 = vector.shape_cast %272 : vector<1x1x128xf32> to vector<1x128xf32>
    %c24_151 = arith.constant 24 : index
    %c0_152 = arith.constant 0 : index
    %274 = vector.load %arg9[%c24_151, %c0_152] : memref<288x128xf32, #tpu.memory_space<vmem>>, vector<8x128xf32>
    %275 = vector.broadcast %273 : vector<1x128xf32> to vector<8x128xf32>
    %276 = arith.mulf %275, %274 : vector<8x128xf32>
    %277 = arith.addf %271, %276 : vector<8x128xf32>
    %c1_153 = arith.constant 1 : index
    %c4_154 = arith.constant 4 : index
    %c0_155 = arith.constant 0 : index
    %278 = vector.load %arg3[%c1_153, %c4_154, %c0_155] : memref<2x36x128xf32, #tpu.memory_space<vmem>>, vector<1x1x128xf32>
    %279 = vector.shape_cast %278 : vector<1x1x128xf32> to vector<1x128xf32>
    %c32_156 = arith.constant 32 : index
    %c0_157 = arith.constant 0 : index
    %280 = vector.load %arg9[%c32_156, %c0_157] : memref<288x128xf32, #tpu.memory_space<vmem>>, vector<8x128xf32>
    %281 = vector.broadcast %279 : vector<1x128xf32> to vector<8x128xf32>
    %282 = arith.mulf %281, %280 : vector<8x128xf32>
    %283 = arith.addf %277, %282 : vector<8x128xf32>
    %c1_158 = arith.constant 1 : index
    %c5_159 = arith.constant 5 : index
    %c0_160 = arith.constant 0 : index
    %284 = vector.load %arg3[%c1_158, %c5_159, %c0_160] : memref<2x36x128xf32, #tpu.memory_space<vmem>>, vector<1x1x128xf32>
    %285 = vector.shape_cast %284 : vector<1x1x128xf32> to vector<1x128xf32>
    %c40_161 = arith.constant 40 : index
    %c0_162 = arith.constant 0 : index
    %286 = vector.load %arg9[%c40_161, %c0_162] : memref<288x128xf32, #tpu.memory_space<vmem>>, vector<8x128xf32>
    %287 = vector.broadcast %285 : vector<1x128xf32> to vector<8x128xf32>
    %288 = arith.mulf %287, %286 : vector<8x128xf32>
    %289 = arith.addf %283, %288 : vector<8x128xf32>
    %c1_163 = arith.constant 1 : index
    %c6_164 = arith.constant 6 : index
    %c0_165 = arith.constant 0 : index
    %290 = vector.load %arg3[%c1_163, %c6_164, %c0_165] : memref<2x36x128xf32, #tpu.memory_space<vmem>>, vector<1x1x128xf32>
    %291 = vector.shape_cast %290 : vector<1x1x128xf32> to vector<1x128xf32>
    %c48_166 = arith.constant 48 : index
    %c0_167 = arith.constant 0 : index
    %292 = vector.load %arg9[%c48_166, %c0_167] : memref<288x128xf32, #tpu.memory_space<vmem>>, vector<8x128xf32>
    %293 = vector.broadcast %291 : vector<1x128xf32> to vector<8x128xf32>
    %294 = arith.mulf %293, %292 : vector<8x128xf32>
    %295 = arith.addf %289, %294 : vector<8x128xf32>
    %c1_168 = arith.constant 1 : index
    %c7_169 = arith.constant 7 : index
    %c0_170 = arith.constant 0 : index
    %296 = vector.load %arg3[%c1_168, %c7_169, %c0_170] : memref<2x36x128xf32, #tpu.memory_space<vmem>>, vector<1x1x128xf32>
    %297 = vector.shape_cast %296 : vector<1x1x128xf32> to vector<1x128xf32>
    %c56_171 = arith.constant 56 : index
    %c0_172 = arith.constant 0 : index
    %298 = vector.load %arg9[%c56_171, %c0_172] : memref<288x128xf32, #tpu.memory_space<vmem>>, vector<8x128xf32>
    %299 = vector.broadcast %297 : vector<1x128xf32> to vector<8x128xf32>
    %300 = arith.mulf %299, %298 : vector<8x128xf32>
    %301 = arith.addf %295, %300 : vector<8x128xf32>
    %c1_173 = arith.constant 1 : index
    %c8_174 = arith.constant 8 : index
    %c0_175 = arith.constant 0 : index
    %302 = vector.load %arg3[%c1_173, %c8_174, %c0_175] : memref<2x36x128xf32, #tpu.memory_space<vmem>>, vector<1x1x128xf32>
    %303 = vector.shape_cast %302 : vector<1x1x128xf32> to vector<1x128xf32>
    %c64_176 = arith.constant 64 : index
    %c0_177 = arith.constant 0 : index
    %304 = vector.load %arg9[%c64_176, %c0_177] : memref<288x128xf32, #tpu.memory_space<vmem>>, vector<8x128xf32>
    %305 = vector.broadcast %303 : vector<1x128xf32> to vector<8x128xf32>
    %306 = arith.mulf %305, %304 : vector<8x128xf32>
    %307 = arith.addf %301, %306 : vector<8x128xf32>
    %c1_178 = arith.constant 1 : index
    %c9_179 = arith.constant 9 : index
    %c0_180 = arith.constant 0 : index
    %308 = vector.load %arg3[%c1_178, %c9_179, %c0_180] : memref<2x36x128xf32, #tpu.memory_space<vmem>>, vector<1x1x128xf32>
    %309 = vector.shape_cast %308 : vector<1x1x128xf32> to vector<1x128xf32>
    %c72_181 = arith.constant 72 : index
    %c0_182 = arith.constant 0 : index
    %310 = vector.load %arg9[%c72_181, %c0_182] : memref<288x128xf32, #tpu.memory_space<vmem>>, vector<8x128xf32>
    %311 = vector.broadcast %309 : vector<1x128xf32> to vector<8x128xf32>
    %312 = arith.mulf %311, %310 : vector<8x128xf32>
    %313 = arith.addf %307, %312 : vector<8x128xf32>
    %c1_183 = arith.constant 1 : index
    %c10_184 = arith.constant 10 : index
    %c0_185 = arith.constant 0 : index
    %314 = vector.load %arg3[%c1_183, %c10_184, %c0_185] : memref<2x36x128xf32, #tpu.memory_space<vmem>>, vector<1x1x128xf32>
    %315 = vector.shape_cast %314 : vector<1x1x128xf32> to vector<1x128xf32>
    %c80_186 = arith.constant 80 : index
    %c0_187 = arith.constant 0 : index
    %316 = vector.load %arg9[%c80_186, %c0_187] : memref<288x128xf32, #tpu.memory_space<vmem>>, vector<8x128xf32>
    %317 = vector.broadcast %315 : vector<1x128xf32> to vector<8x128xf32>
    %318 = arith.mulf %317, %316 : vector<8x128xf32>
    %319 = arith.addf %313, %318 : vector<8x128xf32>
    %c1_188 = arith.constant 1 : index
    %c11_189 = arith.constant 11 : index
    %c0_190 = arith.constant 0 : index
    %320 = vector.load %arg3[%c1_188, %c11_189, %c0_190] : memref<2x36x128xf32, #tpu.memory_space<vmem>>, vector<1x1x128xf32>
    %321 = vector.shape_cast %320 : vector<1x1x128xf32> to vector<1x128xf32>
    %c88_191 = arith.constant 88 : index
    %c0_192 = arith.constant 0 : index
    %322 = vector.load %arg9[%c88_191, %c0_192] : memref<288x128xf32, #tpu.memory_space<vmem>>, vector<8x128xf32>
    %323 = vector.broadcast %321 : vector<1x128xf32> to vector<8x128xf32>
    %324 = arith.mulf %323, %322 : vector<8x128xf32>
    %325 = arith.addf %319, %324 : vector<8x128xf32>
    %c1_193 = arith.constant 1 : index
    %c12_194 = arith.constant 12 : index
    %c0_195 = arith.constant 0 : index
    %326 = vector.load %arg3[%c1_193, %c12_194, %c0_195] : memref<2x36x128xf32, #tpu.memory_space<vmem>>, vector<1x1x128xf32>
    %327 = vector.shape_cast %326 : vector<1x1x128xf32> to vector<1x128xf32>
    %c96_196 = arith.constant 96 : index
    %c0_197 = arith.constant 0 : index
    %328 = vector.load %arg9[%c96_196, %c0_197] : memref<288x128xf32, #tpu.memory_space<vmem>>, vector<8x128xf32>
    %329 = vector.broadcast %327 : vector<1x128xf32> to vector<8x128xf32>
    %330 = arith.mulf %329, %328 : vector<8x128xf32>
    %331 = arith.addf %325, %330 : vector<8x128xf32>
    %c1_198 = arith.constant 1 : index
    %c13_199 = arith.constant 13 : index
    %c0_200 = arith.constant 0 : index
    %332 = vector.load %arg3[%c1_198, %c13_199, %c0_200] : memref<2x36x128xf32, #tpu.memory_space<vmem>>, vector<1x1x128xf32>
    %333 = vector.shape_cast %332 : vector<1x1x128xf32> to vector<1x128xf32>
    %c104_201 = arith.constant 104 : index
    %c0_202 = arith.constant 0 : index
    %334 = vector.load %arg9[%c104_201, %c0_202] : memref<288x128xf32, #tpu.memory_space<vmem>>, vector<8x128xf32>
    %335 = vector.broadcast %333 : vector<1x128xf32> to vector<8x128xf32>
    %336 = arith.mulf %335, %334 : vector<8x128xf32>
    %337 = arith.addf %331, %336 : vector<8x128xf32>
    %c1_203 = arith.constant 1 : index
    %c14_204 = arith.constant 14 : index
    %c0_205 = arith.constant 0 : index
    %338 = vector.load %arg3[%c1_203, %c14_204, %c0_205] : memref<2x36x128xf32, #tpu.memory_space<vmem>>, vector<1x1x128xf32>
    %339 = vector.shape_cast %338 : vector<1x1x128xf32> to vector<1x128xf32>
    %c112_206 = arith.constant 112 : index
    %c0_207 = arith.constant 0 : index
    %340 = vector.load %arg9[%c112_206, %c0_207] : memref<288x128xf32, #tpu.memory_space<vmem>>, vector<8x128xf32>
    %341 = vector.broadcast %339 : vector<1x128xf32> to vector<8x128xf32>
    %342 = arith.mulf %341, %340 : vector<8x128xf32>
    %343 = arith.addf %337, %342 : vector<8x128xf32>
    %c1_208 = arith.constant 1 : index
    %c15_209 = arith.constant 15 : index
    %c0_210 = arith.constant 0 : index
    %344 = vector.load %arg3[%c1_208, %c15_209, %c0_210] : memref<2x36x128xf32, #tpu.memory_space<vmem>>, vector<1x1x128xf32>
    %345 = vector.shape_cast %344 : vector<1x1x128xf32> to vector<1x128xf32>
    %c120_211 = arith.constant 120 : index
    %c0_212 = arith.constant 0 : index
    %346 = vector.load %arg9[%c120_211, %c0_212] : memref<288x128xf32, #tpu.memory_space<vmem>>, vector<8x128xf32>
    %347 = vector.broadcast %345 : vector<1x128xf32> to vector<8x128xf32>
    %348 = arith.mulf %347, %346 : vector<8x128xf32>
    %349 = arith.addf %343, %348 : vector<8x128xf32>
    %c1_213 = arith.constant 1 : index
    %c16_214 = arith.constant 16 : index
    %c0_215 = arith.constant 0 : index
    %350 = vector.load %arg3[%c1_213, %c16_214, %c0_215] : memref<2x36x128xf32, #tpu.memory_space<vmem>>, vector<1x1x128xf32>
    %351 = vector.shape_cast %350 : vector<1x1x128xf32> to vector<1x128xf32>
    %c128_216 = arith.constant 128 : index
    %c0_217 = arith.constant 0 : index
    %352 = vector.load %arg9[%c128_216, %c0_217] : memref<288x128xf32, #tpu.memory_space<vmem>>, vector<8x128xf32>
    %353 = vector.broadcast %351 : vector<1x128xf32> to vector<8x128xf32>
    %354 = arith.mulf %353, %352 : vector<8x128xf32>
    %355 = arith.addf %349, %354 : vector<8x128xf32>
    %c1_218 = arith.constant 1 : index
    %c17_219 = arith.constant 17 : index
    %c0_220 = arith.constant 0 : index
    %356 = vector.load %arg3[%c1_218, %c17_219, %c0_220] : memref<2x36x128xf32, #tpu.memory_space<vmem>>, vector<1x1x128xf32>
    %357 = vector.shape_cast %356 : vector<1x1x128xf32> to vector<1x128xf32>
    %c136_221 = arith.constant 136 : index
    %c0_222 = arith.constant 0 : index
    %358 = vector.load %arg9[%c136_221, %c0_222] : memref<288x128xf32, #tpu.memory_space<vmem>>, vector<8x128xf32>
    %359 = vector.broadcast %357 : vector<1x128xf32> to vector<8x128xf32>
    %360 = arith.mulf %359, %358 : vector<8x128xf32>
    %361 = arith.addf %355, %360 : vector<8x128xf32>
    %c1_223 = arith.constant 1 : index
    %c18_224 = arith.constant 18 : index
    %c0_225 = arith.constant 0 : index
    %362 = vector.load %arg3[%c1_223, %c18_224, %c0_225] : memref<2x36x128xf32, #tpu.memory_space<vmem>>, vector<1x1x128xf32>
    %363 = vector.shape_cast %362 : vector<1x1x128xf32> to vector<1x128xf32>
    %c144_226 = arith.constant 144 : index
    %c0_227 = arith.constant 0 : index
    %364 = vector.load %arg9[%c144_226, %c0_227] : memref<288x128xf32, #tpu.memory_space<vmem>>, vector<8x128xf32>
    %365 = vector.broadcast %363 : vector<1x128xf32> to vector<8x128xf32>
    %366 = arith.mulf %365, %364 : vector<8x128xf32>
    %367 = arith.addf %361, %366 : vector<8x128xf32>
    %c1_228 = arith.constant 1 : index
    %c19_229 = arith.constant 19 : index
    %c0_230 = arith.constant 0 : index
    %368 = vector.load %arg3[%c1_228, %c19_229, %c0_230] : memref<2x36x128xf32, #tpu.memory_space<vmem>>, vector<1x1x128xf32>
    %369 = vector.shape_cast %368 : vector<1x1x128xf32> to vector<1x128xf32>
    %c152_231 = arith.constant 152 : index
    %c0_232 = arith.constant 0 : index
    %370 = vector.load %arg9[%c152_231, %c0_232] : memref<288x128xf32, #tpu.memory_space<vmem>>, vector<8x128xf32>
    %371 = vector.broadcast %369 : vector<1x128xf32> to vector<8x128xf32>
    %372 = arith.mulf %371, %370 : vector<8x128xf32>
    %373 = arith.addf %367, %372 : vector<8x128xf32>
    %c1_233 = arith.constant 1 : index
    %c20_234 = arith.constant 20 : index
    %c0_235 = arith.constant 0 : index
    %374 = vector.load %arg3[%c1_233, %c20_234, %c0_235] : memref<2x36x128xf32, #tpu.memory_space<vmem>>, vector<1x1x128xf32>
    %375 = vector.shape_cast %374 : vector<1x1x128xf32> to vector<1x128xf32>
    %c160_236 = arith.constant 160 : index
    %c0_237 = arith.constant 0 : index
    %376 = vector.load %arg9[%c160_236, %c0_237] : memref<288x128xf32, #tpu.memory_space<vmem>>, vector<8x128xf32>
    %377 = vector.broadcast %375 : vector<1x128xf32> to vector<8x128xf32>
    %378 = arith.mulf %377, %376 : vector<8x128xf32>
    %379 = arith.addf %373, %378 : vector<8x128xf32>
    %c1_238 = arith.constant 1 : index
    %c21_239 = arith.constant 21 : index
    %c0_240 = arith.constant 0 : index
    %380 = vector.load %arg3[%c1_238, %c21_239, %c0_240] : memref<2x36x128xf32, #tpu.memory_space<vmem>>, vector<1x1x128xf32>
    %381 = vector.shape_cast %380 : vector<1x1x128xf32> to vector<1x128xf32>
    %c168_241 = arith.constant 168 : index
    %c0_242 = arith.constant 0 : index
    %382 = vector.load %arg9[%c168_241, %c0_242] : memref<288x128xf32, #tpu.memory_space<vmem>>, vector<8x128xf32>
    %383 = vector.broadcast %381 : vector<1x128xf32> to vector<8x128xf32>
    %384 = arith.mulf %383, %382 : vector<8x128xf32>
    %385 = arith.addf %379, %384 : vector<8x128xf32>
    %c1_243 = arith.constant 1 : index
    %c22_244 = arith.constant 22 : index
    %c0_245 = arith.constant 0 : index
    %386 = vector.load %arg3[%c1_243, %c22_244, %c0_245] : memref<2x36x128xf32, #tpu.memory_space<vmem>>, vector<1x1x128xf32>
    %387 = vector.shape_cast %386 : vector<1x1x128xf32> to vector<1x128xf32>
    %c176_246 = arith.constant 176 : index
    %c0_247 = arith.constant 0 : index
    %388 = vector.load %arg9[%c176_246, %c0_247] : memref<288x128xf32, #tpu.memory_space<vmem>>, vector<8x128xf32>
    %389 = vector.broadcast %387 : vector<1x128xf32> to vector<8x128xf32>
    %390 = arith.mulf %389, %388 : vector<8x128xf32>
    %391 = arith.addf %385, %390 : vector<8x128xf32>
    %c1_248 = arith.constant 1 : index
    %c23_249 = arith.constant 23 : index
    %c0_250 = arith.constant 0 : index
    %392 = vector.load %arg3[%c1_248, %c23_249, %c0_250] : memref<2x36x128xf32, #tpu.memory_space<vmem>>, vector<1x1x128xf32>
    %393 = vector.shape_cast %392 : vector<1x1x128xf32> to vector<1x128xf32>
    %c184_251 = arith.constant 184 : index
    %c0_252 = arith.constant 0 : index
    %394 = vector.load %arg9[%c184_251, %c0_252] : memref<288x128xf32, #tpu.memory_space<vmem>>, vector<8x128xf32>
    %395 = vector.broadcast %393 : vector<1x128xf32> to vector<8x128xf32>
    %396 = arith.mulf %395, %394 : vector<8x128xf32>
    %397 = arith.addf %391, %396 : vector<8x128xf32>
    %c1_253 = arith.constant 1 : index
    %c24_254 = arith.constant 24 : index
    %c0_255 = arith.constant 0 : index
    %398 = vector.load %arg3[%c1_253, %c24_254, %c0_255] : memref<2x36x128xf32, #tpu.memory_space<vmem>>, vector<1x1x128xf32>
    %399 = vector.shape_cast %398 : vector<1x1x128xf32> to vector<1x128xf32>
    %c192_256 = arith.constant 192 : index
    %c0_257 = arith.constant 0 : index
    %400 = vector.load %arg9[%c192_256, %c0_257] : memref<288x128xf32, #tpu.memory_space<vmem>>, vector<8x128xf32>
    %401 = vector.broadcast %399 : vector<1x128xf32> to vector<8x128xf32>
    %402 = arith.mulf %401, %400 : vector<8x128xf32>
    %403 = arith.addf %397, %402 : vector<8x128xf32>
    %c1_258 = arith.constant 1 : index
    %c25_259 = arith.constant 25 : index
    %c0_260 = arith.constant 0 : index
    %404 = vector.load %arg3[%c1_258, %c25_259, %c0_260] : memref<2x36x128xf32, #tpu.memory_space<vmem>>, vector<1x1x128xf32>
    %405 = vector.shape_cast %404 : vector<1x1x128xf32> to vector<1x128xf32>
    %c200_261 = arith.constant 200 : index
    %c0_262 = arith.constant 0 : index
    %406 = vector.load %arg9[%c200_261, %c0_262] : memref<288x128xf32, #tpu.memory_space<vmem>>, vector<8x128xf32>
    %407 = vector.broadcast %405 : vector<1x128xf32> to vector<8x128xf32>
    %408 = arith.mulf %407, %406 : vector<8x128xf32>
    %409 = arith.addf %403, %408 : vector<8x128xf32>
    %c1_263 = arith.constant 1 : index
    %c26_264 = arith.constant 26 : index
    %c0_265 = arith.constant 0 : index
    %410 = vector.load %arg3[%c1_263, %c26_264, %c0_265] : memref<2x36x128xf32, #tpu.memory_space<vmem>>, vector<1x1x128xf32>
    %411 = vector.shape_cast %410 : vector<1x1x128xf32> to vector<1x128xf32>
    %c208_266 = arith.constant 208 : index
    %c0_267 = arith.constant 0 : index
    %412 = vector.load %arg9[%c208_266, %c0_267] : memref<288x128xf32, #tpu.memory_space<vmem>>, vector<8x128xf32>
    %413 = vector.broadcast %411 : vector<1x128xf32> to vector<8x128xf32>
    %414 = arith.mulf %413, %412 : vector<8x128xf32>
    %415 = arith.addf %409, %414 : vector<8x128xf32>
    %c1_268 = arith.constant 1 : index
    %c27_269 = arith.constant 27 : index
    %c0_270 = arith.constant 0 : index
    %416 = vector.load %arg3[%c1_268, %c27_269, %c0_270] : memref<2x36x128xf32, #tpu.memory_space<vmem>>, vector<1x1x128xf32>
    %417 = vector.shape_cast %416 : vector<1x1x128xf32> to vector<1x128xf32>
    %c216_271 = arith.constant 216 : index
    %c0_272 = arith.constant 0 : index
    %418 = vector.load %arg9[%c216_271, %c0_272] : memref<288x128xf32, #tpu.memory_space<vmem>>, vector<8x128xf32>
    %419 = vector.broadcast %417 : vector<1x128xf32> to vector<8x128xf32>
    %420 = arith.mulf %419, %418 : vector<8x128xf32>
    %421 = arith.addf %415, %420 : vector<8x128xf32>
    %c1_273 = arith.constant 1 : index
    %c28_274 = arith.constant 28 : index
    %c0_275 = arith.constant 0 : index
    %422 = vector.load %arg3[%c1_273, %c28_274, %c0_275] : memref<2x36x128xf32, #tpu.memory_space<vmem>>, vector<1x1x128xf32>
    %423 = vector.shape_cast %422 : vector<1x1x128xf32> to vector<1x128xf32>
    %c224_276 = arith.constant 224 : index
    %c0_277 = arith.constant 0 : index
    %424 = vector.load %arg9[%c224_276, %c0_277] : memref<288x128xf32, #tpu.memory_space<vmem>>, vector<8x128xf32>
    %425 = vector.broadcast %423 : vector<1x128xf32> to vector<8x128xf32>
    %426 = arith.mulf %425, %424 : vector<8x128xf32>
    %427 = arith.addf %421, %426 : vector<8x128xf32>
    %c1_278 = arith.constant 1 : index
    %c29_279 = arith.constant 29 : index
    %c0_280 = arith.constant 0 : index
    %428 = vector.load %arg3[%c1_278, %c29_279, %c0_280] : memref<2x36x128xf32, #tpu.memory_space<vmem>>, vector<1x1x128xf32>
    %429 = vector.shape_cast %428 : vector<1x1x128xf32> to vector<1x128xf32>
    %c232_281 = arith.constant 232 : index
    %c0_282 = arith.constant 0 : index
    %430 = vector.load %arg9[%c232_281, %c0_282] : memref<288x128xf32, #tpu.memory_space<vmem>>, vector<8x128xf32>
    %431 = vector.broadcast %429 : vector<1x128xf32> to vector<8x128xf32>
    %432 = arith.mulf %431, %430 : vector<8x128xf32>
    %433 = arith.addf %427, %432 : vector<8x128xf32>
    %c1_283 = arith.constant 1 : index
    %c30_284 = arith.constant 30 : index
    %c0_285 = arith.constant 0 : index
    %434 = vector.load %arg3[%c1_283, %c30_284, %c0_285] : memref<2x36x128xf32, #tpu.memory_space<vmem>>, vector<1x1x128xf32>
    %435 = vector.shape_cast %434 : vector<1x1x128xf32> to vector<1x128xf32>
    %c240_286 = arith.constant 240 : index
    %c0_287 = arith.constant 0 : index
    %436 = vector.load %arg9[%c240_286, %c0_287] : memref<288x128xf32, #tpu.memory_space<vmem>>, vector<8x128xf32>
    %437 = vector.broadcast %435 : vector<1x128xf32> to vector<8x128xf32>
    %438 = arith.mulf %437, %436 : vector<8x128xf32>
    %439 = arith.addf %433, %438 : vector<8x128xf32>
    %c1_288 = arith.constant 1 : index
    %c31_289 = arith.constant 31 : index
    %c0_290 = arith.constant 0 : index
    %440 = vector.load %arg3[%c1_288, %c31_289, %c0_290] : memref<2x36x128xf32, #tpu.memory_space<vmem>>, vector<1x1x128xf32>
    %441 = vector.shape_cast %440 : vector<1x1x128xf32> to vector<1x128xf32>
    %c248_291 = arith.constant 248 : index
    %c0_292 = arith.constant 0 : index
    %442 = vector.load %arg9[%c248_291, %c0_292] : memref<288x128xf32, #tpu.memory_space<vmem>>, vector<8x128xf32>
    %443 = vector.broadcast %441 : vector<1x128xf32> to vector<8x128xf32>
    %444 = arith.mulf %443, %442 : vector<8x128xf32>
    %445 = arith.addf %439, %444 : vector<8x128xf32>
    %c1_293 = arith.constant 1 : index
    %c32_294 = arith.constant 32 : index
    %c0_295 = arith.constant 0 : index
    %446 = vector.load %arg3[%c1_293, %c32_294, %c0_295] : memref<2x36x128xf32, #tpu.memory_space<vmem>>, vector<1x1x128xf32>
    %447 = vector.shape_cast %446 : vector<1x1x128xf32> to vector<1x128xf32>
    %c256_296 = arith.constant 256 : index
    %c0_297 = arith.constant 0 : index
    %448 = vector.load %arg9[%c256_296, %c0_297] : memref<288x128xf32, #tpu.memory_space<vmem>>, vector<8x128xf32>
    %449 = vector.broadcast %447 : vector<1x128xf32> to vector<8x128xf32>
    %450 = arith.mulf %449, %448 : vector<8x128xf32>
    %451 = arith.addf %445, %450 : vector<8x128xf32>
    %c1_298 = arith.constant 1 : index
    %c33_299 = arith.constant 33 : index
    %c0_300 = arith.constant 0 : index
    %452 = vector.load %arg3[%c1_298, %c33_299, %c0_300] : memref<2x36x128xf32, #tpu.memory_space<vmem>>, vector<1x1x128xf32>
    %453 = vector.shape_cast %452 : vector<1x1x128xf32> to vector<1x128xf32>
    %c264_301 = arith.constant 264 : index
    %c0_302 = arith.constant 0 : index
    %454 = vector.load %arg9[%c264_301, %c0_302] : memref<288x128xf32, #tpu.memory_space<vmem>>, vector<8x128xf32>
    %455 = vector.broadcast %453 : vector<1x128xf32> to vector<8x128xf32>
    %456 = arith.mulf %455, %454 : vector<8x128xf32>
    %457 = arith.addf %451, %456 : vector<8x128xf32>
    %c1_303 = arith.constant 1 : index
    %c34_304 = arith.constant 34 : index
    %c0_305 = arith.constant 0 : index
    %458 = vector.load %arg3[%c1_303, %c34_304, %c0_305] : memref<2x36x128xf32, #tpu.memory_space<vmem>>, vector<1x1x128xf32>
    %459 = vector.shape_cast %458 : vector<1x1x128xf32> to vector<1x128xf32>
    %c272_306 = arith.constant 272 : index
    %c0_307 = arith.constant 0 : index
    %460 = vector.load %arg9[%c272_306, %c0_307] : memref<288x128xf32, #tpu.memory_space<vmem>>, vector<8x128xf32>
    %461 = vector.broadcast %459 : vector<1x128xf32> to vector<8x128xf32>
    %462 = arith.mulf %461, %460 : vector<8x128xf32>
    %463 = arith.addf %457, %462 : vector<8x128xf32>
    %c1_308 = arith.constant 1 : index
    %c35_309 = arith.constant 35 : index
    %c0_310 = arith.constant 0 : index
    %464 = vector.load %arg3[%c1_308, %c35_309, %c0_310] : memref<2x36x128xf32, #tpu.memory_space<vmem>>, vector<1x1x128xf32>
    %465 = vector.shape_cast %464 : vector<1x1x128xf32> to vector<1x128xf32>
    %c280_311 = arith.constant 280 : index
    %c0_312 = arith.constant 0 : index
    %466 = vector.load %arg9[%c280_311, %c0_312] : memref<288x128xf32, #tpu.memory_space<vmem>>, vector<8x128xf32>
    %467 = vector.broadcast %465 : vector<1x128xf32> to vector<8x128xf32>
    %468 = arith.mulf %467, %466 : vector<8x128xf32>
    %469 = arith.addf %463, %468 : vector<8x128xf32>
    %470 = vector.extract_strided_slice %469 {offsets = [0, 0], sizes = [4, 128], strides = [1, 1]} : vector<8x128xf32> to vector<4x128xf32>
    %c1_313 = arith.constant 1 : index
    %c0_314 = arith.constant 0 : index
    %c0_315 = arith.constant 0 : index
    %c0_316 = arith.constant 0 : index
    %471 = vector.load %arg8[%c1_313, %c0_314, %c0_315, %c0_316] : memref<2x1x4x128xf32, #tpu.memory_space<vmem>>, vector<1x1x4x128xf32>
    %472 = vector.shape_cast %471 : vector<1x1x4x128xf32> to vector<4x128xf32>
    %473 = vector.shape_cast %470 : vector<4x128xf32> to vector<1x1x4x128xf32>
    tpu.vector_store %arg8[%c1_313, %c0_314, %c0_315, %c0_316], %473 {strides = array<i32>} : memref<2x1x4x128xf32, #tpu.memory_space<vmem>>, vector<1x1x4x128xf32>,
    return
  }
  func.func @transform_0(%arg0: i32, %arg1: i32) -> (i32, i32, i32) {
    %c0_i32 = arith.constant 0 : i32
    %c0_i32_0 = arith.constant 0 : i32
    return %arg0, %c0_i32, %arg1 : i32, i32, i32
  }
  func.func @transform_1(%arg0: i32, %arg1: i32) -> (i32, i32, i32) {
    %c0_i32 = arith.constant 0 : i32
    %c0_i32_0 = arith.constant 0 : i32
    %c0_i32_1 = arith.constant 0 : i32
    return %c0_i32, %c0_i32_0, %arg1 : i32, i32, i32
  }
  func.func @transform_2(%arg0: i32, %arg1: i32) -> (i32, i32) {
    %c0_i32 = arith.constant 0 : i32
    %c0_i32_0 = arith.constant 0 : i32
    %c0_i32_1 = arith.constant 0 : i32
    return %c0_i32, %c0_i32_0 : i32, i32
  }
  func.func @transform_3(%arg0: i32, %arg1: i32) -> (i32, i32) {
    %c0_i32 = arith.constant 0 : i32
    %c0_i32_0 = arith.constant 0 : i32
    %c0_i32_1 = arith.constant 0 : i32
    return %c0_i32, %c0_i32_0 : i32, i32
  }
  func.func @transform_4(%arg0: i32, %arg1: i32) -> (i32, i32) {
    %c0_i32 = arith.constant 0 : i32
    %c0_i32_0 = arith.constant 0 : i32
    %c0_i32_1 = arith.constant 0 : i32
    return %c0_i32, %c0_i32_0 : i32, i32
  }
  func.func @transform_5(%arg0: i32, %arg1: i32) -> (i32, i32) {
    %c0_i32 = arith.constant 0 : i32
    %c0_i32_0 = arith.constant 0 : i32
    %c0_i32_1 = arith.constant 0 : i32
    return %c0_i32, %c0_i32_0 : i32, i32
  }
  func.func @transform_6(%arg0: i32, %arg1: i32) -> (i32, i32, i32, i32) {
    %c0_i32 = arith.constant 0 : i32
    %c0_i32_0 = arith.constant 0 : i32
    %c0_i32_1 = arith.constant 0 : i32
    return %c0_i32, %arg0, %c0_i32_0, %arg1 : i32, i32, i32, i32
  }
}

</mosaic_0001>

<llo_original>
// kernel: tpu_custom_call.1
$region0: #{tpu_custom_call.1}
  #allocation0 [shape = 'u32[]', space=smem, size = 0x4, offset = 0x4, fixed_abs, tag = 'smem constant byte address 0x4 - core index']
  #allocation1 [shape = 'u32[144,128]{1,0:T(1,128)}', space=vmem, size = 0x12000, scoped, tag = 'internal scratch']
  #allocation2 [shape = 'f32[288,128]{1,0:T(8,128)}', space=vmem, size = 0x24000, scoped, tag = 'scratch operand']
  %s0 = inlined_call_operand.vmem [shape: f32[4,3,128], index: 0, kind: input, shape index: {}]
  %s1 = inlined_call_operand.vmem [shape: f32[2,36,128], index: 1, kind: input, shape index: {}]
  %s2 = inlined_call_operand.vmem [shape: f32[256,3], index: 2, kind: input, shape index: {}]
  %s3 = inlined_call_operand.vmem [shape: f32[256,1], index: 3, kind: input, shape index: {}]
  %s4 = inlined_call_operand.vmem [shape: f32[288,256], index: 4, kind: input, shape index: {}]
  %s5 = inlined_call_operand.vmem [shape: f32[288,1], index: 5, kind: input, shape index: {}]
  %s6 = inlined_call_operand.hbm [shape: f32[2,4,4,128], index: 6, kind: output, shape index: {}]
  %s7 = sld [smem:[#allocation0]]
  $region57: #{tpu_custom_call.1} parent=0
    _
  %s9 = ssub.s32 1, %s7
  %s10 = scalar_select 0, %s9, %s7
  $region1: #{tpu_custom_call.1} parent=0
    #allocation3 [shape = 'u8[8192]{0}', space=vmem, size = 0x2000, scoped, tag = 'output window, operand 0']
    #allocation4 [shape = 's32[2]{0}', space=sflag, size = 0x8, scoped, tag = 'scoped memory for tpu_custom_call.1']
    %11 = vsyncpa [#allocation4], 0
    %s12 = scalar_lea.sflag [#allocation4], 1
    %13 = vsyncpa %s12, 0
    loop: start=0, step=1, limit=6
    $region2: #{tpu_custom_call.1} parent=1 // loop_pre_header
      _
    $region3: #{tpu_custom_call.1} parent=1 // loop_header
      %s15 = sphi 0, %s19
      %p16 = scmp.ge.s32.totalorder %s15, 6
      %s22 = sphi 0, %s34
      %s23 = sphi 0, %s30
      %s24 = sphi 0, %s22
      %s25 = sphi 0, %s23
      %s26 = sphi 0, %s24
      %s27 = sphi 0, %s25
      %s39 = sphi 0, %s41
      %s42 = sphi 0, %s39
      %s43 = sphi 0, %s42
      %s59 = sphi 0, %s43
      %s65 = sphi 0, %s67
      %s68 = sphi 0, %s65
      %s69 = sphi 0, %s68
      %s85 = sphi 0, %s69
      %s89 = sphi 0, %s89
      %s91 = sphi 0, %s89
      %s92 = sphi 0, %s91
      %s106 = sphi 0, %s92
      %s110 = sphi 0, %s110
      %s112 = sphi 0, %s110
      %s113 = sphi 0, %s112
      %s127 = sphi 0, %s113
      %s131 = sphi 0, %s131
      %s133 = sphi 0, %s131
      %s134 = sphi 0, %s133
      %s148 = sphi 0, %s134
      %s152 = sphi 0, %s152
      %s154 = sphi 0, %s152
      %s155 = sphi 0, %s154
      %s169 = sphi 0, %s155
      %s177 = sphi 0, %s179
      %s180 = sphi 0, %s177
      %s181 = sphi 0, %s180
      %s197 = sphi 0, %s181
    $region4: #{tpu_custom_call.1} parent=1 // loop_header_branch
      %18 = sbr.rel (%p16) target = $region8
    $region5: #{tpu_custom_call.1} parent=1 // loop_body
      %s20 = ssub.s32 %s15, 1
      %s21 = ssub.s32 %s15, 2
      %s28 = sadd.s32 1, %s23
      %p29 = scmp.ge.s32.totalorder %s28, 1
      %s30 = scalar_select %p29, 0, %s28
      %s31 = sadd.s32 1, %s22
      %s32 = scalar_select %p29, %s31, %s22
      %p33 = scmp.ge.s32.totalorder %s32, 4
      %s34 = scalar_select %p33, 0, %s32
      %s35 = ssub.s32 %s22, %s34
      %s36 = ssub.s32 %s23, %s30
      %s37 = sor.u32 %s35, %s36
      %p38 = scmp.eq.s32.totalorder %s37, 0
      %s40 = sadd.s32 %s39, 1
      %s41 = scalar_select %p38, %s39, %s40
      %p44 = pneg %p38
      %p45 = scmp.eq.s32.totalorder %s15, 3
      %p46 = por %p44, %p45
      %p47 = scmp.ne.s32.totalorder %s39, %s42
      %p48 = scmp.eq.s32.totalorder %s15, 0
      %p49 = por %p47, %p48
      %p50 = scmp.ne.s32.totalorder %s39, %s42
      %p51 = scmp.eq.s32.totalorder %s20, 3
      %p52 = por %p50, %p51
      %p53 = scmp.ne.s32.totalorder %s42, %s43
      %p54 = scmp.eq.s32.totalorder %s20, 0
      %p55 = por %p53, %p54
      %p56 = scmp.ne.s32.totalorder %s42, %s43
      %p57 = scmp.eq.s32.totalorder %s21, 3
      %p58 = por %p56, %p57
      %p60 = scmp.ne.s32.totalorder %s43, %s59
      %p61 = scmp.eq.s32.totalorder %s21, 0
      %p62 = por %p60, %p61
      %s63 = ssub.s32 %s23, %s30
      %p64 = scmp.eq.s32.totalorder %s63, 0
      %s66 = sadd.s32 %s65, 1
      %s67 = scalar_select %p64, %s65, %s66
      %p70 = pneg %p64
      %p71 = scmp.eq.s32.totalorder %s15, 3
      %p72 = por %p70, %p71
      %p73 = scmp.ne.s32.totalorder %s65, %s68
      %p74 = scmp.eq.s32.totalorder %s15, 0
      %p75 = por %p73, %p74
      %p76 = scmp.ne.s32.totalorder %s65, %s68
      %p77 = scmp.eq.s32.totalorder %s20, 3
      %p78 = por %p76, %p77
      %p79 = scmp.ne.s32.totalorder %s68, %s69
      %p80 = scmp.eq.s32.totalorder %s20, 0
      %p81 = por %p79, %p80
      %p82 = scmp.ne.s32.totalorder %s68, %s69
      %p83 = scmp.eq.s32.totalorder %s21, 3
      %p84 = por %p82, %p83
      %p86 = scmp.ne.s32.totalorder %s69, %s85
      %p87 = scmp.eq.s32.totalorder %s21, 0
      %p88 = por %p86, %p87
      %s90 = sadd.s32 %s89, 1
      %p93 = scmp.eq.s32.totalorder %s15, 3
      %p94 = scmp.ne.s32.totalorder %s89, %s91
      %p95 = scmp.eq.s32.totalorder %s15, 0
      %p96 = por %p94, %p95
      %p97 = scmp.ne.s32.totalorder %s89, %s91
      %p98 = scmp.eq.s32.totalorder %s20, 3
      %p99 = por %p97, %p98
      %p100 = scmp.ne.s32.totalorder %s91, %s92
      %p101 = scmp.eq.s32.totalorder %s20, 0
      %p102 = por %p100, %p101
      %p103 = scmp.ne.s32.totalorder %s91, %s92
      %p104 = scmp.eq.s32.totalorder %s21, 3
      %p105 = por %p103, %p104
      %p107 = scmp.ne.s32.totalorder %s92, %s106
      %p108 = scmp.eq.s32.totalorder %s21, 0
      %p109 = por %p107, %p108
      %s111 = sadd.s32 %s110, 1
      %p114 = scmp.eq.s32.totalorder %s15, 3
      %p115 = scmp.ne.s32.totalorder %s110, %s112
      %p116 = scmp.eq.s32.totalorder %s15, 0
      %p117 = por %p115, %p116
      %p118 = scmp.ne.s32.totalorder %s110, %s112
      %p119 = scmp.eq.s32.totalorder %s20, 3
      %p120 = por %p118, %p119
      %p121 = scmp.ne.s32.totalorder %s112, %s113
      %p122 = scmp.eq.s32.totalorder %s20, 0
      %p123 = por %p121, %p122
      %p124 = scmp.ne.s32.totalorder %s112, %s113
      %p125 = scmp.eq.s32.totalorder %s21, 3
      %p126 = por %p124, %p125
      %p128 = scmp.ne.s32.totalorder %s113, %s127
      %p129 = scmp.eq.s32.totalorder %s21, 0
      %p130 = por %p128, %p129
      %s132 = sadd.s32 %s131, 1
      %p135 = scmp.eq.s32.totalorder %s15, 3
      %p136 = scmp.ne.s32.totalorder %s131, %s133
      %p137 = scmp.eq.s32.totalorder %s15, 0
      %p138 = por %p136, %p137
      %p139 = scmp.ne.s32.totalorder %s131, %s133
      %p140 = scmp.eq.s32.totalorder %s20, 3
      %p141 = por %p139, %p140
      %p142 = scmp.ne.s32.totalorder %s133, %s134
      %p143 = scmp.eq.s32.totalorder %s20, 0
      %p144 = por %p142, %p143
      %p145 = scmp.ne.s32.totalorder %s133, %s134
      %p146 = scmp.eq.s32.totalorder %s21, 3
      %p147 = por %p145, %p146
      %p149 = scmp.ne.s32.totalorder %s134, %s148
      %p150 = scmp.eq.s32.totalorder %s21, 0
      %p151 = por %p149, %p150
      %s153 = sadd.s32 %s152, 1
      %p156 = scmp.eq.s32.totalorder %s15, 3
      %p157 = scmp.ne.s32.totalorder %s152, %s154
      %p158 = scmp.eq.s32.totalorder %s15, 0
      %p159 = por %p157, %p158
      %p160 = scmp.ne.s32.totalorder %s152, %s154
      %p161 = scmp.eq.s32.totalorder %s20, 3
      %p162 = por %p160, %p161
      %p163 = scmp.ne.s32.totalorder %s154, %s155
      %p164 = scmp.eq.s32.totalorder %s20, 0
      %p165 = por %p163, %p164
      %p166 = scmp.ne.s32.totalorder %s154, %s155
      %p167 = scmp.eq.s32.totalorder %s21, 3
      %p168 = por %p166, %p167
      %p170 = scmp.ne.s32.totalorder %s155, %s169
      %p171 = scmp.eq.s32.totalorder %s21, 0
      %p172 = por %p170, %p171
      %s173 = ssub.s32 %s22, %s34
      %s174 = ssub.s32 %s23, %s30
      %s175 = sor.u32 %s173, %s174
      %p176 = scmp.eq.s32.totalorder %s175, 0
      %s178 = sadd.s32 %s177, 1
      %s179 = scalar_select %p176, %s177, %s178
      %p182 = pneg %p176
      %p183 = scmp.eq.s32.totalorder %s15, 3
      %p184 = por %p182, %p183
      %p185 = scmp.ne.s32.totalorder %s177, %s180
      %p186 = scmp.eq.s32.totalorder %s15, 0
      %p187 = por %p185, %p186
      %p188 = scmp.ne.s32.totalorder %s177, %s180
      %p189 = scmp.eq.s32.totalorder %s20, 3
      %p190 = por %p188, %p189
      %p191 = scmp.ne.s32.totalorder %s180, %s181
      %p192 = scmp.eq.s32.totalorder %s20, 0
      %p193 = por %p191, %p192
      %p194 = scmp.ne.s32.totalorder %s180, %s181
      %p195 = scmp.eq.s32.totalorder %s21, 3
      %p196 = por %p194, %p195
      %p198 = scmp.ne.s32.totalorder %s181, %s197
      %p199 = scmp.eq.s32.totalorder %s21, 0
      %p200 = por %p198, %p199
      %p201 = scmp.le.s32.totalorder 1, %s15
      %p202 = scmp.lt.s32.totalorder %s15, 5
      %p203 = pnand %p201, %p202
      %p204 = pneg %p203
      // Predicated region
      $region9: #{tpu_custom_call.1} parent=5 // pred_check
        _
      $region10: #{tpu_custom_call.1} parent=5 // pred_check_branch
        %206 = sbr.rel (%p203) target = $region12
      $region11: #{tpu_custom_call.1} parent=5 // pred_region
        %s207 = ssub.s32 %s15, 1
        // Predicated region
        $region13: #{tpu_custom_call.1} parent=11 // pred_check
          %p208 = pneg %p81
        $region14: #{tpu_custom_call.1} parent=11 // pred_check_branch
          %210 = sbr.rel (%p208) target = $region16
        $region15: #{tpu_custom_call.1} parent=11 // pred_region
          %p211 = scmp.lt.s32.totalorder %s25, 0
          %s212 = scalar_select %p211, %s25, 0
          %s213 = smul.addr %s212, 8
          %s214 = scalar_lea.vmem %s1, %s213
        $region16: #{tpu_custom_call.1} parent=11 // pred_fallthru
          _
        // Predicated region
        $region17: #{tpu_custom_call.1} parent=11 // pred_check
          %p215 = pneg %p102
        $region18: #{tpu_custom_call.1} parent=11 // pred_check_branch
          %217 = sbr.rel (%p215) target = $region20
        $region19: #{tpu_custom_call.1} parent=11 // pred_region
          _
        $region20: #{tpu_custom_call.1} parent=11 // pred_fallthru
          _
        // Predicated region
        $region21: #{tpu_custom_call.1} parent=11 // pred_check
          %p218 = pneg %p123
        $region22: #{tpu_custom_call.1} parent=11 // pred_check_branch
          %220 = sbr.rel (%p218) target = $region24
        $region23: #{tpu_custom_call.1} parent=11 // pred_region
          _
        $region24: #{tpu_custom_call.1} parent=11 // pred_fallthru
          _
        // Predicated region
        $region25: #{tpu_custom_call.1} parent=11 // pred_check
          %p221 = pneg %p144
        $region26: #{tpu_custom_call.1} parent=11 // pred_check_branch
          %223 = sbr.rel (%p221) target = $region28
        $region27: #{tpu_custom_call.1} parent=11 // pred_region
          _
        $region28: #{tpu_custom_call.1} parent=11 // pred_fallthru
          _
        // Predicated region
        $region29: #{tpu_custom_call.1} parent=11 // pred_check
          %p224 = pneg %p165
        $region30: #{tpu_custom_call.1} parent=11 // pred_check_branch
          %226 = sbr.rel (%p224) target = $region32
        $region31: #{tpu_custom_call.1} parent=11 // pred_region
          _
        $region32: #{tpu_custom_call.1} parent=11 // pred_fallthru
          _
      $region12: #{tpu_custom_call.1} parent=5 // pred_fallthru
        _
      %p227 = scmp.lt.s32.totalorder %s15, 4
      // Predicated region
      $region33: #{tpu_custom_call.1} parent=5 // pred_check
        %p228 = pneg %p227
      $region34: #{tpu_custom_call.1} parent=5 // pred_check_branch
        %230 = sbr.rel (%p228) target = $region36
      $region35: #{tpu_custom_call.1} parent=5 // pred_region
        // Predicated region
        $region37: #{tpu_custom_call.1} parent=35 // pred_check
          %p231 = pneg %p49
        $region38: #{tpu_custom_call.1} parent=35 // pred_check_branch
          %233 = sbr.rel (%p231) target = $region40
        $region39: #{tpu_custom_call.1} parent=35 // pred_region
          %p234 = scmp.lt.s32.totalorder %s22, 3
          %s235 = scalar_select %p234, %s22, 3
          %p236 = scmp.lt.s32.totalorder %s23, 0
          %s237 = scalar_select %p236, %s23, 0
          %s238 = sadd.s32 %s237, %s235
          %s239 = smul.addr %s238, 4
          %s240 = scalar_lea.vmem %s0, %s239
        $region40: #{tpu_custom_call.1} parent=35 // pred_fallthru
          _
      $region36: #{tpu_custom_call.1} parent=5 // pred_fallthru
        _
      %p241 = scmp.le.s32.totalorder 1, %s15
      %p242 = scmp.lt.s32.totalorder %s15, 5
      %p243 = pnand %p241, %p242
      %p244 = pneg %p243
      // Predicated region
      $region41: #{tpu_custom_call.1} parent=5 // pred_check
        _
      $region42: #{tpu_custom_call.1} parent=5 // pred_check_branch
        %246 = sbr.rel (%p243) target = $region44
      $region43: #{tpu_custom_call.1} parent=5 // pred_region
        %s247 = ssub.s32 %s15, 1
        %p248 = scmp.lt.s32.totalorder %s24, 3
        %s249 = scalar_select %p248, %s24, 3
        %p250 = scmp.lt.s32.totalorder %s25, 0
        %s251 = scalar_select %p250, %s25, 0
        %s252 = sadd.s32 %s251, %s249
        %s253 = smul.addr %s252, 4
        %s254 = scalar_lea.vmem %s0, %s253
        %p255 = pneg %p55
        %p256 = pneg %p52
        %p257 = scmp.lt.s32.totalorder %s25, 0
        %s258 = scalar_select %p257, %s25, 0
        %s259 = smul.addr %s258, 8
        %s260 = scalar_lea.vmem %s1, %s259
        %p261 = pneg %p81
        %p262 = pneg %p78
        %p263 = pneg %p102
        %p264 = pneg %p99
        %p265 = pneg %p123
        %p266 = pneg %p120
        %p267 = pneg %p144
        %p268 = pneg %p141
        %p269 = pneg %p165
        %p270 = pneg %p162
        %p271 = pneg %p193
        %p272 = pneg %p190
        %s273 = sand.u32 %s180, 1
        %s274 = scalar_lea.sflag [#allocation4], %s273
        %s275 = sand.u32 %s180, 1
        %s276 = smul.addr %s275, 8
        %s277 = scalar_lea.vmem [#allocation3], %s276
        %p278 = scmp.lt.s32.totalorder %s24, 3
        %s279 = scalar_select %p278, %s24, 3
        %p280 = scmp.lt.s32.totalorder %s25, 0
        %s281 = scalar_select %p280, %s25, 0
        %s282 = sadd.s32 %s281, %s279
        %s283 = smul.addr %s282, 4
        %s284 = scalar_lea.vmem %s0, %s283
        %p285 = scmp.lt.s32.totalorder %s25, 0
        %s286 = scalar_select %p285, %s25, 0
        %s287 = smul.addr %s286, 8
        %s288 = scalar_lea.vmem %s1, %s287
        %v289 = vld [vmem:[%s284] sm:$0x7]
        %v290 = vld [vmem:[%s2] sm:$0xff]
        %v291 = vld [vmem:[%s2 + $0x8] sm:$0xff]
        %v292 = vld [vmem:[%s2 + $0x10] sm:$0xff]
        %v293 = vld [vmem:[%s2 + $0x18] sm:$0xff]
        %v294 = vld [vmem:[%s2 + $0x20] sm:$0xff]
        %v295 = vld [vmem:[%s2 + $0x28] sm:$0xff]
        %v296 = vld [vmem:[%s2 + $0x30] sm:$0xff]
        %v297 = vld [vmem:[%s2 + $0x38] sm:$0xff]
        %v298 = vld [vmem:[%s2 + $0x40] sm:$0xff]
        %v299 = vld [vmem:[%s2 + $0x48] sm:$0xff]
        %v300 = vld [vmem:[%s2 + $0x50] sm:$0xff]
        %v301 = vld [vmem:[%s2 + $0x58] sm:$0xff]
        %v302 = vld [vmem:[%s2 + $0x60] sm:$0xff]
        %v303 = vld [vmem:[%s2 + $0x68] sm:$0xff]
        %v304 = vld [vmem:[%s2 + $0x70] sm:$0xff]
        %v305 = vld [vmem:[%s2 + $0x78] sm:$0xff]
        %v306 = vld [vmem:[%s2 + $0x80] sm:$0xff]
        %v307 = vld [vmem:[%s2 + $0x88] sm:$0xff]
        %v308 = vld [vmem:[%s2 + $0x90] sm:$0xff]
        %v309 = vld [vmem:[%s2 + $0x98] sm:$0xff]
        %v310 = vld [vmem:[%s2 + $0xa0] sm:$0xff]
        %v311 = vld [vmem:[%s2 + $0xa8] sm:$0xff]
        %v312 = vld [vmem:[%s2 + $0xb0] sm:$0xff]
        %v313 = vld [vmem:[%s2 + $0xb8] sm:$0xff]
        %v314 = vld [vmem:[%s2 + $0xc0] sm:$0xff]
        %v315 = vld [vmem:[%s2 + $0xc8] sm:$0xff]
        %v316 = vld [vmem:[%s2 + $0xd0] sm:$0xff]
        %v317 = vld [vmem:[%s2 + $0xd8] sm:$0xff]
        %v318 = vld [vmem:[%s2 + $0xe0] sm:$0xff]
        %v319 = vld [vmem:[%s2 + $0xe8] sm:$0xff]
        %v320 = vld [vmem:[%s2 + $0xf0] sm:$0xff]
        %v321 = vld [vmem:[%s2 + $0xf8] sm:$0xff]
        %323 = vset.pattern.permute.xlu0 0
        %324 = vperm.xlu0 %323, %v290
        %v325 = vpop.permute.xlu0 %324
        %328 = vset.pattern.permute.xlu0 0
        %329 = vperm.xlu0 %328, %v291
        %v330 = vpop.permute.xlu0 %329
        %333 = vset.pattern.permute.xlu0 0
        %334 = vperm.xlu0 %333, %v292
        %v335 = vpop.permute.xlu0 %334
        %338 = vset.pattern.permute.xlu0 0
        %339 = vperm.xlu0 %338, %v293
        %v340 = vpop.permute.xlu0 %339
        %343 = vset.pattern.permute.xlu0 0
        %344 = vperm.xlu0 %343, %v294
        %v345 = vpop.permute.xlu0 %344
        %348 = vset.pattern.permute.xlu0 0
        %349 = vperm.xlu0 %348, %v295
        %v350 = vpop.permute.xlu0 %349
        %353 = vset.pattern.permute.xlu0 0
        %354 = vperm.xlu0 %353, %v296
        %v355 = vpop.permute.xlu0 %354
        %358 = vset.pattern.permute.xlu0 0
        %359 = vperm.xlu0 %358, %v297
        %v360 = vpop.permute.xlu0 %359
        %363 = vset.pattern.permute.xlu0 0
        %364 = vperm.xlu0 %363, %v298
        %v365 = vpop.permute.xlu0 %364
        %368 = vset.pattern.permute.xlu0 0
        %369 = vperm.xlu0 %368, %v299
        %v370 = vpop.permute.xlu0 %369
        %373 = vset.pattern.permute.xlu0 0
        %374 = vperm.xlu0 %373, %v300
        %v375 = vpop.permute.xlu0 %374
        %378 = vset.pattern.permute.xlu0 0
        %379 = vperm.xlu0 %378, %v301
        %v380 = vpop.permute.xlu0 %379
        %383 = vset.pattern.permute.xlu0 0
        %384 = vperm.xlu0 %383, %v302
        %v385 = vpop.permute.xlu0 %384
        %388 = vset.pattern.permute.xlu0 0
        %389 = vperm.xlu0 %388, %v303
        %v390 = vpop.permute.xlu0 %389
        %393 = vset.pattern.permute.xlu0 0
        %394 = vperm.xlu0 %393, %v304
        %v395 = vpop.permute.xlu0 %394
        %398 = vset.pattern.permute.xlu0 0
        %399 = vperm.xlu0 %398, %v305
        %v400 = vpop.permute.xlu0 %399
        %403 = vset.pattern.permute.xlu0 0
        %404 = vperm.xlu0 %403, %v306
        %v405 = vpop.permute.xlu0 %404
        %408 = vset.pattern.permute.xlu0 0
        %409 = vperm.xlu0 %408, %v307
        %v410 = vpop.permute.xlu0 %409
        %413 = vset.pattern.permute.xlu0 0
        %414 = vperm.xlu0 %413, %v308
        %v415 = vpop.permute.xlu0 %414
        %418 = vset.pattern.permute.xlu0 0
        %419 = vperm.xlu0 %418, %v309
        %v420 = vpop.permute.xlu0 %419
        %423 = vset.pattern.permute.xlu0 0
        %424 = vperm.xlu0 %423, %v310
        %v425 = vpop.permute.xlu0 %424
        %428 = vset.pattern.permute.xlu0 0
        %429 = vperm.xlu0 %428, %v311
        %v430 = vpop.permute.xlu0 %429
        %433 = vset.pattern.permute.xlu0 0
        %434 = vperm.xlu0 %433, %v312
        %v435 = vpop.permute.xlu0 %434
        %438 = vset.pattern.permute.xlu0 0
        %439 = vperm.xlu0 %438, %v313
        %v440 = vpop.permute.xlu0 %439
        %443 = vset.pattern.permute.xlu0 0
        %444 = vperm.xlu0 %443, %v314
        %v445 = vpop.permute.xlu0 %444
        %448 = vset.pattern.permute.xlu0 0
        %449 = vperm.xlu0 %448, %v315
        %v450 = vpop.permute.xlu0 %449
        %453 = vset.pattern.permute.xlu0 0
        %454 = vperm.xlu0 %453, %v316
        %v455 = vpop.permute.xlu0 %454
        %458 = vset.pattern.permute.xlu0 0
        %459 = vperm.xlu0 %458, %v317
        %v460 = vpop.permute.xlu0 %459
        %463 = vset.pattern.permute.xlu0 0
        %464 = vperm.xlu0 %463, %v318
        %v465 = vpop.permute.xlu0 %464
        %468 = vset.pattern.permute.xlu0 0
        %469 = vperm.xlu0 %468, %v319
        %v470 = vpop.permute.xlu0 %469
        %473 = vset.pattern.permute.xlu0 0
        %474 = vperm.xlu0 %473, %v320
        %v475 = vpop.permute.xlu0 %474
        %478 = vset.pattern.permute.xlu0 0
        %479 = vperm.xlu0 %478, %v321
        %v480 = vpop.permute.xlu0 %479
        %v482 = vlaneseq
        %v483 = vshrl.u32 %v482, 7
        %v484 = vsub.s32 0, %v483
        %v485 = vrot.slane %v289, %v484
        %v486 = vmul.f32 %v325, %v485
        %v487 = vmul.f32 %v330, %v485
        %v488 = vmul.f32 %v335, %v485
        %v489 = vmul.f32 %v340, %v485
        %v490 = vmul.f32 %v345, %v485
        %v491 = vmul.f32 %v350, %v485
        %v492 = vmul.f32 %v355, %v485
        %v493 = vmul.f32 %v360, %v485
        %v494 = vmul.f32 %v365, %v485
        %v495 = vmul.f32 %v370, %v485
        %v496 = vmul.f32 %v375, %v485
        %v497 = vmul.f32 %v380, %v485
        %v498 = vmul.f32 %v385, %v485
        %v499 = vmul.f32 %v390, %v485
        %v500 = vmul.f32 %v395, %v485
        %v501 = vmul.f32 %v400, %v485
        %v502 = vmul.f32 %v405, %v485
        %v503 = vmul.f32 %v410, %v485
        %v504 = vmul.f32 %v415, %v485
        %v505 = vmul.f32 %v420, %v485
        %v506 = vmul.f32 %v425, %v485
        %v507 = vmul.f32 %v430, %v485
        %v508 = vmul.f32 %v435, %v485
        %v509 = vmul.f32 %v440, %v485
        %v510 = vmul.f32 %v445, %v485
        %v511 = vmul.f32 %v450, %v485
        %v512 = vmul.f32 %v455, %v485
        %v513 = vmul.f32 %v460, %v485
        %v514 = vmul.f32 %v465, %v485
        %v515 = vmul.f32 %v470, %v485
        %v516 = vmul.f32 %v475, %v485
        %v517 = vmul.f32 %v480, %v485
        %518 = vset.pattern.permute.xlu0 1
        %519 = vperm.xlu0 %518, %v290
        %v520 = vpop.permute.xlu0 %519
        %522 = vset.pattern.permute.xlu0 1
        %523 = vperm.xlu0 %522, %v291
        %v524 = vpop.permute.xlu0 %523
        %526 = vset.pattern.permute.xlu0 1
        %527 = vperm.xlu0 %526, %v292
        %v528 = vpop.permute.xlu0 %527
        %530 = vset.pattern.permute.xlu0 1
        %531 = vperm.xlu0 %530, %v293
        %v532 = vpop.permute.xlu0 %531
        %534 = vset.pattern.permute.xlu0 1
        %535 = vperm.xlu0 %534, %v294
        %v536 = vpop.permute.xlu0 %535
        %538 = vset.pattern.permute.xlu0 1
        %539 = vperm.xlu0 %538, %v295
        %v540 = vpop.permute.xlu0 %539
        %542 = vset.pattern.permute.xlu0 1
        %543 = vperm.xlu0 %542, %v296
        %v544 = vpop.permute.xlu0 %543
        %546 = vset.pattern.permute.xlu0 1
        %547 = vperm.xlu0 %546, %v297
        %v548 = vpop.permute.xlu0 %547
        %550 = vset.pattern.permute.xlu0 1
        %551 = vperm.xlu0 %550, %v298
        %v552 = vpop.permute.xlu0 %551
        %554 = vset.pattern.permute.xlu0 1
        %555 = vperm.xlu0 %554, %v299
        %v556 = vpop.permute.xlu0 %555
        %558 = vset.pattern.permute.xlu0 1
        %559 = vperm.xlu0 %558, %v300
        %v560 = vpop.permute.xlu0 %559
        %562 = vset.pattern.permute.xlu0 1
        %563 = vperm.xlu0 %562, %v301
        %v564 = vpop.permute.xlu0 %563
        %566 = vset.pattern.permute.xlu0 1
        %567 = vperm.xlu0 %566, %v302
        %v568 = vpop.permute.xlu0 %567
        %570 = vset.pattern.permute.xlu0 1
        %571 = vperm.xlu0 %570, %v303
        %v572 = vpop.permute.xlu0 %571
        %574 = vset.pattern.permute.xlu0 1
        %575 = vperm.xlu0 %574, %v304
        %v576 = vpop.permute.xlu0 %575
        %578 = vset.pattern.permute.xlu0 1
        %579 = vperm.xlu0 %578, %v305
        %v580 = vpop.permute.xlu0 %579
        %582 = vset.pattern.permute.xlu0 1
        %583 = vperm.xlu0 %582, %v306
        %v584 = vpop.permute.xlu0 %583
        %586 = vset.pattern.permute.xlu0 1
        %587 = vperm.xlu0 %586, %v307
        %v588 = vpop.permute.xlu0 %587
        %590 = vset.pattern.permute.xlu0 1
        %591 = vperm.xlu0 %590, %v308
        %v592 = vpop.permute.xlu0 %591
        %594 = vset.pattern.permute.xlu0 1
        %595 = vperm.xlu0 %594, %v309
        %v596 = vpop.permute.xlu0 %595
        %598 = vset.pattern.permute.xlu0 1
        %599 = vperm.xlu0 %598, %v310
        %v600 = vpop.permute.xlu0 %599
        %602 = vset.pattern.permute.xlu0 1
        %603 = vperm.xlu0 %602, %v311
        %v604 = vpop.permute.xlu0 %603
        %606 = vset.pattern.permute.xlu0 1
        %607 = vperm.xlu0 %606, %v312
        %v608 = vpop.permute.xlu0 %607
        %610 = vset.pattern.permute.xlu0 1
        %611 = vperm.xlu0 %610, %v313
        %v612 = vpop.permute.xlu0 %611
        %614 = vset.pattern.permute.xlu0 1
        %615 = vperm.xlu0 %614, %v314
        %v616 = vpop.permute.xlu0 %615
        %618 = vset.pattern.permute.xlu0 1
        %619 = vperm.xlu0 %618, %v315
        %v620 = vpop.permute.xlu0 %619
        %622 = vset.pattern.permute.xlu0 1
        %623 = vperm.xlu0 %622, %v316
        %v624 = vpop.permute.xlu0 %623
        %626 = vset.pattern.permute.xlu0 1
        %627 = vperm.xlu0 %626, %v317
        %v628 = vpop.permute.xlu0 %627
        %630 = vset.pattern.permute.xlu0 1
        %631 = vperm.xlu0 %630, %v318
        %v632 = vpop.permute.xlu0 %631
        %634 = vset.pattern.permute.xlu0 1
        %635 = vperm.xlu0 %634, %v319
        %v636 = vpop.permute.xlu0 %635
        %638 = vset.pattern.permute.xlu0 1
        %639 = vperm.xlu0 %638, %v320
        %v640 = vpop.permute.xlu0 %639
        %642 = vset.pattern.permute.xlu0 1
        %643 = vperm.xlu0 %642, %v321
        %v644 = vpop.permute.xlu0 %643
        %v646 = vlaneseq
        %v647 = vshrl.u32 %v646, 7
        %v648 = vsub.s32 1, %v647
        %v649 = vrot.slane %v289, %v648
        %v650 = vmul.f32 %v520, %v649
        %v651 = vmul.f32 %v524, %v649
        %v652 = vmul.f32 %v528, %v649
        %v653 = vmul.f32 %v532, %v649
        %v654 = vmul.f32 %v536, %v649
        %v655 = vmul.f32 %v540, %v649
        %v656 = vmul.f32 %v544, %v649
        %v657 = vmul.f32 %v548, %v649
        %v658 = vmul.f32 %v552, %v649
        %v659 = vmul.f32 %v556, %v649
        %v660 = vmul.f32 %v560, %v649
        %v661 = vmul.f32 %v564, %v649
        %v662 = vmul.f32 %v568, %v649
        %v663 = vmul.f32 %v572, %v649
        %v664 = vmul.f32 %v576, %v649
        %v665 = vmul.f32 %v580, %v649
        %v666 = vmul.f32 %v584, %v649
        %v667 = vmul.f32 %v588, %v649
        %v668 = vmul.f32 %v592, %v649
        %v669 = vmul.f32 %v596, %v649
        %v670 = vmul.f32 %v600, %v649
        %v671 = vmul.f32 %v604, %v649
        %v672 = vmul.f32 %v608, %v649
        %v673 = vmul.f32 %v612, %v649
        %v674 = vmul.f32 %v616, %v649
        %v675 = vmul.f32 %v620, %v649
        %v676 = vmul.f32 %v624, %v649
        %v677 = vmul.f32 %v628, %v649
        %v678 = vmul.f32 %v632, %v649
        %v679 = vmul.f32 %v636, %v649
        %v680 = vmul.f32 %v640, %v649
        %v681 = vmul.f32 %v644, %v649
        %v682 = vadd.f32 %v486, %v650
        %v683 = vadd.f32 %v487, %v651
        %v684 = vadd.f32 %v488, %v652
        %v685 = vadd.f32 %v489, %v653
        %v686 = vadd.f32 %v490, %v654
        %v687 = vadd.f32 %v491, %v655
        %v688 = vadd.f32 %v492, %v656
        %v689 = vadd.f32 %v493, %v657
        %v690 = vadd.f32 %v494, %v658
        %v691 = vadd.f32 %v495, %v659
        %v692 = vadd.f32 %v496, %v660
        %v693 = vadd.f32 %v497, %v661
        %v694 = vadd.f32 %v498, %v662
        %v695 = vadd.f32 %v499, %v663
        %v696 = vadd.f32 %v500, %v664
        %v697 = vadd.f32 %v501, %v665
        %v698 = vadd.f32 %v502, %v666
        %v699 = vadd.f32 %v503, %v667
        %v700 = vadd.f32 %v504, %v668
        %v701 = vadd.f32 %v505, %v669
        %v702 = vadd.f32 %v506, %v670
        %v703 = vadd.f32 %v507, %v671
        %v704 = vadd.f32 %v508, %v672
        %v705 = vadd.f32 %v509, %v673
        %v706 = vadd.f32 %v510, %v674
        %v707 = vadd.f32 %v511, %v675
        %v708 = vadd.f32 %v512, %v676
        %v709 = vadd.f32 %v513, %v677
        %v710 = vadd.f32 %v514, %v678
        %v711 = vadd.f32 %v515, %v679
        %v712 = vadd.f32 %v516, %v680
        %v713 = vadd.f32 %v517, %v681
        %714 = vset.pattern.permute.xlu0 2
        %715 = vperm.xlu0 %714, %v290
        %v716 = vpop.permute.xlu0 %715
        %718 = vset.pattern.permute.xlu0 2
        %719 = vperm.xlu0 %718, %v291
        %v720 = vpop.permute.xlu0 %719
        %722 = vset.pattern.permute.xlu0 2
        %723 = vperm.xlu0 %722, %v292
        %v724 = vpop.permute.xlu0 %723
        %726 = vset.pattern.permute.xlu0 2
        %727 = vperm.xlu0 %726, %v293
        %v728 = vpop.permute.xlu0 %727
        %730 = vset.pattern.permute.xlu0 2
        %731 = vperm.xlu0 %730, %v294
        %v732 = vpop.permute.xlu0 %731
        %734 = vset.pattern.permute.xlu0 2
        %735 = vperm.xlu0 %734, %v295
        %v736 = vpop.permute.xlu0 %735
        %738 = vset.pattern.permute.xlu0 2
        %739 = vperm.xlu0 %738, %v296
        %v740 = vpop.permute.xlu0 %739
        %742 = vset.pattern.permute.xlu0 2
        %743 = vperm.xlu0 %742, %v297
        %v744 = vpop.permute.xlu0 %743
        %746 = vset.pattern.permute.xlu0 2
        %747 = vperm.xlu0 %746, %v298
        %v748 = vpop.permute.xlu0 %747
        %750 = vset.pattern.permute.xlu0 2
        %751 = vperm.xlu0 %750, %v299
        %v752 = vpop.permute.xlu0 %751
        %754 = vset.pattern.permute.xlu0 2
        %755 = vperm.xlu0 %754, %v300
        %v756 = vpop.permute.xlu0 %755
        %758 = vset.pattern.permute.xlu0 2
        %759 = vperm.xlu0 %758, %v301
        %v760 = vpop.permute.xlu0 %759
        %762 = vset.pattern.permute.xlu0 2
        %763 = vperm.xlu0 %762, %v302
        %v764 = vpop.permute.xlu0 %763
        %766 = vset.pattern.permute.xlu0 2
        %767 = vperm.xlu0 %766, %v303
        %v768 = vpop.permute.xlu0 %767
        %770 = vset.pattern.permute.xlu0 2
        %771 = vperm.xlu0 %770, %v304
        %v772 = vpop.permute.xlu0 %771
        %774 = vset.pattern.permute.xlu0 2
        %775 = vperm.xlu0 %774, %v305
        %v776 = vpop.permute.xlu0 %775
        %778 = vset.pattern.permute.xlu0 2
        %779 = vperm.xlu0 %778, %v306
        %v780 = vpop.permute.xlu0 %779
        %782 = vset.pattern.permute.xlu0 2
        %783 = vperm.xlu0 %782, %v307
        %v784 = vpop.permute.xlu0 %783
        %786 = vset.pattern.permute.xlu0 2
        %787 = vperm.xlu0 %786, %v308
        %v788 = vpop.permute.xlu0 %787
        %790 = vset.pattern.permute.xlu0 2
        %791 = vperm.xlu0 %790, %v309
        %v792 = vpop.permute.xlu0 %791
        %794 = vset.pattern.permute.xlu0 2
        %795 = vperm.xlu0 %794, %v310
        %v796 = vpop.permute.xlu0 %795
        %798 = vset.pattern.permute.xlu0 2
        %799 = vperm.xlu0 %798, %v311
        %v800 = vpop.permute.xlu0 %799
        %802 = vset.pattern.permute.xlu0 2
        %803 = vperm.xlu0 %802, %v312
        %v804 = vpop.permute.xlu0 %803
        %806 = vset.pattern.permute.xlu0 2
        %807 = vperm.xlu0 %806, %v313
        %v808 = vpop.permute.xlu0 %807
        %810 = vset.pattern.permute.xlu0 2
        %811 = vperm.xlu0 %810, %v314
        %v812 = vpop.permute.xlu0 %811
        %814 = vset.pattern.permute.xlu0 2
        %815 = vperm.xlu0 %814, %v315
        %v816 = vpop.permute.xlu0 %815
        %818 = vset.pattern.permute.xlu0 2
        %819 = vperm.xlu0 %818, %v316
        %v820 = vpop.permute.xlu0 %819
        %822 = vset.pattern.permute.xlu0 2
        %823 = vperm.xlu0 %822, %v317
        %v824 = vpop.permute.xlu0 %823
        %826 = vset.pattern.permute.xlu0 2
        %827 = vperm.xlu0 %826, %v318
        %v828 = vpop.permute.xlu0 %827
        %830 = vset.pattern.permute.xlu0 2
        %831 = vperm.xlu0 %830, %v319
        %v832 = vpop.permute.xlu0 %831
        %834 = vset.pattern.permute.xlu0 2
        %835 = vperm.xlu0 %834, %v320
        %v836 = vpop.permute.xlu0 %835
        %838 = vset.pattern.permute.xlu0 2
        %839 = vperm.xlu0 %838, %v321
        %v840 = vpop.permute.xlu0 %839
        %v842 = vlaneseq
        %v843 = vshrl.u32 %v842, 7
        %v844 = vsub.s32 2, %v843
        %v845 = vrot.slane %v289, %v844
        %v846 = vmul.f32 %v716, %v845
        %v847 = vmul.f32 %v720, %v845
        %v848 = vmul.f32 %v724, %v845
        %v849 = vmul.f32 %v728, %v845
        %v850 = vmul.f32 %v732, %v845
        %v851 = vmul.f32 %v736, %v845
        %v852 = vmul.f32 %v740, %v845
        %v853 = vmul.f32 %v744, %v845
        %v854 = vmul.f32 %v748, %v845
        %v855 = vmul.f32 %v752, %v845
        %v856 = vmul.f32 %v756, %v845
        %v857 = vmul.f32 %v760, %v845
        %v858 = vmul.f32 %v764, %v845
        %v859 = vmul.f32 %v768, %v845
        %v860 = vmul.f32 %v772, %v845
        %v861 = vmul.f32 %v776, %v845
        %v862 = vmul.f32 %v780, %v845
        %v863 = vmul.f32 %v784, %v845
        %v864 = vmul.f32 %v788, %v845
        %v865 = vmul.f32 %v792, %v845
        %v866 = vmul.f32 %v796, %v845
        %v867 = vmul.f32 %v800, %v845
        %v868 = vmul.f32 %v804, %v845
        %v869 = vmul.f32 %v808, %v845
        %v870 = vmul.f32 %v812, %v845
        %v871 = vmul.f32 %v816, %v845
        %v872 = vmul.f32 %v820, %v845
        %v873 = vmul.f32 %v824, %v845
        %v874 = vmul.f32 %v828, %v845
        %v875 = vmul.f32 %v832, %v845
        %v876 = vmul.f32 %v836, %v845
        %v877 = vmul.f32 %v840, %v845
        %v878 = vadd.f32 %v682, %v846
        %v879 = vadd.f32 %v683, %v847
        %v880 = vadd.f32 %v684, %v848
        %v881 = vadd.f32 %v685, %v849
        %v882 = vadd.f32 %v686, %v850
        %v883 = vadd.f32 %v687, %v851
        %v884 = vadd.f32 %v688, %v852
        %v885 = vadd.f32 %v689, %v853
        %v886 = vadd.f32 %v690, %v854
        %v887 = vadd.f32 %v691, %v855
        %v888 = vadd.f32 %v692, %v856
        %v889 = vadd.f32 %v693, %v857
        %v890 = vadd.f32 %v694, %v858
        %v891 = vadd.f32 %v695, %v859
        %v892 = vadd.f32 %v696, %v860
        %v893 = vadd.f32 %v697, %v861
        %v894 = vadd.f32 %v698, %v862
        %v895 = vadd.f32 %v699, %v863
        %v896 = vadd.f32 %v700, %v864
        %v897 = vadd.f32 %v701, %v865
        %v898 = vadd.f32 %v702, %v866
        %v899 = vadd.f32 %v703, %v867
        %v900 = vadd.f32 %v704, %v868
        %v901 = vadd.f32 %v705, %v869
        %v902 = vadd.f32 %v706, %v870
        %v903 = vadd.f32 %v707, %v871
        %v904 = vadd.f32 %v708, %v872
        %v905 = vadd.f32 %v709, %v873
        %v906 = vadd.f32 %v710, %v874
        %v907 = vadd.f32 %v711, %v875
        %v908 = vadd.f32 %v712, %v876
        %v909 = vadd.f32 %v713, %v877
        %v910 = vld [vmem:[%s3] sm:$0xff]
        %v911 = vld [vmem:[%s3 + $0x8] sm:$0xff]
        %v912 = vld [vmem:[%s3 + $0x10] sm:$0xff]
        %v913 = vld [vmem:[%s3 + $0x18] sm:$0xff]
        %v914 = vld [vmem:[%s3 + $0x20] sm:$0xff]
        %v915 = vld [vmem:[%s3 + $0x28] sm:$0xff]
        %v916 = vld [vmem:[%s3 + $0x30] sm:$0xff]
        %v917 = vld [vmem:[%s3 + $0x38] sm:$0xff]
        %v918 = vld [vmem:[%s3 + $0x40] sm:$0xff]
        %v919 = vld [vmem:[%s3 + $0x48] sm:$0xff]
        %v920 = vld [vmem:[%s3 + $0x50] sm:$0xff]
        %v921 = vld [vmem:[%s3 + $0x58] sm:$0xff]
        %v922 = vld [vmem:[%s3 + $0x60] sm:$0xff]
        %v923 = vld [vmem:[%s3 + $0x68] sm:$0xff]
        %v924 = vld [vmem:[%s3 + $0x70] sm:$0xff]
        %v925 = vld [vmem:[%s3 + $0x78] sm:$0xff]
        %v926 = vld [vmem:[%s3 + $0x80] sm:$0xff]
        %v927 = vld [vmem:[%s3 + $0x88] sm:$0xff]
        %v928 = vld [vmem:[%s3 + $0x90] sm:$0xff]
        %v929 = vld [vmem:[%s3 + $0x98] sm:$0xff]
        %v930 = vld [vmem:[%s3 + $0xa0] sm:$0xff]
        %v931 = vld [vmem:[%s3 + $0xa8] sm:$0xff]
        %v932 = vld [vmem:[%s3 + $0xb0] sm:$0xff]
        %v933 = vld [vmem:[%s3 + $0xb8] sm:$0xff]
        %v934 = vld [vmem:[%s3 + $0xc0] sm:$0xff]
        %v935 = vld [vmem:[%s3 + $0xc8] sm:$0xff]
        %v936 = vld [vmem:[%s3 + $0xd0] sm:$0xff]
        %v937 = vld [vmem:[%s3 + $0xd8] sm:$0xff]
        %v938 = vld [vmem:[%s3 + $0xe0] sm:$0xff]
        %v939 = vld [vmem:[%s3 + $0xe8] sm:$0xff]
        %v940 = vld [vmem:[%s3 + $0xf0] sm:$0xff]
        %v941 = vld [vmem:[%s3 + $0xf8] sm:$0xff]
        %943 = vset.pattern.permute.xlu0 0
        %944 = vperm.xlu0 %943, %v910
        %v945 = vpop.permute.xlu0 %944
        %948 = vset.pattern.permute.xlu0 0
        %949 = vperm.xlu0 %948, %v911
        %v950 = vpop.permute.xlu0 %949
        %953 = vset.pattern.permute.xlu0 0
        %954 = vperm.xlu0 %953, %v912
        %v955 = vpop.permute.xlu0 %954
        %958 = vset.pattern.permute.xlu0 0
        %959 = vperm.xlu0 %958, %v913
        %v960 = vpop.permute.xlu0 %959
        %963 = vset.pattern.permute.xlu0 0
        %964 = vperm.xlu0 %963, %v914
        %v965 = vpop.permute.xlu0 %964
        %968 = vset.pattern.permute.xlu0 0
        %969 = vperm.xlu0 %968, %v915
        %v970 = vpop.permute.xlu0 %969
        %973 = vset.pattern.permute.xlu0 0
        %974 = vperm.xlu0 %973, %v916
        %v975 = vpop.permute.xlu0 %974
        %978 = vset.pattern.permute.xlu0 0
        %979 = vperm.xlu0 %978, %v917
        %v980 = vpop.permute.xlu0 %979
        %983 = vset.pattern.permute.xlu0 0
        %984 = vperm.xlu0 %983, %v918
        %v985 = vpop.permute.xlu0 %984
        %988 = vset.pattern.permute.xlu0 0
        %989 = vperm.xlu0 %988, %v919
        %v990 = vpop.permute.xlu0 %989
        %993 = vset.pattern.permute.xlu0 0
        %994 = vperm.xlu0 %993, %v920
        %v995 = vpop.permute.xlu0 %994
        %998 = vset.pattern.permute.xlu0 0
        %999 = vperm.xlu0 %998, %v921
        %v1000 = vpop.permute.xlu0 %999
        %1003 = vset.pattern.permute.xlu0 0
        %1004 = vperm.xlu0 %1003, %v922
        %v1005 = vpop.permute.xlu0 %1004
        %1008 = vset.pattern.permute.xlu0 0
        %1009 = vperm.xlu0 %1008, %v923
        %v1010 = vpop.permute.xlu0 %1009
        %1013 = vset.pattern.permute.xlu0 0
        %1014 = vperm.xlu0 %1013, %v924
        %v1015 = vpop.permute.xlu0 %1014
        %1018 = vset.pattern.permute.xlu0 0
        %1019 = vperm.xlu0 %1018, %v925
        %v1020 = vpop.permute.xlu0 %1019
        %1023 = vset.pattern.permute.xlu0 0
        %1024 = vperm.xlu0 %1023, %v926
        %v1025 = vpop.permute.xlu0 %1024
        %1028 = vset.pattern.permute.xlu0 0
        %1029 = vperm.xlu0 %1028, %v927
        %v1030 = vpop.permute.xlu0 %1029
        %1033 = vset.pattern.permute.xlu0 0
        %1034 = vperm.xlu0 %1033, %v928
        %v1035 = vpop.permute.xlu0 %1034
        %1038 = vset.pattern.permute.xlu0 0
        %1039 = vperm.xlu0 %1038, %v929
        %v1040 = vpop.permute.xlu0 %1039
        %1043 = vset.pattern.permute.xlu0 0
        %1044 = vperm.xlu0 %1043, %v930
        %v1045 = vpop.permute.xlu0 %1044
        %1048 = vset.pattern.permute.xlu0 0
        %1049 = vperm.xlu0 %1048, %v931
        %v1050 = vpop.permute.xlu0 %1049
        %1053 = vset.pattern.permute.xlu0 0
        %1054 = vperm.xlu0 %1053, %v932
        %v1055 = vpop.permute.xlu0 %1054
        %1058 = vset.pattern.permute.xlu0 0
        %1059 = vperm.xlu0 %1058, %v933
        %v1060 = vpop.permute.xlu0 %1059
        %1063 = vset.pattern.permute.xlu0 0
        %1064 = vperm.xlu0 %1063, %v934
        %v1065 = vpop.permute.xlu0 %1064
        %1068 = vset.pattern.permute.xlu0 0
        %1069 = vperm.xlu0 %1068, %v935
        %v1070 = vpop.permute.xlu0 %1069
        %1073 = vset.pattern.permute.xlu0 0
        %1074 = vperm.xlu0 %1073, %v936
        %v1075 = vpop.permute.xlu0 %1074
        %1078 = vset.pattern.permute.xlu0 0
        %1079 = vperm.xlu0 %1078, %v937
        %v1080 = vpop.permute.xlu0 %1079
        %1083 = vset.pattern.permute.xlu0 0
        %1084 = vperm.xlu0 %1083, %v938
        %v1085 = vpop.permute.xlu0 %1084
        %1088 = vset.pattern.permute.xlu0 0
        %1089 = vperm.xlu0 %1088, %v939
        %v1090 = vpop.permute.xlu0 %1089
        %1093 = vset.pattern.permute.xlu0 0
        %1094 = vperm.xlu0 %1093, %v940
        %v1095 = vpop.permute.xlu0 %1094
        %1098 = vset.pattern.permute.xlu0 0
        %1099 = vperm.xlu0 %1098, %v941
        %v1100 = vpop.permute.xlu0 %1099
        %v1102 = vadd.f32 %v878, %v945
        %v1103 = vadd.f32 %v879, %v950
        %v1104 = vadd.f32 %v880, %v955
        %v1105 = vadd.f32 %v881, %v960
        %v1106 = vadd.f32 %v882, %v965
        %v1107 = vadd.f32 %v883, %v970
        %v1108 = vadd.f32 %v884, %v975
        %v1109 = vadd.f32 %v885, %v980
        %v1110 = vadd.f32 %v886, %v985
        %v1111 = vadd.f32 %v887, %v990
        %v1112 = vadd.f32 %v888, %v995
        %v1113 = vadd.f32 %v889, %v1000
        %v1114 = vadd.f32 %v890, %v1005
        %v1115 = vadd.f32 %v891, %v1010
        %v1116 = vadd.f32 %v892, %v1015
        %v1117 = vadd.f32 %v893, %v1020
        %v1118 = vadd.f32 %v894, %v1025
        %v1119 = vadd.f32 %v895, %v1030
        %v1120 = vadd.f32 %v896, %v1035
        %v1121 = vadd.f32 %v897, %v1040
        %v1122 = vadd.f32 %v898, %v1045
        %v1123 = vadd.f32 %v899, %v1050
        %v1124 = vadd.f32 %v900, %v1055
        %v1125 = vadd.f32 %v901, %v1060
        %v1126 = vadd.f32 %v902, %v1065
        %v1127 = vadd.f32 %v903, %v1070
        %v1128 = vadd.f32 %v904, %v1075
        %v1129 = vadd.f32 %v905, %v1080
        %v1130 = vadd.f32 %v906, %v1085
        %v1131 = vadd.f32 %v907, %v1090
        %v1132 = vadd.f32 %v908, %v1095
        %v1133 = vadd.f32 %v909, %v1100
        %v1134 = vmul.f32 %v1102, 0.2
        %v1135 = vmul.f32 %v1103, 0.2
        %v1136 = vmul.f32 %v1104, 0.2
        %v1137 = vmul.f32 %v1105, 0.2
        %v1138 = vmul.f32 %v1106, 0.2
        %v1139 = vmul.f32 %v1107, 0.2
        %v1140 = vmul.f32 %v1108, 0.2
        %v1141 = vmul.f32 %v1109, 0.2
        %v1142 = vmul.f32 %v1110, 0.2
        %v1143 = vmul.f32 %v1111, 0.2
        %v1144 = vmul.f32 %v1112, 0.2
        %v1145 = vmul.f32 %v1113, 0.2
        %v1146 = vmul.f32 %v1114, 0.2
        %v1147 = vmul.f32 %v1115, 0.2
        %v1148 = vmul.f32 %v1116, 0.2
        %v1149 = vmul.f32 %v1117, 0.2
        %v1150 = vmul.f32 %v1118, 0.2
        %v1151 = vmul.f32 %v1119, 0.2
        %v1152 = vmul.f32 %v1120, 0.2
        %v1153 = vmul.f32 %v1121, 0.2
        %v1154 = vmul.f32 %v1122, 0.2
        %v1155 = vmul.f32 %v1123, 0.2
        %v1156 = vmul.f32 %v1124, 0.2
        %v1157 = vmul.f32 %v1125, 0.2
        %v1158 = vmul.f32 %v1126, 0.2
        %v1159 = vmul.f32 %v1127, 0.2
        %v1160 = vmul.f32 %v1128, 0.2
        %v1161 = vmul.f32 %v1129, 0.2
        %v1162 = vmul.f32 %v1130, 0.2
        %v1163 = vmul.f32 %v1131, 0.2
        %v1164 = vmul.f32 %v1132, 0.2
        %v1165 = vmul.f32 %v1133, 0.2
        %v1166 = vmax.f32 %v1102, %v1134
        %v1167 = vmax.f32 %v1103, %v1135
        %v1168 = vmax.f32 %v1104, %v1136
        %v1169 = vmax.f32 %v1105, %v1137
        %v1170 = vmax.f32 %v1106, %v1138
        %v1171 = vmax.f32 %v1107, %v1139
        %v1172 = vmax.f32 %v1108, %v1140
        %v1173 = vmax.f32 %v1109, %v1141
        %v1174 = vmax.f32 %v1110, %v1142
        %v1175 = vmax.f32 %v1111, %v1143
        %v1176 = vmax.f32 %v1112, %v1144
        %v1177 = vmax.f32 %v1113, %v1145
        %v1178 = vmax.f32 %v1114, %v1146
        %v1179 = vmax.f32 %v1115, %v1147
        %v1180 = vmax.f32 %v1116, %v1148
        %v1181 = vmax.f32 %v1117, %v1149
        %v1182 = vmax.f32 %v1118, %v1150
        %v1183 = vmax.f32 %v1119, %v1151
        %v1184 = vmax.f32 %v1120, %v1152
        %v1185 = vmax.f32 %v1121, %v1153
        %v1186 = vmax.f32 %v1122, %v1154
        %v1187 = vmax.f32 %v1123, %v1155
        %v1188 = vmax.f32 %v1124, %v1156
        %v1189 = vmax.f32 %v1125, %v1157
        %v1190 = vmax.f32 %v1126, %v1158
        %v1191 = vmax.f32 %v1127, %v1159
        %v1192 = vmax.f32 %v1128, %v1160
        %v1193 = vmax.f32 %v1129, %v1161
        %v1194 = vmax.f32 %v1130, %v1162
        %v1195 = vmax.f32 %v1131, %v1163
        %v1196 = vmax.f32 %v1132, %v1164
        %v1197 = vmax.f32 %v1133, %v1165
        %v1198 = vld [vmem:[%s4] sm:$0xff]
        %v1199 = vld [vmem:[%s4 + $0x8] sm:$0xff]
        %v1200 = vld [vmem:[%s4 + $0x10] sm:$0xff]
        %v1201 = vld [vmem:[%s4 + $0x18] sm:$0xff]
        %v1202 = vld [vmem:[%s4 + $0x20] sm:$0xff]
        %v1203 = vld [vmem:[%s4 + $0x28] sm:$0xff]
        %v1204 = vld [vmem:[%s4 + $0x30] sm:$0xff]
        %v1205 = vld [vmem:[%s4 + $0x38] sm:$0xff]
        %v1206 = vld [vmem:[%s4 + $0x40] sm:$0xff]
        %v1207 = vld [vmem:[%s4 + $0x48] sm:$0xff]
        %v1208 = vld [vmem:[%s4 + $0x50] sm:$0xff]
        %v1209 = vld [vmem:[%s4 + $0x58] sm:$0xff]
        %v1210 = vld [vmem:[%s4 + $0x60] sm:$0xff]
        %v1211 = vld [vmem:[%s4 + $0x68] sm:$0xff]
        %v1212 = vld [vmem:[%s4 + $0x70] sm:$0xff]
        %v1213 = vld [vmem:[%s4 + $0x78] sm:$0xff]
        %v1214 = vld [vmem:[%s4 + $0x80] sm:$0xff]
        %v1215 = vld [vmem:[%s4 + $0x88] sm:$0xff]
        %v1216 = vld [vmem:[%s4 + $0x90] sm:$0xff]
        %v1217 = vld [vmem:[%s4 + $0x98] sm:$0xff]
        %v1218 = vld [vmem:[%s4 + $0xa0] sm:$0xff]
        %v1219 = vld [vmem:[%s4 + $0xa8] sm:$0xff]
        %v1220 = vld [vmem:[%s4 + $0xb0] sm:$0xff]
        %v1221 = vld [vmem:[%s4 + $0xb8] sm:$0xff]
        %v1222 = vld [vmem:[%s4 + $0xc0] sm:$0xff]
        %v1223 = vld [vmem:[%s4 + $0xc8] sm:$0xff]
        %v1224 = vld [vmem:[%s4 + $0xd0] sm:$0xff]
        %v1225 = vld [vmem:[%s4 + $0xd8] sm:$0xff]
        %v1226 = vld [vmem:[%s4 + $0xe0] sm:$0xff]
        %v1227 = vld [vmem:[%s4 + $0xe8] sm:$0xff]
        %v1228 = vld [vmem:[%s4 + $0xf0] sm:$0xff]
        %v1229 = vld [vmem:[%s4 + $0xf8] sm:$0xff]
        %v1230 = vld [vmem:[%s4 + $0x100] sm:$0xff]
        %v1231 = vld [vmem:[%s4 + $0x108] sm:$0xff]
        %v1232 = vld [vmem:[%s4 + $0x110] sm:$0xff]
        %v1233 = vld [vmem:[%s4 + $0x118] sm:$0xff]
        %v1234 = vld [vmem:[%s4 + $0x120] sm:$0xff]
        %v1235 = vld [vmem:[%s4 + $0x128] sm:$0xff]
        %v1236 = vld [vmem:[%s4 + $0x130] sm:$0xff]
        %v1237 = vld [vmem:[%s4 + $0x138] sm:$0xff]
        %v1238 = vld [vmem:[%s4 + $0x140] sm:$0xff]
        %v1239 = vld [vmem:[%s4 + $0x148] sm:$0xff]
        %v1240 = vld [vmem:[%s4 + $0x150] sm:$0xff]
        %v1241 = vld [vmem:[%s4 + $0x158] sm:$0xff]
        %v1242 = vld [vmem:[%s4 + $0x160] sm:$0xff]
        %v1243 = vld [vmem:[%s4 + $0x168] sm:$0xff]
        %v1244 = vld [vmem:[%s4 + $0x170] sm:$0xff]
        %v1245 = vld [vmem:[%s4 + $0x178] sm:$0xff]
        %v1246 = vld [vmem:[%s4 + $0x180] sm:$0xff]
        %v1247 = vld [vmem:[%s4 + $0x188] sm:$0xff]
        %v1248 = vld [vmem:[%s4 + $0x190] sm:$0xff]
        %v1249 = vld [vmem:[%s4 + $0x198] sm:$0xff]
        %v1250 = vld [vmem:[%s4 + $0x1a0] sm:$0xff]
        %v1251 = vld [vmem:[%s4 + $0x1a8] sm:$0xff]
        %v1252 = vld [vmem:[%s4 + $0x1b0] sm:$0xff]
        %v1253 = vld [vmem:[%s4 + $0x1b8] sm:$0xff]
        %v1254 = vld [vmem:[%s4 + $0x1c0] sm:$0xff]
        %v1255 = vld [vmem:[%s4 + $0x1c8] sm:$0xff]
        %v1256 = vld [vmem:[%s4 + $0x1d0] sm:$0xff]
        %v1257 = vld [vmem:[%s4 + $0x1d8] sm:$0xff]
        %v1258 = vld [vmem:[%s4 + $0x1e0] sm:$0xff]
        %v1259 = vld [vmem:[%s4 + $0x1e8] sm:$0xff]
        %v1260 = vld [vmem:[%s4 + $0x1f0] sm:$0xff]
        %v1261 = vld [vmem:[%s4 + $0x1f8] sm:$0xff]
        %v1262 = vld [vmem:[%s4 + $0x200] sm:$0xff]
        %v1263 = vld [vmem:[%s4 + $0x208] sm:$0xff]
        %v1264 = vld [vmem:[%s4 + $0x210] sm:$0xff]
        %v1265 = vld [vmem:[%s4 + $0x218] sm:$0xff]
        %v1266 = vld [vmem:[%s4 + $0x220] sm:$0xff]
        %v1267 = vld [vmem:[%s4 + $0x228] sm:$0xff]
        %v1268 = vld [vmem:[%s4 + $0x230] sm:$0xff]
        %v1269 = vld [vmem:[%s4 + $0x238] sm:$0xff]
        %v1270 = vld [vmem:[%s5] sm:$0xff]
        %v1271 = vld [vmem:[%s5 + $0x8] sm:$0xff]
        %v1272 = vld [vmem:[%s5 + $0x10] sm:$0xff]
        %v1273 = vld [vmem:[%s5 + $0x18] sm:$0xff]
        %v1274 = vld [vmem:[%s5 + $0x20] sm:$0xff]
        %v1275 = vld [vmem:[%s5 + $0x28] sm:$0xff]
        %v1276 = vld [vmem:[%s5 + $0x30] sm:$0xff]
        %v1277 = vld [vmem:[%s5 + $0x38] sm:$0xff]
        %v1278 = vld [vmem:[%s5 + $0x40] sm:$0xff]
        %v1279 = vld [vmem:[%s5 + $0x48] sm:$0xff]
        %v1280 = vld [vmem:[%s5 + $0x50] sm:$0xff]
        %v1281 = vld [vmem:[%s5 + $0x58] sm:$0xff]
        %v1282 = vld [vmem:[%s5 + $0x60] sm:$0xff]
        %v1283 = vld [vmem:[%s5 + $0x68] sm:$0xff]
        %v1284 = vld [vmem:[%s5 + $0x70] sm:$0xff]
        %v1285 = vld [vmem:[%s5 + $0x78] sm:$0xff]
        %v1286 = vld [vmem:[%s5 + $0x80] sm:$0xff]
        %v1287 = vld [vmem:[%s5 + $0x88] sm:$0xff]
        %v1288 = vld [vmem:[%s5 + $0x90] sm:$0xff]
        %v1289 = vld [vmem:[%s5 + $0x98] sm:$0xff]
        %v1290 = vld [vmem:[%s5 + $0xa0] sm:$0xff]
        %v1291 = vld [vmem:[%s5 + $0xa8] sm:$0xff]
        %v1292 = vld [vmem:[%s5 + $0xb0] sm:$0xff]
        %v1293 = vld [vmem:[%s5 + $0xb8] sm:$0xff]
        %v1294 = vld [vmem:[%s5 + $0xc0] sm:$0xff]
        %v1295 = vld [vmem:[%s5 + $0xc8] sm:$0xff]
        %v1296 = vld [vmem:[%s5 + $0xd0] sm:$0xff]
        %v1297 = vld [vmem:[%s5 + $0xd8] sm:$0xff]
        %v1298 = vld [vmem:[%s5 + $0xe0] sm:$0xff]
        %v1299 = vld [vmem:[%s5 + $0xe8] sm:$0xff]
        %v1300 = vld [vmem:[%s5 + $0xf0] sm:$0xff]
        %v1301 = vld [vmem:[%s5 + $0xf8] sm:$0xff]
        %v1302 = vld [vmem:[%s5 + $0x100] sm:$0xff]
        %v1303 = vld [vmem:[%s5 + $0x108] sm:$0xff]
        %v1304 = vld [vmem:[%s5 + $0x110] sm:$0xff]
        %v1305 = vld [vmem:[%s5 + $0x118] sm:$0xff]
        %1307 = vset.pattern.permute.xlu0 0
        %1308 = vperm.xlu0 %1307, %v1270
        %v1309 = vpop.permute.xlu0 %1308
        %1312 = vset.pattern.permute.xlu0 0
        %1313 = vperm.xlu0 %1312, %v1271
        %v1314 = vpop.permute.xlu0 %1313
        %1317 = vset.pattern.permute.xlu0 0
        %1318 = vperm.xlu0 %1317, %v1272
        %v1319 = vpop.permute.xlu0 %1318
        %1322 = vset.pattern.permute.xlu0 0
        %1323 = vperm.xlu0 %1322, %v1273
        %v1324 = vpop.permute.xlu0 %1323
        %1327 = vset.pattern.permute.xlu0 0
        %1328 = vperm.xlu0 %1327, %v1274
        %v1329 = vpop.permute.xlu0 %1328
        %1332 = vset.pattern.permute.xlu0 0
        %1333 = vperm.xlu0 %1332, %v1275
        %v1334 = vpop.permute.xlu0 %1333
        %1337 = vset.pattern.permute.xlu0 0
        %1338 = vperm.xlu0 %1337, %v1276
        %v1339 = vpop.permute.xlu0 %1338
        %1342 = vset.pattern.permute.xlu0 0
        %1343 = vperm.xlu0 %1342, %v1277
        %v1344 = vpop.permute.xlu0 %1343
        %1347 = vset.pattern.permute.xlu0 0
        %1348 = vperm.xlu0 %1347, %v1278
        %v1349 = vpop.permute.xlu0 %1348
        %1352 = vset.pattern.permute.xlu0 0
        %1353 = vperm.xlu0 %1352, %v1279
        %v1354 = vpop.permute.xlu0 %1353
        %1357 = vset.pattern.permute.xlu0 0
        %1358 = vperm.xlu0 %1357, %v1280
        %v1359 = vpop.permute.xlu0 %1358
        %1362 = vset.pattern.permute.xlu0 0
        %1363 = vperm.xlu0 %1362, %v1281
        %v1364 = vpop.permute.xlu0 %1363
        %1367 = vset.pattern.permute.xlu0 0
        %1368 = vperm.xlu0 %1367, %v1282
        %v1369 = vpop.permute.xlu0 %1368
        %1372 = vset.pattern.permute.xlu0 0
        %1373 = vperm.xlu0 %1372, %v1283
        %v1374 = vpop.permute.xlu0 %1373
        %1377 = vset.pattern.permute.xlu0 0
        %1378 = vperm.xlu0 %1377, %v1284
        %v1379 = vpop.permute.xlu0 %1378
        %1382 = vset.pattern.permute.xlu0 0
        %1383 = vperm.xlu0 %1382, %v1285
        %v1384 = vpop.permute.xlu0 %1383
        %1387 = vset.pattern.permute.xlu0 0
        %1388 = vperm.xlu0 %1387, %v1286
        %v1389 = vpop.permute.xlu0 %1388
        %1392 = vset.pattern.permute.xlu0 0
        %1393 = vperm.xlu0 %1392, %v1287
        %v1394 = vpop.permute.xlu0 %1393
        %1397 = vset.pattern.permute.xlu0 0
        %1398 = vperm.xlu0 %1397, %v1288
        %v1399 = vpop.permute.xlu0 %1398
        %1402 = vset.pattern.permute.xlu0 0
        %1403 = vperm.xlu0 %1402, %v1289
        %v1404 = vpop.permute.xlu0 %1403
        %1407 = vset.pattern.permute.xlu0 0
        %1408 = vperm.xlu0 %1407, %v1290
        %v1409 = vpop.permute.xlu0 %1408
        %1412 = vset.pattern.permute.xlu0 0
        %1413 = vperm.xlu0 %1412, %v1291
        %v1414 = vpop.permute.xlu0 %1413
        %1417 = vset.pattern.permute.xlu0 0
        %1418 = vperm.xlu0 %1417, %v1292
        %v1419 = vpop.permute.xlu0 %1418
        %1422 = vset.pattern.permute.xlu0 0
        %1423 = vperm.xlu0 %1422, %v1293
        %v1424 = vpop.permute.xlu0 %1423
        %1427 = vset.pattern.permute.xlu0 0
        %1428 = vperm.xlu0 %1427, %v1294
        %v1429 = vpop.permute.xlu0 %1428
        %1432 = vset.pattern.permute.xlu0 0
        %1433 = vperm.xlu0 %1432, %v1295
        %v1434 = vpop.permute.xlu0 %1433
        %1437 = vset.pattern.permute.xlu0 0
        %1438 = vperm.xlu0 %1437, %v1296
        %v1439 = vpop.permute.xlu0 %1438
        %1442 = vset.pattern.permute.xlu0 0
        %1443 = vperm.xlu0 %1442, %v1297
        %v1444 = vpop.permute.xlu0 %1443
        %1447 = vset.pattern.permute.xlu0 0
        %1448 = vperm.xlu0 %1447, %v1298
        %v1449 = vpop.permute.xlu0 %1448
        %1452 = vset.pattern.permute.xlu0 0
        %1453 = vperm.xlu0 %1452, %v1299
        %v1454 = vpop.permute.xlu0 %1453
        %1457 = vset.pattern.permute.xlu0 0
        %1458 = vperm.xlu0 %1457, %v1300
        %v1459 = vpop.permute.xlu0 %1458
        %1462 = vset.pattern.permute.xlu0 0
        %1463 = vperm.xlu0 %1462, %v1301
        %v1464 = vpop.permute.xlu0 %1463
        %1467 = vset.pattern.permute.xlu0 0
        %1468 = vperm.xlu0 %1467, %v1302
        %v1469 = vpop.permute.xlu0 %1468
        %1472 = vset.pattern.permute.xlu0 0
        %1473 = vperm.xlu0 %1472, %v1303
        %v1474 = vpop.permute.xlu0 %1473
        %1477 = vset.pattern.permute.xlu0 0
        %1478 = vperm.xlu0 %1477, %v1304
        %v1479 = vpop.permute.xlu0 %1478
        %1482 = vset.pattern.permute.xlu0 0
        %1483 = vperm.xlu0 %1482, %v1305
        %v1484 = vpop.permute.xlu0 %1483
        %1486 = vmatprep.subr.mxu0 0.0
        %1487 = vmatpush1.msra.mxu0 %v1181
        %1488 = vmatprep.subr.mxu0 0.0
        %1489 = vmatpush1.msra.mxu0 %v1180
        %1490 = vmatprep.subr.mxu0 0.0
        %1491 = vmatpush1.msra.mxu0 %v1179
        %1492 = vmatprep.subr.mxu0 0.0
        %1493 = vmatpush1.msra.mxu0 %v1178
        %1494 = vmatprep.subr.mxu0 0.0
        %1495 = vmatpush1.msra.mxu0 %v1177
        %1496 = vmatprep.subr.mxu0 0.0
        %1497 = vmatpush1.msra.mxu0 %v1176
        %1498 = vmatprep.subr.mxu0 0.0
        %1499 = vmatpush1.msra.mxu0 %v1175
        %1500 = vmatprep.subr.mxu0 0.0
        %1501 = vmatpush1.msra.mxu0 %v1174
        %1502 = vmatprep.subr.mxu0 0.0
        %1503 = vmatpush1.msra.mxu0 %v1173
        %1504 = vmatprep.subr.mxu0 0.0
        %1505 = vmatpush1.msra.mxu0 %v1172
        %1506 = vmatprep.subr.mxu0 0.0
        %1507 = vmatpush1.msra.mxu0 %v1171
        %1508 = vmatprep.subr.mxu0 0.0
        %1509 = vmatpush1.msra.mxu0 %v1170
        %1510 = vmatprep.subr.mxu0 0.0
        %1511 = vmatpush1.msra.mxu0 %v1169
        %1512 = vmatprep.subr.mxu0 0.0
        %1513 = vmatpush1.msra.mxu0 %v1168
        %1514 = vmatprep.subr.mxu0 0.0
        %1515 = vmatpush1.msra.mxu0 %v1167
        %1516 = vmatprep.subr.mxu0 0.0
        %1517 = vmatpush1.msra.mxu0 %v1166
        %1518 = vmatprep.subr.mxu0 0.0
        %1519 = vmatpush2.msra.mxu0 %v1197
        %1520 = vmatprep.subr.mxu0 0.0
        %1521 = vmatpush2.msra.mxu0 %v1196
        %1522 = vmatprep.subr.mxu0 0.0
        %1523 = vmatpush2.msra.mxu0 %v1195
        %1524 = vmatprep.subr.mxu0 0.0
        %1525 = vmatpush2.msra.mxu0 %v1194
        %1526 = vmatprep.subr.mxu0 0.0
        %1527 = vmatpush2.msra.mxu0 %v1193
        %1528 = vmatprep.subr.mxu0 0.0
        %1529 = vmatpush2.msra.mxu0 %v1192
        %1530 = vmatprep.subr.mxu0 0.0
        %1531 = vmatpush2.msra.mxu0 %v1191
        %1532 = vmatprep.subr.mxu0 0.0
        %1533 = vmatpush2.msra.mxu0 %v1190
        %1534 = vmatprep.subr.mxu0 0.0
        %1535 = vmatpush2.msra.mxu0 %v1189
        %1536 = vmatprep.subr.mxu0 0.0
        %1537 = vmatpush2.msra.mxu0 %v1188
        %1538 = vmatprep.subr.mxu0 0.0
        %1539 = vmatpush2.msra.mxu0 %v1187
        %1540 = vmatprep.subr.mxu0 0.0
        %1541 = vmatpush2.msra.mxu0 %v1186
        %1542 = vmatprep.subr.mxu0 0.0
        %1543 = vmatpush2.msra.mxu0 %v1185
        %1544 = vmatprep.subr.mxu0 0.0
        %1545 = vmatpush2.msra.mxu0 %v1184
        %1546 = vmatprep.subr.mxu0 0.0
        %1547 = vmatpush2.msra.mxu0 %v1183
        %1548 = vmatprep.subr.mxu0 0.0
        %1549 = vmatpush2.msra.mxu0 %v1182
        %1550 = vmatprep.mubr.f32.mxu0 %v1199
        %1551 = vmatmul.mubr.f32.gmra.mxu0 %v1198
        %v1552 = vpop.f32.mrf.mxu0
        %v1553 = vadd.f32 %v1309, %v1552
        %v1554 = vpop.f32.mrf.mxu0
        %1555 = vmatprep.mubr.f32.mxu0 %v1201
        %1556 = vmatmul.mubr.f32.gmra.mxu0 %v1200
        %v1557 = vpop.f32.mrf.mxu0
        %v1558 = vadd.f32 %v1314, %v1557
        %v1559 = vpop.f32.mrf.mxu0
        %1560 = vmatprep.mubr.f32.mxu0 %v1203
        %1561 = vmatmul.mubr.f32.gmra.mxu0 %v1202
        %v1562 = vpop.f32.mrf.mxu0
        %v1563 = vadd.f32 %v1319, %v1562
        %v1564 = vpop.f32.mrf.mxu0
        %1565 = vmatprep.mubr.f32.mxu0 %v1205
        %1566 = vmatmul.mubr.f32.gmra.mxu0 %v1204
        %v1567 = vpop.f32.mrf.mxu0
        %v1568 = vadd.f32 %v1324, %v1567
        %v1569 = vpop.f32.mrf.mxu0
        %1570 = vmatprep.mubr.f32.mxu0 %v1207
        %1571 = vmatmul.mubr.f32.gmra.mxu0 %v1206
        %v1572 = vpop.f32.mrf.mxu0
        %v1573 = vadd.f32 %v1329, %v1572
        %v1574 = vpop.f32.mrf.mxu0
        %1575 = vmatprep.mubr.f32.mxu0 %v1209
        %1576 = vmatmul.mubr.f32.gmra.mxu0 %v1208
        %v1577 = vpop.f32.mrf.mxu0
        %v1578 = vadd.f32 %v1334, %v1577
        %v1579 = vpop.f32.mrf.mxu0
        %1580 = vmatprep.mubr.f32.mxu0 %v1211
        %1581 = vmatmul.mubr.f32.gmra.mxu0 %v1210
        %v1582 = vpop.f32.mrf.mxu0
        %v1583 = vadd.f32 %v1339, %v1582
        %v1584 = vpop.f32.mrf.mxu0
        %1585 = vmatprep.mubr.f32.mxu0 %v1213
        %1586 = vmatmul.mubr.f32.gmra.mxu0 %v1212
        %v1587 = vpop.f32.mrf.mxu0
        %v1588 = vadd.f32 %v1344, %v1587
        %v1589 = vpop.f32.mrf.mxu0
        %1590 = vmatprep.mubr.f32.mxu0 %v1215
        %1591 = vmatmul.mubr.f32.gmra.mxu0 %v1214
        %v1592 = vpop.f32.mrf.mxu0
        %v1593 = vadd.f32 %v1349, %v1592
        %v1594 = vpop.f32.mrf.mxu0
        %1595 = vmatprep.mubr.f32.mxu0 %v1217
        %1596 = vmatmul.mubr.f32.gmra.mxu0 %v1216
        %v1597 = vpop.f32.mrf.mxu0
        %v1598 = vadd.f32 %v1354, %v1597
        %v1599 = vpop.f32.mrf.mxu0
        %1600 = vmatprep.mubr.f32.mxu0 %v1219
        %1601 = vmatmul.mubr.f32.gmra.mxu0 %v1218
        %v1602 = vpop.f32.mrf.mxu0
        %v1603 = vadd.f32 %v1359, %v1602
        %v1604 = vpop.f32.mrf.mxu0
        %1605 = vmatprep.mubr.f32.mxu0 %v1221
        %1606 = vmatmul.mubr.f32.gmra.mxu0 %v1220
        %v1607 = vpop.f32.mrf.mxu0
        %v1608 = vadd.f32 %v1364, %v1607
        %v1609 = vpop.f32.mrf.mxu0
        %1610 = vmatprep.mubr.f32.mxu0 %v1223
        %1611 = vmatmul.mubr.f32.gmra.mxu0 %v1222
        %v1612 = vpop.f32.mrf.mxu0
        %v1613 = vadd.f32 %v1369, %v1612
        %v1614 = vpop.f32.mrf.mxu0
        %1615 = vmatprep.mubr.f32.mxu0 %v1225
        %1616 = vmatmul.mubr.f32.gmra.mxu0 %v1224
        %v1617 = vpop.f32.mrf.mxu0
        %v1618 = vadd.f32 %v1374, %v1617
        %v1619 = vpop.f32.mrf.mxu0
        %1620 = vmatprep.mubr.f32.mxu0 %v1227
        %1621 = vmatmul.mubr.f32.gmra.mxu0 %v1226
        %v1622 = vpop.f32.mrf.mxu0
        %v1623 = vadd.f32 %v1379, %v1622
        %v1624 = vpop.f32.mrf.mxu0
        %1625 = vmatprep.mubr.f32.mxu0 %v1229
        %1626 = vmatmul.mubr.f32.gmra.mxu0 %v1228
        %v1627 = vpop.f32.mrf.mxu0
        %v1628 = vadd.f32 %v1384, %v1627
        %v1629 = vpop.f32.mrf.mxu0
        %1630 = vmatprep.mubr.f32.mxu0 %v1231
        %1631 = vmatmul.mubr.f32.gmra.mxu0 %v1230
        %v1632 = vpop.f32.mrf.mxu0
        %v1633 = vadd.f32 %v1389, %v1632
        %v1634 = vpop.f32.mrf.mxu0
        %1635 = vmatprep.mubr.f32.mxu0 %v1233
        %1636 = vmatmul.mubr.f32.gmra.mxu0 %v1232
        %v1637 = vpop.f32.mrf.mxu0
        %v1638 = vadd.f32 %v1394, %v1637
        %v1639 = vpop.f32.mrf.mxu0
        %1640 = vmatprep.mubr.f32.mxu0 %v1235
        %1641 = vmatmul.mubr.f32.gmra.mxu0 %v1234
        %v1642 = vpop.f32.mrf.mxu0
        %v1643 = vadd.f32 %v1399, %v1642
        %v1644 = vpop.f32.mrf.mxu0
        %1645 = vmatprep.mubr.f32.mxu0 %v1237
        %1646 = vmatmul.mubr.f32.gmra.mxu0 %v1236
        %v1647 = vpop.f32.mrf.mxu0
        %v1648 = vadd.f32 %v1404, %v1647
        %v1649 = vpop.f32.mrf.mxu0
        %1650 = vmatprep.mubr.f32.mxu0 %v1239
        %1651 = vmatmul.mubr.f32.gmra.mxu0 %v1238
        %v1652 = vpop.f32.mrf.mxu0
        %v1653 = vadd.f32 %v1409, %v1652
        %v1654 = vpop.f32.mrf.mxu0
        %1655 = vmatprep.mubr.f32.mxu0 %v1241
        %1656 = vmatmul.mubr.f32.gmra.mxu0 %v1240
        %v1657 = vpop.f32.mrf.mxu0
        %v1658 = vadd.f32 %v1414, %v1657
        %v1659 = vpop.f32.mrf.mxu0
        %1660 = vmatprep.mubr.f32.mxu0 %v1243
        %1661 = vmatmul.mubr.f32.gmra.mxu0 %v1242
        %v1662 = vpop.f32.mrf.mxu0
        %v1663 = vadd.f32 %v1419, %v1662
        %v1664 = vpop.f32.mrf.mxu0
        %1665 = vmatprep.mubr.f32.mxu0 %v1245
        %1666 = vmatmul.mubr.f32.gmra.mxu0 %v1244
        %v1667 = vpop.f32.mrf.mxu0
        %v1668 = vadd.f32 %v1424, %v1667
        %v1669 = vpop.f32.mrf.mxu0
        %1670 = vmatprep.mubr.f32.mxu0 %v1247
        %1671 = vmatmul.mubr.f32.gmra.mxu0 %v1246
        %v1672 = vpop.f32.mrf.mxu0
        %v1673 = vadd.f32 %v1429, %v1672
        %v1674 = vpop.f32.mrf.mxu0
        %1675 = vmatprep.mubr.f32.mxu0 %v1249
        %1676 = vmatmul.mubr.f32.gmra.mxu0 %v1248
        %v1677 = vpop.f32.mrf.mxu0
        %v1678 = vadd.f32 %v1434, %v1677
        %v1679 = vpop.f32.mrf.mxu0
        %1680 = vmatprep.mubr.f32.mxu0 %v1251
        %1681 = vmatmul.mubr.f32.gmra.mxu0 %v1250
        %v1682 = vpop.f32.mrf.mxu0
        %v1683 = vadd.f32 %v1439, %v1682
        %v1684 = vpop.f32.mrf.mxu0
        %1685 = vmatprep.mubr.f32.mxu0 %v1253
        %1686 = vmatmul.mubr.f32.gmra.mxu0 %v1252
        %v1687 = vpop.f32.mrf.mxu0
        %v1688 = vadd.f32 %v1444, %v1687
        %v1689 = vpop.f32.mrf.mxu0
        %1690 = vmatprep.mubr.f32.mxu0 %v1255
        %1691 = vmatmul.mubr.f32.gmra.mxu0 %v1254
        %v1692 = vpop.f32.mrf.mxu0
        %v1693 = vadd.f32 %v1449, %v1692
        %v1694 = vpop.f32.mrf.mxu0
        %1695 = vmatprep.mubr.f32.mxu0 %v1257
        %1696 = vmatmul.mubr.f32.gmra.mxu0 %v1256
        %v1697 = vpop.f32.mrf.mxu0
        %v1698 = vadd.f32 %v1454, %v1697
        %v1699 = vpop.f32.mrf.mxu0
        %1700 = vmatprep.mubr.f32.mxu0 %v1259
        %1701 = vmatmul.mubr.f32.gmra.mxu0 %v1258
        %v1702 = vpop.f32.mrf.mxu0
        %v1703 = vadd.f32 %v1459, %v1702
        %v1704 = vpop.f32.mrf.mxu0
        %1705 = vmatprep.mubr.f32.mxu0 %v1261
        %1706 = vmatmul.mubr.f32.gmra.mxu0 %v1260
        %v1707 = vpop.f32.mrf.mxu0
        %v1708 = vadd.f32 %v1464, %v1707
        %v1709 = vpop.f32.mrf.mxu0
        %1710 = vmatprep.mubr.f32.mxu0 %v1263
        %1711 = vmatmul.mubr.f32.gmra.mxu0 %v1262
        %v1712 = vpop.f32.mrf.mxu0
        %v1713 = vadd.f32 %v1469, %v1712
        %v1714 = vpop.f32.mrf.mxu0
        %1715 = vmatprep.mubr.f32.mxu0 %v1265
        %1716 = vmatmul.mubr.f32.gmra.mxu0 %v1264
        %v1717 = vpop.f32.mrf.mxu0
        %v1718 = vadd.f32 %v1474, %v1717
        %v1719 = vpop.f32.mrf.mxu0
        %1720 = vmatprep.mubr.f32.mxu0 %v1267
        %1721 = vmatmul.mubr.f32.gmra.mxu0 %v1266
        %v1722 = vpop.f32.mrf.mxu0
        %v1723 = vadd.f32 %v1479, %v1722
        %v1724 = vpop.f32.mrf.mxu0
        %1725 = vmatprep.mubr.f32.mxu0 %v1269
        %1726 = vmatmul.mubr.f32.gmra.mxu0 %v1268
        %v1727 = vpop.f32.mrf.mxu0
        %v1728 = vadd.f32 %v1484, %v1727
        %v1729 = vpop.f32.mrf.mxu0
        %1730 = vdwg.mxu0
        %1731 = vst [vmem:[#allocation2] sm:$0xff] %v1553
        %1732 = vst [vmem:[#allocation2 + $0x8] sm:$0xff] %v1558
        %1733 = vst [vmem:[#allocation2 + $0x10] sm:$0xff] %v1563
        %1734 = vst [vmem:[#allocation2 + $0x18] sm:$0xff] %v1568
        %1735 = vst [vmem:[#allocation2 + $0x20] sm:$0xff] %v1573
        %1736 = vst [vmem:[#allocation2 + $0x28] sm:$0xff] %v1578
        %1737 = vst [vmem:[#allocation2 + $0x30] sm:$0xff] %v1583
        %1738 = vst [vmem:[#allocation2 + $0x38] sm:$0xff] %v1588
        %1739 = vst [vmem:[#allocation2 + $0x40] sm:$0xff] %v1593
        %1740 = vst [vmem:[#allocation2 + $0x48] sm:$0xff] %v1598
        %1741 = vst [vmem:[#allocation2 + $0x50] sm:$0xff] %v1603
        %1742 = vst [vmem:[#allocation2 + $0x58] sm:$0xff] %v1608
        %1743 = vst [vmem:[#allocation2 + $0x60] sm:$0xff] %v1613
        %1744 = vst [vmem:[#allocation2 + $0x68] sm:$0xff] %v1618
        %1745 = vst [vmem:[#allocation2 + $0x70] sm:$0xff] %v1623
        %1746 = vst [vmem:[#allocation2 + $0x78] sm:$0xff] %v1628
        %1747 = vst [vmem:[#allocation2 + $0x80] sm:$0xff] %v1633
        %1748 = vst [vmem:[#allocation2 + $0x88] sm:$0xff] %v1638
        %1749 = vst [vmem:[#allocation2 + $0x90] sm:$0xff] %v1643
        %1750 = vst [vmem:[#allocation2 + $0x98] sm:$0xff] %v1648
        %1751 = vst [vmem:[#allocation2 + $0xa0] sm:$0xff] %v1653
        %1752 = vst [vmem:[#allocation2 + $0xa8] sm:$0xff] %v1658
        %1753 = vst [vmem:[#allocation2 + $0xb0] sm:$0xff] %v1663
        %1754 = vst [vmem:[#allocation2 + $0xb8] sm:$0xff] %v1668
        %1755 = vst [vmem:[#allocation2 + $0xc0] sm:$0xff] %v1673
        %1756 = vst [vmem:[#allocation2 + $0xc8] sm:$0xff] %v1678
        %1757 = vst [vmem:[#allocation2 + $0xd0] sm:$0xff] %v1683
        %1758 = vst [vmem:[#allocation2 + $0xd8] sm:$0xff] %v1688
        %1759 = vst [vmem:[#allocation2 + $0xe0] sm:$0xff] %v1693
        %1760 = vst [vmem:[#allocation2 + $0xe8] sm:$0xff] %v1698
        %1761 = vst [vmem:[#allocation2 + $0xf0] sm:$0xff] %v1703
        %1762 = vst [vmem:[#allocation2 + $0xf8] sm:$0xff] %v1708
        %1763 = vst [vmem:[#allocation2 + $0x100] sm:$0xff] %v1713
        %1764 = vst [vmem:[#allocation2 + $0x108] sm:$0xff] %v1718
        %1765 = vst [vmem:[#allocation2 + $0x110] sm:$0xff] %v1723
        %1766 = vst [vmem:[#allocation2 + $0x118] sm:$0xff] %v1728
        %v1767 = vld [vmem:[%s288] sm:$0x1]
        %v1768 = vld [vmem:[#allocation2] sm:$0xff]
        %v1769 = vlaneseq
        %v1770 = vshrl.u32 %v1769, 7
        %v1771 = vsub.s32 0, %v1770
        %v1772 = vrot.slane %v1767, %v1771
        %v1773 = vmul.f32 %v1772, %v1768
        %v1774 = vadd.f32 %v1773, 0.0
        %v1775 = vld [vmem:[%s288 + $0x1] sm:$0x1]
        %v1776 = vld [vmem:[#allocation2 + $0x8] sm:$0xff]
        %v1777 = vlaneseq
        %v1778 = vshrl.u32 %v1777, 7
        %v1779 = vsub.s32 0, %v1778
        %v1780 = vrot.slane %v1775, %v1779
        %v1781 = vmul.f32 %v1780, %v1776
        %v1782 = vadd.f32 %v1774, %v1781
        %v1783 = vld [vmem:[%s288 + $0x2] sm:$0x1]
        %v1784 = vld [vmem:[#allocation2 + $0x10] sm:$0xff]
        %v1785 = vlaneseq
        %v1786 = vshrl.u32 %v1785, 7
        %v1787 = vsub.s32 0, %v1786
        %v1788 = vrot.slane %v1783, %v1787
        %v1789 = vmul.f32 %v1788, %v1784
        %v1790 = vadd.f32 %v1782, %v1789
        %v1791 = vld [vmem:[%s288 + $0x3] sm:$0x1]
        %v1792 = vld [vmem:[#allocation2 + $0x18] sm:$0xff]
        %v1793 = vlaneseq
        %v1794 = vshrl.u32 %v1793, 7
        %v1795 = vsub.s32 0, %v1794
        %v1796 = vrot.slane %v1791, %v1795
        %v1797 = vmul.f32 %v1796, %v1792
        %v1798 = vadd.f32 %v1790, %v1797
        %v1799 = vld [vmem:[%s288 + $0x4] sm:$0x1]
        %v1800 = vld [vmem:[#allocation2 + $0x20] sm:$0xff]
        %v1801 = vlaneseq
        %v1802 = vshrl.u32 %v1801, 7
        %v1803 = vsub.s32 0, %v1802
        %v1804 = vrot.slane %v1799, %v1803
        %v1805 = vmul.f32 %v1804, %v1800
        %v1806 = vadd.f32 %v1798, %v1805
        %v1807 = vld [vmem:[%s288 + $0x5] sm:$0x1]
        %v1808 = vld [vmem:[#allocation2 + $0x28] sm:$0xff]
        %v1809 = vlaneseq
        %v1810 = vshrl.u32 %v1809, 7
        %v1811 = vsub.s32 0, %v1810
        %v1812 = vrot.slane %v1807, %v1811
        %v1813 = vmul.f32 %v1812, %v1808
        %v1814 = vadd.f32 %v1806, %v1813
        %v1815 = vld [vmem:[%s288 + $0x6] sm:$0x1]
        %v1816 = vld [vmem:[#allocation2 + $0x30] sm:$0xff]
        %v1817 = vlaneseq
        %v1818 = vshrl.u32 %v1817, 7
        %v1819 = vsub.s32 0, %v1818
        %v1820 = vrot.slane %v1815, %v1819
        %v1821 = vmul.f32 %v1820, %v1816
        %v1822 = vadd.f32 %v1814, %v1821
        %v1823 = vld [vmem:[%s288 + $0x7] sm:$0x1]
        %v1824 = vld [vmem:[#allocation2 + $0x38] sm:$0xff]
        %v1825 = vlaneseq
        %v1826 = vshrl.u32 %v1825, 7
        %v1827 = vsub.s32 0, %v1826
        %v1828 = vrot.slane %v1823, %v1827
        %v1829 = vmul.f32 %v1828, %v1824
        %v1830 = vadd.f32 %v1822, %v1829
        %v1831 = vld [vmem:[%s288 + $0x8] sm:$0x1]
        %v1832 = vld [vmem:[#allocation2 + $0x40] sm:$0xff]
        %v1833 = vlaneseq
        %v1834 = vshrl.u32 %v1833, 7
        %v1835 = vsub.s32 0, %v1834
        %v1836 = vrot.slane %v1831, %v1835
        %v1837 = vmul.f32 %v1836, %v1832
        %v1838 = vadd.f32 %v1830, %v1837
        %v1839 = vld [vmem:[%s288 + $0x9] sm:$0x1]
        %v1840 = vld [vmem:[#allocation2 + $0x48] sm:$0xff]
        %v1841 = vlaneseq
        %v1842 = vshrl.u32 %v1841, 7
        %v1843 = vsub.s32 0, %v1842
        %v1844 = vrot.slane %v1839, %v1843
        %v1845 = vmul.f32 %v1844, %v1840
        %v1846 = vadd.f32 %v1838, %v1845
        %v1847 = vld [vmem:[%s288 + $0xa] sm:$0x1]
        %v1848 = vld [vmem:[#allocation2 + $0x50] sm:$0xff]
        %v1849 = vlaneseq
        %v1850 = vshrl.u32 %v1849, 7
        %v1851 = vsub.s32 0, %v1850
        %v1852 = vrot.slane %v1847, %v1851
        %v1853 = vmul.f32 %v1852, %v1848
        %v1854 = vadd.f32 %v1846, %v1853
        %v1855 = vld [vmem:[%s288 + $0xb] sm:$0x1]
        %v1856 = vld [vmem:[#allocation2 + $0x58] sm:$0xff]
        %v1857 = vlaneseq
        %v1858 = vshrl.u32 %v1857, 7
        %v1859 = vsub.s32 0, %v1858
        %v1860 = vrot.slane %v1855, %v1859
        %v1861 = vmul.f32 %v1860, %v1856
        %v1862 = vadd.f32 %v1854, %v1861
        %v1863 = vld [vmem:[%s288 + $0xc] sm:$0x1]
        %v1864 = vld [vmem:[#allocation2 + $0x60] sm:$0xff]
        %v1865 = vlaneseq
        %v1866 = vshrl.u32 %v1865, 7
        %v1867 = vsub.s32 0, %v1866
        %v1868 = vrot.slane %v1863, %v1867
        %v1869 = vmul.f32 %v1868, %v1864
        %v1870 = vadd.f32 %v1862, %v1869
        %v1871 = vld [vmem:[%s288 + $0xd] sm:$0x1]
        %v1872 = vld [vmem:[#allocation2 + $0x68] sm:$0xff]
        %v1873 = vlaneseq
        %v1874 = vshrl.u32 %v1873, 7
        %v1875 = vsub.s32 0, %v1874
        %v1876 = vrot.slane %v1871, %v1875
        %v1877 = vmul.f32 %v1876, %v1872
        %v1878 = vadd.f32 %v1870, %v1877
        %v1879 = vld [vmem:[%s288 + $0xe] sm:$0x1]
        %v1880 = vld [vmem:[#allocation2 + $0x70] sm:$0xff]
        %v1881 = vlaneseq
        %v1882 = vshrl.u32 %v1881, 7
        %v1883 = vsub.s32 0, %v1882
        %v1884 = vrot.slane %v1879, %v1883
        %v1885 = vmul.f32 %v1884, %v1880
        %v1886 = vadd.f32 %v1878, %v1885
        %v1887 = vld [vmem:[%s288 + $0xf] sm:$0x1]
        %v1888 = vld [vmem:[#allocation2 + $0x78] sm:$0xff]
        %v1889 = vlaneseq
        %v1890 = vshrl.u32 %v1889, 7
        %v1891 = vsub.s32 0, %v1890
        %v1892 = vrot.slane %v1887, %v1891
        %v1893 = vmul.f32 %v1892, %v1888
        %v1894 = vadd.f32 %v1886, %v1893
        %v1895 = vld [vmem:[%s288 + $0x10] sm:$0x1]
        %v1896 = vld [vmem:[#allocation2 + $0x80] sm:$0xff]
        %v1897 = vlaneseq
        %v1898 = vshrl.u32 %v1897, 7
        %v1899 = vsub.s32 0, %v1898
        %v1900 = vrot.slane %v1895, %v1899
        %v1901 = vmul.f32 %v1900, %v1896
        %v1902 = vadd.f32 %v1894, %v1901
        %v1903 = vld [vmem:[%s288 + $0x11] sm:$0x1]
        %v1904 = vld [vmem:[#allocation2 + $0x88] sm:$0xff]
        %v1905 = vlaneseq
        %v1906 = vshrl.u32 %v1905, 7
        %v1907 = vsub.s32 0, %v1906
        %v1908 = vrot.slane %v1903, %v1907
        %v1909 = vmul.f32 %v1908, %v1904
        %v1910 = vadd.f32 %v1902, %v1909
        %v1911 = vld [vmem:[%s288 + $0x12] sm:$0x1]
        %v1912 = vld [vmem:[#allocation2 + $0x90] sm:$0xff]
        %v1913 = vlaneseq
        %v1914 = vshrl.u32 %v1913, 7
        %v1915 = vsub.s32 0, %v1914
        %v1916 = vrot.slane %v1911, %v1915
        %v1917 = vmul.f32 %v1916, %v1912
        %v1918 = vadd.f32 %v1910, %v1917
        %v1919 = vld [vmem:[%s288 + $0x13] sm:$0x1]
        %v1920 = vld [vmem:[#allocation2 + $0x98] sm:$0xff]
        %v1921 = vlaneseq
        %v1922 = vshrl.u32 %v1921, 7
        %v1923 = vsub.s32 0, %v1922
        %v1924 = vrot.slane %v1919, %v1923
        %v1925 = vmul.f32 %v1924, %v1920
        %v1926 = vadd.f32 %v1918, %v1925
        %v1927 = vld [vmem:[%s288 + $0x14] sm:$0x1]
        %v1928 = vld [vmem:[#allocation2 + $0xa0] sm:$0xff]
        %v1929 = vlaneseq
        %v1930 = vshrl.u32 %v1929, 7
        %v1931 = vsub.s32 0, %v1930
        %v1932 = vrot.slane %v1927, %v1931
        %v1933 = vmul.f32 %v1932, %v1928
        %v1934 = vadd.f32 %v1926, %v1933
        %v1935 = vld [vmem:[%s288 + $0x15] sm:$0x1]
        %v1936 = vld [vmem:[#allocation2 + $0xa8] sm:$0xff]
        %v1937 = vlaneseq
        %v1938 = vshrl.u32 %v1937, 7
        %v1939 = vsub.s32 0, %v1938
        %v1940 = vrot.slane %v1935, %v1939
        %v1941 = vmul.f32 %v1940, %v1936
        %v1942 = vadd.f32 %v1934, %v1941
        %v1943 = vld [vmem:[%s288 + $0x16] sm:$0x1]
        %v1944 = vld [vmem:[#allocation2 + $0xb0] sm:$0xff]
        %v1945 = vlaneseq
        %v1946 = vshrl.u32 %v1945, 7
        %v1947 = vsub.s32 0, %v1946
        %v1948 = vrot.slane %v1943, %v1947
        %v1949 = vmul.f32 %v1948, %v1944
        %v1950 = vadd.f32 %v1942, %v1949
        %v1951 = vld [vmem:[%s288 + $0x17] sm:$0x1]
        %v1952 = vld [vmem:[#allocation2 + $0xb8] sm:$0xff]
        %v1953 = vlaneseq
        %v1954 = vshrl.u32 %v1953, 7
        %v1955 = vsub.s32 0, %v1954
        %v1956 = vrot.slane %v1951, %v1955
        %v1957 = vmul.f32 %v1956, %v1952
        %v1958 = vadd.f32 %v1950, %v1957
        %v1959 = vld [vmem:[%s288 + $0x18] sm:$0x1]
        %v1960 = vld [vmem:[#allocation2 + $0xc0] sm:$0xff]
        %v1961 = vlaneseq
        %v1962 = vshrl.u32 %v1961, 7
        %v1963 = vsub.s32 0, %v1962
        %v1964 = vrot.slane %v1959, %v1963
        %v1965 = vmul.f32 %v1964, %v1960
        %v1966 = vadd.f32 %v1958, %v1965
        %v1967 = vld [vmem:[%s288 + $0x19] sm:$0x1]
        %v1968 = vld [vmem:[#allocation2 + $0xc8] sm:$0xff]
        %v1969 = vlaneseq
        %v1970 = vshrl.u32 %v1969, 7
        %v1971 = vsub.s32 0, %v1970
        %v1972 = vrot.slane %v1967, %v1971
        %v1973 = vmul.f32 %v1972, %v1968
        %v1974 = vadd.f32 %v1966, %v1973
        %v1975 = vld [vmem:[%s288 + $0x1a] sm:$0x1]
        %v1976 = vld [vmem:[#allocation2 + $0xd0] sm:$0xff]
        %v1977 = vlaneseq
        %v1978 = vshrl.u32 %v1977, 7
        %v1979 = vsub.s32 0, %v1978
        %v1980 = vrot.slane %v1975, %v1979
        %v1981 = vmul.f32 %v1980, %v1976
        %v1982 = vadd.f32 %v1974, %v1981
        %v1983 = vld [vmem:[%s288 + $0x1b] sm:$0x1]
        %v1984 = vld [vmem:[#allocation2 + $0xd8] sm:$0xff]
        %v1985 = vlaneseq
        %v1986 = vshrl.u32 %v1985, 7
        %v1987 = vsub.s32 0, %v1986
        %v1988 = vrot.slane %v1983, %v1987
        %v1989 = vmul.f32 %v1988, %v1984
        %v1990 = vadd.f32 %v1982, %v1989
        %v1991 = vld [vmem:[%s288 + $0x1c] sm:$0x1]
        %v1992 = vld [vmem:[#allocation2 + $0xe0] sm:$0xff]
        %v1993 = vlaneseq
        %v1994 = vshrl.u32 %v1993, 7
        %v1995 = vsub.s32 0, %v1994
        %v1996 = vrot.slane %v1991, %v1995
        %v1997 = vmul.f32 %v1996, %v1992
        %v1998 = vadd.f32 %v1990, %v1997
        %v1999 = vld [vmem:[%s288 + $0x1d] sm:$0x1]
        %v2000 = vld [vmem:[#allocation2 + $0xe8] sm:$0xff]
        %v2001 = vlaneseq
        %v2002 = vshrl.u32 %v2001, 7
        %v2003 = vsub.s32 0, %v2002
        %v2004 = vrot.slane %v1999, %v2003
        %v2005 = vmul.f32 %v2004, %v2000
        %v2006 = vadd.f32 %v1998, %v2005
        %v2007 = vld [vmem:[%s288 + $0x1e] sm:$0x1]
        %v2008 = vld [vmem:[#allocation2 + $0xf0] sm:$0xff]
        %v2009 = vlaneseq
        %v2010 = vshrl.u32 %v2009, 7
        %v2011 = vsub.s32 0, %v2010
        %v2012 = vrot.slane %v2007, %v2011
        %v2013 = vmul.f32 %v2012, %v2008
        %v2014 = vadd.f32 %v2006, %v2013
        %v2015 = vld [vmem:[%s288 + $0x1f] sm:$0x1]
        %v2016 = vld [vmem:[#allocation2 + $0xf8] sm:$0xff]
        %v2017 = vlaneseq
        %v2018 = vshrl.u32 %v2017, 7
        %v2019 = vsub.s32 0, %v2018
        %v2020 = vrot.slane %v2015, %v2019
        %v2021 = vmul.f32 %v2020, %v2016
        %v2022 = vadd.f32 %v2014, %v2021
        %v2023 = vld [vmem:[%s288 + $0x20] sm:$0x1]
        %v2024 = vld [vmem:[#allocation2 + $0x100] sm:$0xff]
        %v2025 = vlaneseq
        %v2026 = vshrl.u32 %v2025, 7
        %v2027 = vsub.s32 0, %v2026
        %v2028 = vrot.slane %v2023, %v2027
        %v2029 = vmul.f32 %v2028, %v2024
        %v2030 = vadd.f32 %v2022, %v2029
        %v2031 = vld [vmem:[%s288 + $0x21] sm:$0x1]
        %v2032 = vld [vmem:[#allocation2 + $0x108] sm:$0xff]
        %v2033 = vlaneseq
        %v2034 = vshrl.u32 %v2033, 7
        %v2035 = vsub.s32 0, %v2034
        %v2036 = vrot.slane %v2031, %v2035
        %v2037 = vmul.f32 %v2036, %v2032
        %v2038 = vadd.f32 %v2030, %v2037
        %v2039 = vld [vmem:[%s288 + $0x22] sm:$0x1]
        %v2040 = vld [vmem:[#allocation2 + $0x110] sm:$0xff]
        %v2041 = vlaneseq
        %v2042 = vshrl.u32 %v2041, 7
        %v2043 = vsub.s32 0, %v2042
        %v2044 = vrot.slane %v2039, %v2043
        %v2045 = vmul.f32 %v2044, %v2040
        %v2046 = vadd.f32 %v2038, %v2045
        %v2047 = vld [vmem:[%s288 + $0x23] sm:$0x1]
        %v2048 = vld [vmem:[#allocation2 + $0x118] sm:$0xff]
        %v2049 = vlaneseq
        %v2050 = vshrl.u32 %v2049, 7
        %v2051 = vsub.s32 0, %v2050
        %v2052 = vrot.slane %v2047, %v2051
        %v2053 = vmul.f32 %v2052, %v2048
        %v2054 = vadd.f32 %v2046, %v2053
        %2055 = vst [vmem:[%s277] sm:$0xf] %v2054
        %s2056 = scalar_lea.vmem %s288, 40
        %v2057 = vld [vmem:[%s2056] sm:$0x1]
        %v2058 = vld [vmem:[#allocation2] sm:$0xff]
        %v2059 = vlaneseq
        %v2060 = vshrl.u32 %v2059, 7
        %v2061 = vsub.s32 0, %v2060
        %v2062 = vrot.slane %v2057, %v2061
        %v2063 = vmul.f32 %v2062, %v2058
        %v2064 = vadd.f32 %v2063, 0.0
        %v2065 = vld [vmem:[%s2056 + $0x1] sm:$0x1]
        %v2066 = vld [vmem:[#allocation2 + $0x8] sm:$0xff]
        %v2067 = vlaneseq
        %v2068 = vshrl.u32 %v2067, 7
        %v2069 = vsub.s32 0, %v2068
        %v2070 = vrot.slane %v2065, %v2069
        %v2071 = vmul.f32 %v2070, %v2066
        %v2072 = vadd.f32 %v2064, %v2071
        %v2073 = vld [vmem:[%s2056 + $0x2] sm:$0x1]
        %v2074 = vld [vmem:[#allocation2 + $0x10] sm:$0xff]
        %v2075 = vlaneseq
        %v2076 = vshrl.u32 %v2075, 7
        %v2077 = vsub.s32 0, %v2076
        %v2078 = vrot.slane %v2073, %v2077
        %v2079 = vmul.f32 %v2078, %v2074
        %v2080 = vadd.f32 %v2072, %v2079
        %v2081 = vld [vmem:[%s2056 + $0x3] sm:$0x1]
        %v2082 = vld [vmem:[#allocation2 + $0x18] sm:$0xff]
        %v2083 = vlaneseq
        %v2084 = vshrl.u32 %v2083, 7
        %v2085 = vsub.s32 0, %v2084
        %v2086 = vrot.slane %v2081, %v2085
        %v2087 = vmul.f32 %v2086, %v2082
        %v2088 = vadd.f32 %v2080, %v2087
        %v2089 = vld [vmem:[%s2056 + $0x4] sm:$0x1]
        %v2090 = vld [vmem:[#allocation2 + $0x20] sm:$0xff]
        %v2091 = vlaneseq
        %v2092 = vshrl.u32 %v2091, 7
        %v2093 = vsub.s32 0, %v2092
        %v2094 = vrot.slane %v2089, %v2093
        %v2095 = vmul.f32 %v2094, %v2090
        %v2096 = vadd.f32 %v2088, %v2095
        %v2097 = vld [vmem:[%s2056 + $0x5] sm:$0x1]
        %v2098 = vld [vmem:[#allocation2 + $0x28] sm:$0xff]
        %v2099 = vlaneseq
        %v2100 = vshrl.u32 %v2099, 7
        %v2101 = vsub.s32 0, %v2100
        %v2102 = vrot.slane %v2097, %v2101
        %v2103 = vmul.f32 %v2102, %v2098
        %v2104 = vadd.f32 %v2096, %v2103
        %v2105 = vld [vmem:[%s2056 + $0x6] sm:$0x1]
        %v2106 = vld [vmem:[#allocation2 + $0x30] sm:$0xff]
        %v2107 = vlaneseq
        %v2108 = vshrl.u32 %v2107, 7
        %v2109 = vsub.s32 0, %v2108
        %v2110 = vrot.slane %v2105, %v2109
        %v2111 = vmul.f32 %v2110, %v2106
        %v2112 = vadd.f32 %v2104, %v2111
        %v2113 = vld [vmem:[%s2056 + $0x7] sm:$0x1]
        %v2114 = vld [vmem:[#allocation2 + $0x38] sm:$0xff]
        %v2115 = vlaneseq
        %v2116 = vshrl.u32 %v2115, 7
        %v2117 = vsub.s32 0, %v2116
        %v2118 = vrot.slane %v2113, %v2117
        %v2119 = vmul.f32 %v2118, %v2114
        %v2120 = vadd.f32 %v2112, %v2119
        %v2121 = vld [vmem:[%s2056 + $0x8] sm:$0x1]
        %v2122 = vld [vmem:[#allocation2 + $0x40] sm:$0xff]
        %v2123 = vlaneseq
        %v2124 = vshrl.u32 %v2123, 7
        %v2125 = vsub.s32 0, %v2124
        %v2126 = vrot.slane %v2121, %v2125
        %v2127 = vmul.f32 %v2126, %v2122
        %v2128 = vadd.f32 %v2120, %v2127
        %v2129 = vld [vmem:[%s2056 + $0x9] sm:$0x1]
        %v2130 = vld [vmem:[#allocation2 + $0x48] sm:$0xff]
        %v2131 = vlaneseq
        %v2132 = vshrl.u32 %v2131, 7
        %v2133 = vsub.s32 0, %v2132
        %v2134 = vrot.slane %v2129, %v2133
        %v2135 = vmul.f32 %v2134, %v2130
        %v2136 = vadd.f32 %v2128, %v2135
        %v2137 = vld [vmem:[%s2056 + $0xa] sm:$0x1]
        %v2138 = vld [vmem:[#allocation2 + $0x50] sm:$0xff]
        %v2139 = vlaneseq
        %v2140 = vshrl.u32 %v2139, 7
        %v2141 = vsub.s32 0, %v2140
        %v2142 = vrot.slane %v2137, %v2141
        %v2143 = vmul.f32 %v2142, %v2138
        %v2144 = vadd.f32 %v2136, %v2143
        %v2145 = vld [vmem:[%s2056 + $0xb] sm:$0x1]
        %v2146 = vld [vmem:[#allocation2 + $0x58] sm:$0xff]
        %v2147 = vlaneseq
        %v2148 = vshrl.u32 %v2147, 7
        %v2149 = vsub.s32 0, %v2148
        %v2150 = vrot.slane %v2145, %v2149
        %v2151 = vmul.f32 %v2150, %v2146
        %v2152 = vadd.f32 %v2144, %v2151
        %v2153 = vld [vmem:[%s2056 + $0xc] sm:$0x1]
        %v2154 = vld [vmem:[#allocation2 + $0x60] sm:$0xff]
        %v2155 = vlaneseq
        %v2156 = vshrl.u32 %v2155, 7
        %v2157 = vsub.s32 0, %v2156
        %v2158 = vrot.slane %v2153, %v2157
        %v2159 = vmul.f32 %v2158, %v2154
        %v2160 = vadd.f32 %v2152, %v2159
        %v2161 = vld [vmem:[%s2056 + $0xd] sm:$0x1]
        %v2162 = vld [vmem:[#allocation2 + $0x68] sm:$0xff]
        %v2163 = vlaneseq
        %v2164 = vshrl.u32 %v2163, 7
        %v2165 = vsub.s32 0, %v2164
        %v2166 = vrot.slane %v2161, %v2165
        %v2167 = vmul.f32 %v2166, %v2162
        %v2168 = vadd.f32 %v2160, %v2167
        %v2169 = vld [vmem:[%s2056 + $0xe] sm:$0x1]
        %v2170 = vld [vmem:[#allocation2 + $0x70] sm:$0xff]
        %v2171 = vlaneseq
        %v2172 = vshrl.u32 %v2171, 7
        %v2173 = vsub.s32 0, %v2172
        %v2174 = vrot.slane %v2169, %v2173
        %v2175 = vmul.f32 %v2174, %v2170
        %v2176 = vadd.f32 %v2168, %v2175
        %v2177 = vld [vmem:[%s2056 + $0xf] sm:$0x1]
        %v2178 = vld [vmem:[#allocation2 + $0x78] sm:$0xff]
        %v2179 = vlaneseq
        %v2180 = vshrl.u32 %v2179, 7
        %v2181 = vsub.s32 0, %v2180
        %v2182 = vrot.slane %v2177, %v2181
        %v2183 = vmul.f32 %v2182, %v2178
        %v2184 = vadd.f32 %v2176, %v2183
        %v2185 = vld [vmem:[%s2056 + $0x10] sm:$0x1]
        %v2186 = vld [vmem:[#allocation2 + $0x80] sm:$0xff]
        %v2187 = vlaneseq
        %v2188 = vshrl.u32 %v2187, 7
        %v2189 = vsub.s32 0, %v2188
        %v2190 = vrot.slane %v2185, %v2189
        %v2191 = vmul.f32 %v2190, %v2186
        %v2192 = vadd.f32 %v2184, %v2191
        %v2193 = vld [vmem:[%s2056 + $0x11] sm:$0x1]
        %v2194 = vld [vmem:[#allocation2 + $0x88] sm:$0xff]
        %v2195 = vlaneseq
        %v2196 = vshrl.u32 %v2195, 7
        %v2197 = vsub.s32 0, %v2196
        %v2198 = vrot.slane %v2193, %v2197
        %v2199 = vmul.f32 %v2198, %v2194
        %v2200 = vadd.f32 %v2192, %v2199
        %v2201 = vld [vmem:[%s2056 + $0x12] sm:$0x1]
        %v2202 = vld [vmem:[#allocation2 + $0x90] sm:$0xff]
        %v2203 = vlaneseq
        %v2204 = vshrl.u32 %v2203, 7
        %v2205 = vsub.s32 0, %v2204
        %v2206 = vrot.slane %v2201, %v2205
        %v2207 = vmul.f32 %v2206, %v2202
        %v2208 = vadd.f32 %v2200, %v2207
        %v2209 = vld [vmem:[%s2056 + $0x13] sm:$0x1]
        %v2210 = vld [vmem:[#allocation2 + $0x98] sm:$0xff]
        %v2211 = vlaneseq
        %v2212 = vshrl.u32 %v2211, 7
        %v2213 = vsub.s32 0, %v2212
        %v2214 = vrot.slane %v2209, %v2213
        %v2215 = vmul.f32 %v2214, %v2210
        %v2216 = vadd.f32 %v2208, %v2215
        %v2217 = vld [vmem:[%s2056 + $0x14] sm:$0x1]
        %v2218 = vld [vmem:[#allocation2 + $0xa0] sm:$0xff]
        %v2219 = vlaneseq
        %v2220 = vshrl.u32 %v2219, 7
        %v2221 = vsub.s32 0, %v2220
        %v2222 = vrot.slane %v2217, %v2221
        %v2223 = vmul.f32 %v2222, %v2218
        %v2224 = vadd.f32 %v2216, %v2223
        %v2225 = vld [vmem:[%s2056 + $0x15] sm:$0x1]
        %v2226 = vld [vmem:[#allocation2 + $0xa8] sm:$0xff]
        %v2227 = vlaneseq
        %v2228 = vshrl.u32 %v2227, 7
        %v2229 = vsub.s32 0, %v2228
        %v2230 = vrot.slane %v2225, %v2229
        %v2231 = vmul.f32 %v2230, %v2226
        %v2232 = vadd.f32 %v2224, %v2231
        %v2233 = vld [vmem:[%s2056 + $0x16] sm:$0x1]
        %v2234 = vld [vmem:[#allocation2 + $0xb0] sm:$0xff]
        %v2235 = vlaneseq
        %v2236 = vshrl.u32 %v2235, 7
        %v2237 = vsub.s32 0, %v2236
        %v2238 = vrot.slane %v2233, %v2237
        %v2239 = vmul.f32 %v2238, %v2234
        %v2240 = vadd.f32 %v2232, %v2239
        %v2241 = vld [vmem:[%s2056 + $0x17] sm:$0x1]
        %v2242 = vld [vmem:[#allocation2 + $0xb8] sm:$0xff]
        %v2243 = vlaneseq
        %v2244 = vshrl.u32 %v2243, 7
        %v2245 = vsub.s32 0, %v2244
        %v2246 = vrot.slane %v2241, %v2245
        %v2247 = vmul.f32 %v2246, %v2242
        %v2248 = vadd.f32 %v2240, %v2247
        %v2249 = vld [vmem:[%s2056 + $0x18] sm:$0x1]
        %v2250 = vld [vmem:[#allocation2 + $0xc0] sm:$0xff]
        %v2251 = vlaneseq
        %v2252 = vshrl.u32 %v2251, 7
        %v2253 = vsub.s32 0, %v2252
        %v2254 = vrot.slane %v2249, %v2253
        %v2255 = vmul.f32 %v2254, %v2250
        %v2256 = vadd.f32 %v2248, %v2255
        %v2257 = vld [vmem:[%s2056 + $0x19] sm:$0x1]
        %v2258 = vld [vmem:[#allocation2 + $0xc8] sm:$0xff]
        %v2259 = vlaneseq
        %v2260 = vshrl.u32 %v2259, 7
        %v2261 = vsub.s32 0, %v2260
        %v2262 = vrot.slane %v2257, %v2261
        %v2263 = vmul.f32 %v2262, %v2258
        %v2264 = vadd.f32 %v2256, %v2263
        %v2265 = vld [vmem:[%s2056 + $0x1a] sm:$0x1]
        %v2266 = vld [vmem:[#allocation2 + $0xd0] sm:$0xff]
        %v2267 = vlaneseq
        %v2268 = vshrl.u32 %v2267, 7
        %v2269 = vsub.s32 0, %v2268
        %v2270 = vrot.slane %v2265, %v2269
        %v2271 = vmul.f32 %v2270, %v2266
        %v2272 = vadd.f32 %v2264, %v2271
        %v2273 = vld [vmem:[%s2056 + $0x1b] sm:$0x1]
        %v2274 = vld [vmem:[#allocation2 + $0xd8] sm:$0xff]
        %v2275 = vlaneseq
        %v2276 = vshrl.u32 %v2275, 7
        %v2277 = vsub.s32 0, %v2276
        %v2278 = vrot.slane %v2273, %v2277
        %v2279 = vmul.f32 %v2278, %v2274
        %v2280 = vadd.f32 %v2272, %v2279
        %v2281 = vld [vmem:[%s2056 + $0x1c] sm:$0x1]
        %v2282 = vld [vmem:[#allocation2 + $0xe0] sm:$0xff]
        %v2283 = vlaneseq
        %v2284 = vshrl.u32 %v2283, 7
        %v2285 = vsub.s32 0, %v2284
        %v2286 = vrot.slane %v2281, %v2285
        %v2287 = vmul.f32 %v2286, %v2282
        %v2288 = vadd.f32 %v2280, %v2287
        %v2289 = vld [vmem:[%s2056 + $0x1d] sm:$0x1]
        %v2290 = vld [vmem:[#allocation2 + $0xe8] sm:$0xff]
        %v2291 = vlaneseq
        %v2292 = vshrl.u32 %v2291, 7
        %v2293 = vsub.s32 0, %v2292
        %v2294 = vrot.slane %v2289, %v2293
        %v2295 = vmul.f32 %v2294, %v2290
        %v2296 = vadd.f32 %v2288, %v2295
        %v2297 = vld [vmem:[%s2056 + $0x1e] sm:$0x1]
        %v2298 = vld [vmem:[#allocation2 + $0xf0] sm:$0xff]
        %v2299 = vlaneseq
        %v2300 = vshrl.u32 %v2299, 7
        %v2301 = vsub.s32 0, %v2300
        %v2302 = vrot.slane %v2297, %v2301
        %v2303 = vmul.f32 %v2302, %v2298
        %v2304 = vadd.f32 %v2296, %v2303
        %v2305 = vld [vmem:[%s2056 + $0x1f] sm:$0x1]
        %v2306 = vld [vmem:[#allocation2 + $0xf8] sm:$0xff]
        %v2307 = vlaneseq
        %v2308 = vshrl.u32 %v2307, 7
        %v2309 = vsub.s32 0, %v2308
        %v2310 = vrot.slane %v2305, %v2309
        %v2311 = vmul.f32 %v2310, %v2306
        %v2312 = vadd.f32 %v2304, %v2311
        %v2313 = vld [vmem:[%s2056 + $0x20] sm:$0x1]
        %v2314 = vld [vmem:[#allocation2 + $0x100] sm:$0xff]
        %v2315 = vlaneseq
        %v2316 = vshrl.u32 %v2315, 7
        %v2317 = vsub.s32 0, %v2316
        %v2318 = vrot.slane %v2313, %v2317
        %v2319 = vmul.f32 %v2318, %v2314
        %v2320 = vadd.f32 %v2312, %v2319
        %v2321 = vld [vmem:[%s2056 + $0x21] sm:$0x1]
        %v2322 = vld [vmem:[#allocation2 + $0x108] sm:$0xff]
        %v2323 = vlaneseq
        %v2324 = vshrl.u32 %v2323, 7
        %v2325 = vsub.s32 0, %v2324
        %v2326 = vrot.slane %v2321, %v2325
        %v2327 = vmul.f32 %v2326, %v2322
        %v2328 = vadd.f32 %v2320, %v2327
        %v2329 = vld [vmem:[%s2056 + $0x22] sm:$0x1]
        %v2330 = vld [vmem:[#allocation2 + $0x110] sm:$0xff]
        %v2331 = vlaneseq
        %v2332 = vshrl.u32 %v2331, 7
        %v2333 = vsub.s32 0, %v2332
        %v2334 = vrot.slane %v2329, %v2333
        %v2335 = vmul.f32 %v2334, %v2330
        %v2336 = vadd.f32 %v2328, %v2335
        %v2337 = vld [vmem:[%s2056 + $0x23] sm:$0x1]
        %v2338 = vld [vmem:[#allocation2 + $0x118] sm:$0xff]
        %v2339 = vlaneseq
        %v2340 = vshrl.u32 %v2339, 7
        %v2341 = vsub.s32 0, %v2340
        %v2342 = vrot.slane %v2337, %v2341
        %v2343 = vmul.f32 %v2342, %v2338
        %v2344 = vadd.f32 %v2336, %v2343
        %s2345 = scalar_lea.vmem %s277, 4 [#allocation3]
        %2346 = vst [vmem:[%s2345] sm:$0xf] %v2344
        %s2347 = sand.u32 %s180, 1
        %s2348 = scalar_lea.sflag [#allocation4], %s2347
        %s2349 = sand.u32 %s180, 1
        %s2350 = smul.addr %s2349, 8
        %s2351 = scalar_lea.vmem [#allocation3], %s2350
        // Predicated region
        $region45: #{tpu_custom_call.1} parent=43 // pred_check
          %p2352 = pneg %p190
        $region46: #{tpu_custom_call.1} parent=43 // pred_check_branch
          %2354 = sbr.rel (%p2352) target = $region48
        $region47: #{tpu_custom_call.1} parent=43 // pred_region
          %s2356 = ssub.s32 128, 128
          %2357 = vsyncadd %s2348, %s2356
          %s2358 = sadd.s32 %s25, %s24
          %s2359 = smul.addr %s2358, 64
          %s2360 = scalar_lea.hbm %s6, %s2359
          %s2361 = sshll.u32 %s2351, 4
          %s2362 = int_to_ptr.vmem [resolvable:$true] %s2361
          %2367 = dma.vmem_to_hbm [thread:$0]  %s2362, 128, %s2360, %s2348, 64, 256, 4
        $region48: #{tpu_custom_call.1} parent=43 // pred_fallthru
          _
      $region44: #{tpu_custom_call.1} parent=5 // pred_fallthru
        _
      %p2368 = scmp.le.s32.totalorder 2, %s15
      // Predicated region
      $region49: #{tpu_custom_call.1} parent=5 // pred_check
        %p2369 = pneg %p2368
      $region50: #{tpu_custom_call.1} parent=5 // pred_check_branch
        %2371 = sbr.rel (%p2369) target = $region52
      $region51: #{tpu_custom_call.1} parent=5 // pred_region
        %s2372 = ssub.s32 %s15, 2
        // Predicated region
        $region53: #{tpu_custom_call.1} parent=51 // pred_check
          %p2373 = pneg %p196
        $region54: #{tpu_custom_call.1} parent=51 // pred_check_branch
          %2375 = sbr.rel (%p2373) target = $region56
        $region55: #{tpu_custom_call.1} parent=51 // pred_region
          %s2376 = sand.u32 %s181, 1
          %s2377 = scalar_lea.sflag [#allocation4], %s2376
          %s2378 = sand.u32 %s181, 1
          %s2379 = smul.addr %s2378, 8
          %s2380 = scalar_lea.vmem [#allocation3], %s2379
          %2381 = dma.done %s2377, 128
        $region56: #{tpu_custom_call.1} parent=51 // pred_fallthru
          _
      $region52: #{tpu_custom_call.1} parent=5 // pred_fallthru
        _
    $region6: #{tpu_custom_call.1} parent=1 // loop_footer
      %s19 = sadd.s32 1, %s15
    $region7: #{tpu_custom_call.1} parent=1 // loop_footer_branch
      %14 = sbr.rel target = $region3
    $region8: #{tpu_custom_call.1} parent=1 // loop_exit
      _
    %2382 = vsyncpa [#allocation4], 1
    %s2383 = scalar_lea.sflag [#allocation4], 1
    %2384 = vsyncpa %s2383, 1

</llo_original>
